<compile_context>
chip_gen: v6e
topology: v6e:2x2x1
jax: 0.10.0
libtpu: 0.0.40
codegen_flags: <defaults>
</compile_context>

<pallas_src>
import numpy as np
import jax
import jax.numpy as jnp
from jax import lax
from jax.experimental import pallas as pl
from jax.experimental.pallas import tpu as pltpu

# ---------------- configuration (stand-ins for `opt` / vocab / alphabet) ------
VOCAB_SIZE   = 50
WORD_DIM     = 22            # word embedding dim D_word
CHAR_ALPHA   = 30            # len(char_alphabet)
CHAR_EMB_DIM = 20            # CharBiLSTM char embedding dim
CHAR_HID_DIM = 10            # CharBiLSTM output dim (5 per direction, bidirectional)
CHAR_LSTM_H  = CHAR_HID_DIM // 2
HIDDEN_SIZE  = 32            # opt.hidden_size
NUM_CLASSES  = 5
KERNEL_NUM   = 8             # opt.kernel_num (Co)
KERNEL_SIZES = "3,4,5"       # opt.kernel_sizes
KS = [int(k) for k in list(KERNEL_SIZES) if k != ',']
D = WORD_DIM + CHAR_HID_DIM  # conv input width
MAX_PAD = max(k // 2 for k in KS)


def _sigmoid(z):
    # tanh-based sigmoid: routed to the EUP transcendental slot, no exp overflow.
    return 0.5 * (jnp.tanh(0.5 * z) + 1.0)


# ---------------------------- char BiLSTM kernel -------------------------------
def char_bilstm_kernel(gx_ref, mask_ref, whh_ref, out_ref):
    """Single-invocation bidirectional LSTM recurrence.

    gx_ref   : (2*T, N, 4*Hc)  pre-projected x@Wih+b, direction 1 time-reversed
    mask_ref : (2*T, N, 1)     validity masks, direction 1 time-reversed
    whh_ref  : (2, Hc, 4*Hc)   fused recurrent weights per direction
    out_ref  : (N, 2*Hc)       last valid hidden state, [fwd | bwd]
    """
    two_t, n_words, g4 = gx_ref.shape
    t_steps = two_t // 2
    hc = g4 // 4

    def run_direction(d):
        whh = whh_ref[d]                                  # (Hc, 4*Hc)

        def step(i, carry):
            h_prev, c_prev = carry
            idx = d * t_steps + i
            gates = gx_ref[idx] + jnp.dot(
                h_prev, whh, preferred_element_type=jnp.float32)      # (N, 4*Hc)
            i_g = _sigmoid(gates[:, 0 * hc:1 * hc])
            f_g = _sigmoid(gates[:, 1 * hc:2 * hc])
            g_g = jnp.tanh(gates[:, 2 * hc:3 * hc])
            o_g = _sigmoid(gates[:, 3 * hc:4 * hc])
            c_new = f_g * c_prev + i_g * g_g
            h_new = o_g * jnp.tanh(c_new)
            m = mask_ref[idx]                              # (N, 1)
            h = m * h_new + (1.0 - m) * h_prev
            c = m * c_new + (1.0 - m) * c_prev
            return h, c

        init = (jnp.zeros((n_words, hc), jnp.float32),
                jnp.zeros((n_words, hc), jnp.float32))
        h_last, _ = lax.fori_loop(0, t_steps, step, init, unroll=True)
        return h_last

    out_ref[...] = jnp.concatenate([run_direction(0), run_direction(1)], axis=1)


def char_bilstm(gx_all, mask_all, whh_all):
    two_t, n_words, g4 = gx_all.shape
    hc = g4 // 4
    return pl.pallas_call(
        char_bilstm_kernel,
        out_shape=jax.ShapeDtypeStruct((n_words, 2 * hc), jnp.float32),
        grid=(1,),
        in_specs=[
            pl.BlockSpec((two_t, n_words, g4), lambda i: (0, 0, 0)),
            pl.BlockSpec((two_t, n_words, 1), lambda i: (0, 0, 0)),
            pl.BlockSpec(whh_all.shape, lambda i: (0, 0, 0)),
        ],
        out_specs=pl.BlockSpec((n_words, 2 * hc), lambda i: (0, 0)),
        compiler_params=pltpu.CompilerParams(dimension_semantics=("arbitrary",)),
    )(gx_all, mask_all, whh_all)


# --------------------------- CNN + MLP head kernel ----------------------------
def make_cnn_head_kernel(ks, batch, seq_len, l_pad, max_pad):
    nk = len(ks)

    def kernel(*refs):
        x_ref = refs[0]
        conv_refs = refs[1:1 + nk]
        w_hid_ref, b_hid_ref, w_out_ref, b_out_ref, out_ref = refs[1 + nk:]

        x = x_ref[...]                                    # (B*L_pad, D)
        pooled = [[] for _ in range(batch)]               # per-batch pooled features
        for idx, K in enumerate(ks):
            pad = K // 2
            l_out = seq_len + 2 * pad - K + 1             # PyTorch Conv2d output length
            start0 = max_pad - pad                        # offset into the max-padded rows
            rows = []
            for b in range(batch):
                base = b * l_pad + start0
                cols = [x[base + k:base + k + l_out, :] for k in range(K)]
                rows.append(jnp.concatenate(cols, axis=1))       # (l_out, K*D)
            slab = jnp.concatenate(rows, axis=0)                 # (B*l_out, K*D)
            conv = jnp.maximum(
                jnp.dot(slab, conv_refs[idx][...],
                        preferred_element_type=jnp.float32), 0.0)  # ReLU, (B*l_out, Co)
            for b in range(batch):
                pooled[b].append(
                    jnp.max(conv[b * l_out:(b + 1) * l_out, :],
                            axis=0, keepdims=True))               # (1, Co)
        feat = jnp.concatenate(
            [jnp.concatenate(pooled[b], axis=1) for b in range(batch)],
            axis=0)                                               # (B, nK*Co)
        hid = jnp.dot(feat, w_hid_ref[...],
                      preferred_element_type=jnp.float32) + b_hid_ref[...]
        out = jnp.dot(hid, w_out_ref[...],
                      preferred_element_type=jnp.float32) + b_out_ref[...]
        out_ref[...] = out

    return kernel


def cnn_head(x2d, params, batch, seq_len):
    bl_pad, d_in = x2d.shape
    l_pad = bl_pad // batch
    Co, H, C, nK = KERNEL_NUM, HIDDEN_SIZE, NUM_CLASSES, len(KS)
    conv_ws = [params[f"conv_w{K}"].reshape(K * d_in, Co) for K in KS]

    in_specs = [pl.BlockSpec((bl_pad, d_in), lambda i: (0, 0))]
    for K in KS:
        in_specs.append(pl.BlockSpec((K * d_in, Co), lambda i: (0, 0)))
    in_specs += [
        pl.BlockSpec((nK * Co, H), lambda i: (0, 0)),
        pl.BlockSpec((1, H), lambda i: (0, 0)),
        pl.BlockSpec((H, C), lambda i: (0, 0)),
        pl.BlockSpec((1, C), lambda i: (0, 0)),
    ]
    return pl.pallas_call(
        make_cnn_head_kernel(KS, batch, seq_len, l_pad, MAX_PAD),
        out_shape=jax.ShapeDtypeStruct((batch, C), jnp.float32),
        grid=(1,),
        in_specs=in_specs,
        out_specs=pl.BlockSpec((batch, C), lambda i: (0, 0)),
        compiler_params=pltpu.CompilerParams(dimension_semantics=("arbitrary",)),
    )(x2d, *conv_ws, params["w_hid"], params["b_hid"],
      params["w_out"], params["b_out"])


# ------------------------------- forward pass ---------------------------------
def cnnlstm_forward(params, inputs, char_sorted, char_lens_sorted, char_recover):
    B, L = inputs.shape
    N, T = char_sorted.shape

    # CharBiLSTM.get_last_hiddens (dropout = identity in eval mode)
    ce = params["char_emb"][char_sorted]                  # (N, T, E)   gather (glue)
    # hoisted input projection (fused 4-gate weights), left to XLA so it fuses
    # with the embedding gather; only the recurrence enters the Pallas kernel.
    gx_f = jnp.einsum('nte,eg->tng', ce, params["wih_f"]) + params["b_f"]   # (T, N, 4Hc)
    gx_b = jnp.einsum('nte,eg->tng', ce, params["wih_b"]) + params["b_b"]   # (T, N, 4Hc)
    mask = (jnp.arange(T)[:, None, None]
            < char_lens_sorted[None, :, None]).astype(jnp.float32)          # (T, N, 1)

    gx_all = jnp.concatenate([gx_f, gx_b[::-1]], axis=0)  # (2T, N, 4Hc), bwd time-reversed
    mask_all = jnp.concatenate([mask, mask[::-1]], axis=0)
    whh_all = jnp.stack([params["whh_f"], params["whh_b"]], axis=0)         # (2, Hc, 4Hc)

    char_out = char_bilstm(gx_all, mask_all, whh_all)     # (N, 2*Hc)
    char_feat = char_out[char_recover].reshape(B, L, CHAR_HID_DIM)

    xw = params["word_emb"][inputs]                       # (B, L, WORD_DIM) gather (glue)
    x = jnp.concatenate([xw, char_feat], axis=2)          # (B, L, D)
    x_pad = jnp.pad(x, ((0, 0), (MAX_PAD, MAX_PAD), (0, 0)))
    x2d = x_pad.reshape(B * (L + 2 * MAX_PAD), D)         # lane-dense 2-D slab for the kernel

    # TODO(synk): nn.Dropout before self.hidden is eval-mode identity here.
    return cnn_head(x2d, params, B, L)


# ------------------------------- parameters -----------------------------------
def init_params(key):
    ks = jax.random.split(key, 16)

    def nrm(k, shape, scale):
        return scale * jax.random.normal(k, shape, dtype=jnp.float32)

    E, Hc = CHAR_EMB_DIM, CHAR_LSTM_H
    p = {
        "word_emb": nrm(ks[0], (VOCAB_SIZE, WORD_DIM), 0.5),
        "char_emb": nrm(ks[1], (CHAR_ALPHA, E), 0.5),
        # fused per-direction LSTM weights (gate order i, f, g, o along last axis);
        # b = b_ih + b_hh combined
        "wih_f": nrm(ks[2], (E, 4 * Hc), 0.3),
        "whh_f": nrm(ks[3], (Hc, 4 * Hc), 0.3),
        "b_f":   nrm(ks[4], (4 * Hc,), 0.1),
        "wih_b": nrm(ks[5], (E, 4 * Hc), 0.3),
        "whh_b": nrm(ks[6], (Hc, 4 * Hc), 0.3),
        "b_b":   nrm(ks[7], (4 * Hc,), 0.1),
        # self.hidden: Linear(len(Ks)*Co, H) stored transposed + flattened over (K, Co)
        "w_hid": nrm(ks[12], (len(KS) * KERNEL_NUM, HIDDEN_SIZE), 0.1),
        "b_hid": nrm(ks[13], (1, HIDDEN_SIZE), 0.1),
        # self.out: Linear(H, num_classes) stored transposed
        "w_out": nrm(ks[14], (HIDDEN_SIZE, NUM_CLASSES), 0.1),
        "b_out": nrm(ks[15], (1, NUM_CLASSES), 0.1),
    }
    for i, K in enumerate(KS):
        # PyTorch conv weight (Co, 1, K, D) kept as (K, D, Co); flattened to (K*D, Co)
        # for the im2col dot inside the kernel.
        p[f"conv_w{K}"] = nrm(ks[8 + i], (K, D, KERNEL_NUM), 0.1)
    return p


# ------------------------------ numpy reference -------------------------------
def reference_forward(params, inputs, char_sorted, char_lens_sorted, char_recover):
    p = {k: np.asarray(v, dtype=np.float64) for k, v in params.items()}
    inputs = np.asarray(inputs)
    char_sorted = np.asarray(char_sorted)
    lens = np.asarray(char_lens_sorted)
    rec = np.asarray(char_recover)
    B, L = inputs.shape
    N, T = char_sorted.shape
    Hc = CHAR_LSTM_H

    def sig(z):
        return 1.0 / (1.0 + np.exp(-z))

    ce = p["char_emb"][char_sorted]

    def run(Wih, Whh, b, reverse):
        h = np.zeros((N, Hc)); c = np.zeros((N, Hc))
        steps = range(T - 1, -1, -1) if reverse else range(T)
        for t in steps:
            xt = ce[:, t, :]
            g = xt @ Wih + h @ Whh + b                    # (N, 4*Hc)
            i_g = sig(g[:, 0 * Hc:1 * Hc])
            f_g = sig(g[:, 1 * Hc:2 * Hc])
            g_g = np.tanh(g[:, 2 * Hc:3 * Hc])
            o_g = sig(g[:, 3 * Hc:4 * Hc])
            c_new = f_g * c + i_g * g_g
            h_new = o_g * np.tanh(c_new)
            m = (t < lens)[:, None].astype(np.float64)
            h = m * h_new + (1 - m) * h
            c = m * c_new + (1 - m) * c
        return h

    hf = run(p["wih_f"], p["whh_f"], p["b_f"], False)
    hb = run(p["wih_b"], p["whh_b"], p["b_b"], True)
    char_feat = np.concatenate([hf, hb], axis=1)[rec].reshape(B, L, CHAR_HID_DIM)
    x = np.concatenate([p["word_emb"][inputs], char_feat], axis=2)

    feats = []
    for K in KS:
        pad = K // 2
        w = p[f"conv_w{K}"]                               # (K, D, Co)
        xp = np.pad(x, ((0, 0), (pad, pad), (0, 0)))
        l_out = L + 2 * pad - K + 1
        conv = np.zeros((B, l_out, KERNEL_NUM))
        for k in range(K):
            conv += xp[:, k:k + l_out, :] @ w[k]
        conv = np.maximum(conv, 0.0)
        feats.append(conv.max(axis=1))
    feat = np.concatenate(feats, axis=1)                  # (B, nK*Co)
    hid = feat @ p["w_hid"] + p["b_hid"]
    return hid @ p["w_out"] + p["b_out"]


# ----------------------------------- main --------------------------------------
if __name__ == "__main__":
    root = jax.random.PRNGKey(0)
    kp, ki, kl, kc = jax.random.split(root, 4)
    params = init_params(kp)

    B, L, T = 2, 8, 6
    inputs = jax.random.randint(ki, (B, L), 0, VOCAB_SIZE, dtype=jnp.int32)
    N = B * L
    char_lens = jax.random.randint(kl, (N,), 1, T + 1, dtype=jnp.int32)
    char_ids = jax.random.randint(kc, (N, T), 1, CHAR_ALPHA, dtype=jnp.int32)
    char_ids = jnp.where(jnp.arange(T)[None, :] < char_lens[:, None], char_ids, 0)

    # mimic pack_padded interface: words sorted by char length (desc) + recover perm
    perm = jnp.argsort(-char_lens)
    char_sorted = char_ids[perm]
    char_lens_sorted = char_lens[perm]
    char_recover = jnp.argsort(perm)

    fwd = jax.jit(cnnlstm_forward)
    out = fwd(params, inputs, char_sorted, char_lens_sorted, char_recover)
    out = jax.block_until_ready(out)
    assert out.shape == (B, NUM_CLASSES)

    ref = reference_forward(params, inputs, char_sorted, char_lens_sorted, char_recover)
    if not np.allclose(np.asarray(out), ref, rtol=5e-2, atol=5e-2):
        raise AssertionError("Pallas output does not match numpy reference")

    print("KERNEL_OK")
</pallas_src>

<mosaic_0001>
module attributes {stable_mosaic.version = 11 : i64} {
  func.func @char_bilstm_kernel(%arg0: i32, %arg1: memref<12x16x20xf32, #tpu.memory_space<vmem>>, %arg2: memref<12x16x1xf32, #tpu.memory_space<vmem>>, %arg3: memref<2x5x20xf32, #tpu.memory_space<vmem>>, %arg4: memref<16x10xf32, #tpu.memory_space<vmem>>) attributes {dimension_semantics = [#tpu.dimension_semantics<arbitrary>], iteration_bounds = array<i64: 1>, scalar_prefetch = 0 : i64, scratch_operands = 0 : i64, tpu.core_type = #tpu.core_type<tc>, window_params = [{pipeline_mode = #tpu.pipeline_mode<synchronous>, transform_indices = @transform_0, window_bounds = array<i64: 12, 16, 20>}, {pipeline_mode = #tpu.pipeline_mode<synchronous>, transform_indices = @transform_1, window_bounds = array<i64: 12, 16, 1>}, {pipeline_mode = #tpu.pipeline_mode<synchronous>, transform_indices = @transform_2, window_bounds = array<i64: 2, 5, 20>}, {pipeline_mode = #tpu.pipeline_mode<synchronous>, transform_indices = @transform_3, window_bounds = array<i64: 16, 10>}]} {
    %c0 = arith.constant 0 : index
    %c0_0 = arith.constant 0 : index
    %c0_1 = arith.constant 0 : index
    %0 = vector.load %arg3[%c0, %c0_0, %c0_1] : memref<2x5x20xf32, #tpu.memory_space<vmem>>, vector<1x5x20xf32>
    %1 = vector.shape_cast %0 : vector<1x5x20xf32> to vector<5x20xf32>
    %cst = arith.constant 0.000000e+00 : f32
    %2 = vector.broadcast %cst : f32 to vector<16x5xf32>
    %cst_2 = arith.constant 0.000000e+00 : f32
    %3 = vector.broadcast %cst_2 : f32 to vector<16x5xf32>
    %c0_i32 = arith.constant 0 : i32
    %c0_i32_3 = arith.constant 0 : i32
    %4 = arith.addi %c0_i32_3, %c0_i32 : i32
    %5 = arith.index_cast %4 : i32 to index
    %c0_4 = arith.constant 0 : index
    %c0_5 = arith.constant 0 : index
    %6 = vector.load %arg1[%5, %c0_4, %c0_5] : memref<12x16x20xf32, #tpu.memory_space<vmem>>, vector<1x16x20xf32>
    %7 = vector.shape_cast %6 : vector<1x16x20xf32> to vector<16x20xf32>
    %cst_6 = arith.constant dense<0.000000e+00> : vector<16x20xf32>
    %8 = tpu.matmul %2, %1, %cst_6 {dimension_numbers = #tpu.dot_dimension_numbers<[1], [0], [0], [1], [0, 0, 1, 1], [], []>} : vector<16x5xf32>, vector<5x20xf32>, vector<16x20xf32> -> vector<16x20xf32>
    %9 = arith.addf %7, %8 : vector<16x20xf32>
    %10 = vector.extract_strided_slice %9 {offsets = [0, 0], sizes = [16, 5], strides = [1, 1]} : vector<16x20xf32> to vector<16x5xf32>
    %cst_7 = arith.constant 5.000000e-01 : f32
    %11 = vector.broadcast %cst_7 : f32 to vector<16x5xf32>
    %12 = arith.mulf %11, %10 : vector<16x5xf32>
    %13 = math.tanh %12 : vector<16x5xf32>
    %cst_8 = arith.constant 1.000000e+00 : f32
    %14 = vector.broadcast %cst_8 : f32 to vector<16x5xf32>
    %15 = arith.addf %13, %14 : vector<16x5xf32>
    %cst_9 = arith.constant 5.000000e-01 : f32
    %16 = vector.broadcast %cst_9 : f32 to vector<16x5xf32>
    %17 = arith.mulf %16, %15 : vector<16x5xf32>
    %18 = vector.extract_strided_slice %9 {offsets = [0, 5], sizes = [16, 5], strides = [1, 1]} : vector<16x20xf32> to vector<16x5xf32>
    %cst_10 = arith.constant 5.000000e-01 : f32
    %19 = vector.broadcast %cst_10 : f32 to vector<16x5xf32>
    %20 = arith.mulf %19, %18 : vector<16x5xf32>
    %21 = math.tanh %20 : vector<16x5xf32>
    %cst_11 = arith.constant 1.000000e+00 : f32
    %22 = vector.broadcast %cst_11 : f32 to vector<16x5xf32>
    %23 = arith.addf %21, %22 : vector<16x5xf32>
    %cst_12 = arith.constant 5.000000e-01 : f32
    %24 = vector.broadcast %cst_12 : f32 to vector<16x5xf32>
    %25 = arith.mulf %24, %23 : vector<16x5xf32>
    %26 = vector.extract_strided_slice %9 {offsets = [0, 10], sizes = [16, 5], strides = [1, 1]} : vector<16x20xf32> to vector<16x5xf32>
    %27 = math.tanh %26 : vector<16x5xf32>
    %28 = vector.extract_strided_slice %9 {offsets = [0, 15], sizes = [16, 5], strides = [1, 1]} : vector<16x20xf32> to vector<16x5xf32>
    %cst_13 = arith.constant 5.000000e-01 : f32
    %29 = vector.broadcast %cst_13 : f32 to vector<16x5xf32>
    %30 = arith.mulf %29, %28 : vector<16x5xf32>
    %31 = math.tanh %30 : vector<16x5xf32>
    %cst_14 = arith.constant 1.000000e+00 : f32
    %32 = vector.broadcast %cst_14 : f32 to vector<16x5xf32>
    %33 = arith.addf %31, %32 : vector<16x5xf32>
    %cst_15 = arith.constant 5.000000e-01 : f32
    %34 = vector.broadcast %cst_15 : f32 to vector<16x5xf32>
    %35 = arith.mulf %34, %33 : vector<16x5xf32>
    %36 = arith.mulf %25, %3 : vector<16x5xf32>
    %37 = arith.mulf %17, %27 : vector<16x5xf32>
    %38 = arith.addf %36, %37 : vector<16x5xf32>
    %39 = math.tanh %38 : vector<16x5xf32>
    %40 = arith.mulf %35, %39 : vector<16x5xf32>
    %41 = arith.index_cast %4 : i32 to index
    %c0_16 = arith.constant 0 : index
    %c0_17 = arith.constant 0 : index
    %42 = vector.load %arg2[%41, %c0_16, %c0_17] : memref<12x16x1xf32, #tpu.memory_space<vmem>>, vector<1x16x1xf32>
    %43 = vector.shape_cast %42 : vector<1x16x1xf32> to vector<16x1xf32>
    %44 = vector.broadcast %43 : vector<16x1xf32> to vector<16x5xf32>
    %45 = arith.mulf %44, %40 : vector<16x5xf32>
    %cst_18 = arith.constant 1.000000e+00 : f32
    %46 = vector.broadcast %cst_18 : f32 to vector<16x1xf32>
    %47 = arith.subf %46, %43 : vector<16x1xf32>
    %48 = vector.broadcast %47 : vector<16x1xf32> to vector<16x5xf32>
    %49 = arith.mulf %48, %2 : vector<16x5xf32>
    %50 = arith.addf %45, %49 : vector<16x5xf32>
    %51 = vector.broadcast %43 : vector<16x1xf32> to vector<16x5xf32>
    %52 = arith.mulf %51, %38 : vector<16x5xf32>
    %cst_19 = arith.constant 1.000000e+00 : f32
    %53 = vector.broadcast %cst_19 : f32 to vector<16x1xf32>
    %54 = arith.subf %53, %43 : vector<16x1xf32>
    %55 = vector.broadcast %54 : vector<16x1xf32> to vector<16x5xf32>
    %56 = arith.mulf %55, %3 : vector<16x5xf32>
    %57 = arith.addf %52, %56 : vector<16x5xf32>
    %c1_i32 = arith.constant 1 : i32
    %c0_i32_20 = arith.constant 0 : i32
    %58 = arith.addi %c0_i32_20, %c1_i32 : i32
    %59 = arith.index_cast %58 : i32 to index
    %c0_21 = arith.constant 0 : index
    %c0_22 = arith.constant 0 : index
    %60 = vector.load %arg1[%59, %c0_21, %c0_22] : memref<12x16x20xf32, #tpu.memory_space<vmem>>, vector<1x16x20xf32>
    %61 = vector.shape_cast %60 : vector<1x16x20xf32> to vector<16x20xf32>
    %cst_23 = arith.constant dense<0.000000e+00> : vector<16x20xf32>
    %62 = tpu.matmul %50, %1, %cst_23 {dimension_numbers = #tpu.dot_dimension_numbers<[1], [0], [0], [1], [0, 0, 1, 1], [], []>} : vector<16x5xf32>, vector<5x20xf32>, vector<16x20xf32> -> vector<16x20xf32>
    %63 = arith.addf %61, %62 : vector<16x20xf32>
    %64 = vector.extract_strided_slice %63 {offsets = [0, 0], sizes = [16, 5], strides = [1, 1]} : vector<16x20xf32> to vector<16x5xf32>
    %cst_24 = arith.constant 5.000000e-01 : f32
    %65 = vector.broadcast %cst_24 : f32 to vector<16x5xf32>
    %66 = arith.mulf %65, %64 : vector<16x5xf32>
    %67 = math.tanh %66 : vector<16x5xf32>
    %cst_25 = arith.constant 1.000000e+00 : f32
    %68 = vector.broadcast %cst_25 : f32 to vector<16x5xf32>
    %69 = arith.addf %67, %68 : vector<16x5xf32>
    %cst_26 = arith.constant 5.000000e-01 : f32
    %70 = vector.broadcast %cst_26 : f32 to vector<16x5xf32>
    %71 = arith.mulf %70, %69 : vector<16x5xf32>
    %72 = vector.extract_strided_slice %63 {offsets = [0, 5], sizes = [16, 5], strides = [1, 1]} : vector<16x20xf32> to vector<16x5xf32>
    %cst_27 = arith.constant 5.000000e-01 : f32
    %73 = vector.broadcast %cst_27 : f32 to vector<16x5xf32>
    %74 = arith.mulf %73, %72 : vector<16x5xf32>
    %75 = math.tanh %74 : vector<16x5xf32>
    %cst_28 = arith.constant 1.000000e+00 : f32
    %76 = vector.broadcast %cst_28 : f32 to vector<16x5xf32>
    %77 = arith.addf %75, %76 : vector<16x5xf32>
    %cst_29 = arith.constant 5.000000e-01 : f32
    %78 = vector.broadcast %cst_29 : f32 to vector<16x5xf32>
    %79 = arith.mulf %78, %77 : vector<16x5xf32>
    %80 = vector.extract_strided_slice %63 {offsets = [0, 10], sizes = [16, 5], strides = [1, 1]} : vector<16x20xf32> to vector<16x5xf32>
    %81 = math.tanh %80 : vector<16x5xf32>
    %82 = vector.extract_strided_slice %63 {offsets = [0, 15], sizes = [16, 5], strides = [1, 1]} : vector<16x20xf32> to vector<16x5xf32>
    %cst_30 = arith.constant 5.000000e-01 : f32
    %83 = vector.broadcast %cst_30 : f32 to vector<16x5xf32>
    %84 = arith.mulf %83, %82 : vector<16x5xf32>
    %85 = math.tanh %84 : vector<16x5xf32>
    %cst_31 = arith.constant 1.000000e+00 : f32
    %86 = vector.broadcast %cst_31 : f32 to vector<16x5xf32>
    %87 = arith.addf %85, %86 : vector<16x5xf32>
    %cst_32 = arith.constant 5.000000e-01 : f32
    %88 = vector.broadcast %cst_32 : f32 to vector<16x5xf32>
    %89 = arith.mulf %88, %87 : vector<16x5xf32>
    %90 = arith.mulf %79, %57 : vector<16x5xf32>
    %91 = arith.mulf %71, %81 : vector<16x5xf32>
    %92 = arith.addf %90, %91 : vector<16x5xf32>
    %93 = math.tanh %92 : vector<16x5xf32>
    %94 = arith.mulf %89, %93 : vector<16x5xf32>
    %95 = arith.index_cast %58 : i32 to index
    %c0_33 = arith.constant 0 : index
    %c0_34 = arith.constant 0 : index
    %96 = vector.load %arg2[%95, %c0_33, %c0_34] : memref<12x16x1xf32, #tpu.memory_space<vmem>>, vector<1x16x1xf32>
    %97 = vector.shape_cast %96 : vector<1x16x1xf32> to vector<16x1xf32>
    %98 = vector.broadcast %97 : vector<16x1xf32> to vector<16x5xf32>
    %99 = arith.mulf %98, %94 : vector<16x5xf32>
    %cst_35 = arith.constant 1.000000e+00 : f32
    %100 = vector.broadcast %cst_35 : f32 to vector<16x1xf32>
    %101 = arith.subf %100, %97 : vector<16x1xf32>
    %102 = vector.broadcast %101 : vector<16x1xf32> to vector<16x5xf32>
    %103 = arith.mulf %102, %50 : vector<16x5xf32>
    %104 = arith.addf %99, %103 : vector<16x5xf32>
    %105 = vector.broadcast %97 : vector<16x1xf32> to vector<16x5xf32>
    %106 = arith.mulf %105, %92 : vector<16x5xf32>
    %cst_36 = arith.constant 1.000000e+00 : f32
    %107 = vector.broadcast %cst_36 : f32 to vector<16x1xf32>
    %108 = arith.subf %107, %97 : vector<16x1xf32>
    %109 = vector.broadcast %108 : vector<16x1xf32> to vector<16x5xf32>
    %110 = arith.mulf %109, %57 : vector<16x5xf32>
    %111 = arith.addf %106, %110 : vector<16x5xf32>
    %c2_i32 = arith.constant 2 : i32
    %c0_i32_37 = arith.constant 0 : i32
    %112 = arith.addi %c0_i32_37, %c2_i32 : i32
    %113 = arith.index_cast %112 : i32 to index
    %c0_38 = arith.constant 0 : index
    %c0_39 = arith.constant 0 : index
    %114 = vector.load %arg1[%113, %c0_38, %c0_39] : memref<12x16x20xf32, #tpu.memory_space<vmem>>, vector<1x16x20xf32>
    %115 = vector.shape_cast %114 : vector<1x16x20xf32> to vector<16x20xf32>
    %cst_40 = arith.constant dense<0.000000e+00> : vector<16x20xf32>
    %116 = tpu.matmul %104, %1, %cst_40 {dimension_numbers = #tpu.dot_dimension_numbers<[1], [0], [0], [1], [0, 0, 1, 1], [], []>} : vector<16x5xf32>, vector<5x20xf32>, vector<16x20xf32> -> vector<16x20xf32>
    %117 = arith.addf %115, %116 : vector<16x20xf32>
    %118 = vector.extract_strided_slice %117 {offsets = [0, 0], sizes = [16, 5], strides = [1, 1]} : vector<16x20xf32> to vector<16x5xf32>
    %cst_41 = arith.constant 5.000000e-01 : f32
    %119 = vector.broadcast %cst_41 : f32 to vector<16x5xf32>
    %120 = arith.mulf %119, %118 : vector<16x5xf32>
    %121 = math.tanh %120 : vector<16x5xf32>
    %cst_42 = arith.constant 1.000000e+00 : f32
    %122 = vector.broadcast %cst_42 : f32 to vector<16x5xf32>
    %123 = arith.addf %121, %122 : vector<16x5xf32>
    %cst_43 = arith.constant 5.000000e-01 : f32
    %124 = vector.broadcast %cst_43 : f32 to vector<16x5xf32>
    %125 = arith.mulf %124, %123 : vector<16x5xf32>
    %126 = vector.extract_strided_slice %117 {offsets = [0, 5], sizes = [16, 5], strides = [1, 1]} : vector<16x20xf32> to vector<16x5xf32>
    %cst_44 = arith.constant 5.000000e-01 : f32
    %127 = vector.broadcast %cst_44 : f32 to vector<16x5xf32>
    %128 = arith.mulf %127, %126 : vector<16x5xf32>
    %129 = math.tanh %128 : vector<16x5xf32>
    %cst_45 = arith.constant 1.000000e+00 : f32
    %130 = vector.broadcast %cst_45 : f32 to vector<16x5xf32>
    %131 = arith.addf %129, %130 : vector<16x5xf32>
    %cst_46 = arith.constant 5.000000e-01 : f32
    %132 = vector.broadcast %cst_46 : f32 to vector<16x5xf32>
    %133 = arith.mulf %132, %131 : vector<16x5xf32>
    %134 = vector.extract_strided_slice %117 {offsets = [0, 10], sizes = [16, 5], strides = [1, 1]} : vector<16x20xf32> to vector<16x5xf32>
    %135 = math.tanh %134 : vector<16x5xf32>
    %136 = vector.extract_strided_slice %117 {offsets = [0, 15], sizes = [16, 5], strides = [1, 1]} : vector<16x20xf32> to vector<16x5xf32>
    %cst_47 = arith.constant 5.000000e-01 : f32
    %137 = vector.broadcast %cst_47 : f32 to vector<16x5xf32>
    %138 = arith.mulf %137, %136 : vector<16x5xf32>
    %139 = math.tanh %138 : vector<16x5xf32>
    %cst_48 = arith.constant 1.000000e+00 : f32
    %140 = vector.broadcast %cst_48 : f32 to vector<16x5xf32>
    %141 = arith.addf %139, %140 : vector<16x5xf32>
    %cst_49 = arith.constant 5.000000e-01 : f32
    %142 = vector.broadcast %cst_49 : f32 to vector<16x5xf32>
    %143 = arith.mulf %142, %141 : vector<16x5xf32>
    %144 = arith.mulf %133, %111 : vector<16x5xf32>
    %145 = arith.mulf %125, %135 : vector<16x5xf32>
    %146 = arith.addf %144, %145 : vector<16x5xf32>
    %147 = math.tanh %146 : vector<16x5xf32>
    %148 = arith.mulf %143, %147 : vector<16x5xf32>
    %149 = arith.index_cast %112 : i32 to index
    %c0_50 = arith.constant 0 : index
    %c0_51 = arith.constant 0 : index
    %150 = vector.load %arg2[%149, %c0_50, %c0_51] : memref<12x16x1xf32, #tpu.memory_space<vmem>>, vector<1x16x1xf32>
    %151 = vector.shape_cast %150 : vector<1x16x1xf32> to vector<16x1xf32>
    %152 = vector.broadcast %151 : vector<16x1xf32> to vector<16x5xf32>
    %153 = arith.mulf %152, %148 : vector<16x5xf32>
    %cst_52 = arith.constant 1.000000e+00 : f32
    %154 = vector.broadcast %cst_52 : f32 to vector<16x1xf32>
    %155 = arith.subf %154, %151 : vector<16x1xf32>
    %156 = vector.broadcast %155 : vector<16x1xf32> to vector<16x5xf32>
    %157 = arith.mulf %156, %104 : vector<16x5xf32>
    %158 = arith.addf %153, %157 : vector<16x5xf32>
    %159 = vector.broadcast %151 : vector<16x1xf32> to vector<16x5xf32>
    %160 = arith.mulf %159, %146 : vector<16x5xf32>
    %cst_53 = arith.constant 1.000000e+00 : f32
    %161 = vector.broadcast %cst_53 : f32 to vector<16x1xf32>
    %162 = arith.subf %161, %151 : vector<16x1xf32>
    %163 = vector.broadcast %162 : vector<16x1xf32> to vector<16x5xf32>
    %164 = arith.mulf %163, %111 : vector<16x5xf32>
    %165 = arith.addf %160, %164 : vector<16x5xf32>
    %c3_i32 = arith.constant 3 : i32
    %c0_i32_54 = arith.constant 0 : i32
    %166 = arith.addi %c0_i32_54, %c3_i32 : i32
    %167 = arith.index_cast %166 : i32 to index
    %c0_55 = arith.constant 0 : index
    %c0_56 = arith.constant 0 : index
    %168 = vector.load %arg1[%167, %c0_55, %c0_56] : memref<12x16x20xf32, #tpu.memory_space<vmem>>, vector<1x16x20xf32>
    %169 = vector.shape_cast %168 : vector<1x16x20xf32> to vector<16x20xf32>
    %cst_57 = arith.constant dense<0.000000e+00> : vector<16x20xf32>
    %170 = tpu.matmul %158, %1, %cst_57 {dimension_numbers = #tpu.dot_dimension_numbers<[1], [0], [0], [1], [0, 0, 1, 1], [], []>} : vector<16x5xf32>, vector<5x20xf32>, vector<16x20xf32> -> vector<16x20xf32>
    %171 = arith.addf %169, %170 : vector<16x20xf32>
    %172 = vector.extract_strided_slice %171 {offsets = [0, 0], sizes = [16, 5], strides = [1, 1]} : vector<16x20xf32> to vector<16x5xf32>
    %cst_58 = arith.constant 5.000000e-01 : f32
    %173 = vector.broadcast %cst_58 : f32 to vector<16x5xf32>
    %174 = arith.mulf %173, %172 : vector<16x5xf32>
    %175 = math.tanh %174 : vector<16x5xf32>
    %cst_59 = arith.constant 1.000000e+00 : f32
    %176 = vector.broadcast %cst_59 : f32 to vector<16x5xf32>
    %177 = arith.addf %175, %176 : vector<16x5xf32>
    %cst_60 = arith.constant 5.000000e-01 : f32
    %178 = vector.broadcast %cst_60 : f32 to vector<16x5xf32>
    %179 = arith.mulf %178, %177 : vector<16x5xf32>
    %180 = vector.extract_strided_slice %171 {offsets = [0, 5], sizes = [16, 5], strides = [1, 1]} : vector<16x20xf32> to vector<16x5xf32>
    %cst_61 = arith.constant 5.000000e-01 : f32
    %181 = vector.broadcast %cst_61 : f32 to vector<16x5xf32>
    %182 = arith.mulf %181, %180 : vector<16x5xf32>
    %183 = math.tanh %182 : vector<16x5xf32>
    %cst_62 = arith.constant 1.000000e+00 : f32
    %184 = vector.broadcast %cst_62 : f32 to vector<16x5xf32>
    %185 = arith.addf %183, %184 : vector<16x5xf32>
    %cst_63 = arith.constant 5.000000e-01 : f32
    %186 = vector.broadcast %cst_63 : f32 to vector<16x5xf32>
    %187 = arith.mulf %186, %185 : vector<16x5xf32>
    %188 = vector.extract_strided_slice %171 {offsets = [0, 10], sizes = [16, 5], strides = [1, 1]} : vector<16x20xf32> to vector<16x5xf32>
    %189 = math.tanh %188 : vector<16x5xf32>
    %190 = vector.extract_strided_slice %171 {offsets = [0, 15], sizes = [16, 5], strides = [1, 1]} : vector<16x20xf32> to vector<16x5xf32>
    %cst_64 = arith.constant 5.000000e-01 : f32
    %191 = vector.broadcast %cst_64 : f32 to vector<16x5xf32>
    %192 = arith.mulf %191, %190 : vector<16x5xf32>
    %193 = math.tanh %192 : vector<16x5xf32>
    %cst_65 = arith.constant 1.000000e+00 : f32
    %194 = vector.broadcast %cst_65 : f32 to vector<16x5xf32>
    %195 = arith.addf %193, %194 : vector<16x5xf32>
    %cst_66 = arith.constant 5.000000e-01 : f32
    %196 = vector.broadcast %cst_66 : f32 to vector<16x5xf32>
    %197 = arith.mulf %196, %195 : vector<16x5xf32>
    %198 = arith.mulf %187, %165 : vector<16x5xf32>
    %199 = arith.mulf %179, %189 : vector<16x5xf32>
    %200 = arith.addf %198, %199 : vector<16x5xf32>
    %201 = math.tanh %200 : vector<16x5xf32>
    %202 = arith.mulf %197, %201 : vector<16x5xf32>
    %203 = arith.index_cast %166 : i32 to index
    %c0_67 = arith.constant 0 : index
    %c0_68 = arith.constant 0 : index
    %204 = vector.load %arg2[%203, %c0_67, %c0_68] : memref<12x16x1xf32, #tpu.memory_space<vmem>>, vector<1x16x1xf32>
    %205 = vector.shape_cast %204 : vector<1x16x1xf32> to vector<16x1xf32>
    %206 = vector.broadcast %205 : vector<16x1xf32> to vector<16x5xf32>
    %207 = arith.mulf %206, %202 : vector<16x5xf32>
    %cst_69 = arith.constant 1.000000e+00 : f32
    %208 = vector.broadcast %cst_69 : f32 to vector<16x1xf32>
    %209 = arith.subf %208, %205 : vector<16x1xf32>
    %210 = vector.broadcast %209 : vector<16x1xf32> to vector<16x5xf32>
    %211 = arith.mulf %210, %158 : vector<16x5xf32>
    %212 = arith.addf %207, %211 : vector<16x5xf32>
    %213 = vector.broadcast %205 : vector<16x1xf32> to vector<16x5xf32>
    %214 = arith.mulf %213, %200 : vector<16x5xf32>
    %cst_70 = arith.constant 1.000000e+00 : f32
    %215 = vector.broadcast %cst_70 : f32 to vector<16x1xf32>
    %216 = arith.subf %215, %205 : vector<16x1xf32>
    %217 = vector.broadcast %216 : vector<16x1xf32> to vector<16x5xf32>
    %218 = arith.mulf %217, %165 : vector<16x5xf32>
    %219 = arith.addf %214, %218 : vector<16x5xf32>
    %c4_i32 = arith.constant 4 : i32
    %c0_i32_71 = arith.constant 0 : i32
    %220 = arith.addi %c0_i32_71, %c4_i32 : i32
    %221 = arith.index_cast %220 : i32 to index
    %c0_72 = arith.constant 0 : index
    %c0_73 = arith.constant 0 : index
    %222 = vector.load %arg1[%221, %c0_72, %c0_73] : memref<12x16x20xf32, #tpu.memory_space<vmem>>, vector<1x16x20xf32>
    %223 = vector.shape_cast %222 : vector<1x16x20xf32> to vector<16x20xf32>
    %cst_74 = arith.constant dense<0.000000e+00> : vector<16x20xf32>
    %224 = tpu.matmul %212, %1, %cst_74 {dimension_numbers = #tpu.dot_dimension_numbers<[1], [0], [0], [1], [0, 0, 1, 1], [], []>} : vector<16x5xf32>, vector<5x20xf32>, vector<16x20xf32> -> vector<16x20xf32>
    %225 = arith.addf %223, %224 : vector<16x20xf32>
    %226 = vector.extract_strided_slice %225 {offsets = [0, 0], sizes = [16, 5], strides = [1, 1]} : vector<16x20xf32> to vector<16x5xf32>
    %cst_75 = arith.constant 5.000000e-01 : f32
    %227 = vector.broadcast %cst_75 : f32 to vector<16x5xf32>
    %228 = arith.mulf %227, %226 : vector<16x5xf32>
    %229 = math.tanh %228 : vector<16x5xf32>
    %cst_76 = arith.constant 1.000000e+00 : f32
    %230 = vector.broadcast %cst_76 : f32 to vector<16x5xf32>
    %231 = arith.addf %229, %230 : vector<16x5xf32>
    %cst_77 = arith.constant 5.000000e-01 : f32
    %232 = vector.broadcast %cst_77 : f32 to vector<16x5xf32>
    %233 = arith.mulf %232, %231 : vector<16x5xf32>
    %234 = vector.extract_strided_slice %225 {offsets = [0, 5], sizes = [16, 5], strides = [1, 1]} : vector<16x20xf32> to vector<16x5xf32>
    %cst_78 = arith.constant 5.000000e-01 : f32
    %235 = vector.broadcast %cst_78 : f32 to vector<16x5xf32>
    %236 = arith.mulf %235, %234 : vector<16x5xf32>
    %237 = math.tanh %236 : vector<16x5xf32>
    %cst_79 = arith.constant 1.000000e+00 : f32
    %238 = vector.broadcast %cst_79 : f32 to vector<16x5xf32>
    %239 = arith.addf %237, %238 : vector<16x5xf32>
    %cst_80 = arith.constant 5.000000e-01 : f32
    %240 = vector.broadcast %cst_80 : f32 to vector<16x5xf32>
    %241 = arith.mulf %240, %239 : vector<16x5xf32>
    %242 = vector.extract_strided_slice %225 {offsets = [0, 10], sizes = [16, 5], strides = [1, 1]} : vector<16x20xf32> to vector<16x5xf32>
    %243 = math.tanh %242 : vector<16x5xf32>
    %244 = vector.extract_strided_slice %225 {offsets = [0, 15], sizes = [16, 5], strides = [1, 1]} : vector<16x20xf32> to vector<16x5xf32>
    %cst_81 = arith.constant 5.000000e-01 : f32
    %245 = vector.broadcast %cst_81 : f32 to vector<16x5xf32>
    %246 = arith.mulf %245, %244 : vector<16x5xf32>
    %247 = math.tanh %246 : vector<16x5xf32>
    %cst_82 = arith.constant 1.000000e+00 : f32
    %248 = vector.broadcast %cst_82 : f32 to vector<16x5xf32>
    %249 = arith.addf %247, %248 : vector<16x5xf32>
    %cst_83 = arith.constant 5.000000e-01 : f32
    %250 = vector.broadcast %cst_83 : f32 to vector<16x5xf32>
    %251 = arith.mulf %250, %249 : vector<16x5xf32>
    %252 = arith.mulf %241, %219 : vector<16x5xf32>
    %253 = arith.mulf %233, %243 : vector<16x5xf32>
    %254 = arith.addf %252, %253 : vector<16x5xf32>
    %255 = math.tanh %254 : vector<16x5xf32>
    %256 = arith.mulf %251, %255 : vector<16x5xf32>
    %257 = arith.index_cast %220 : i32 to index
    %c0_84 = arith.constant 0 : index
    %c0_85 = arith.constant 0 : index
    %258 = vector.load %arg2[%257, %c0_84, %c0_85] : memref<12x16x1xf32, #tpu.memory_space<vmem>>, vector<1x16x1xf32>
    %259 = vector.shape_cast %258 : vector<1x16x1xf32> to vector<16x1xf32>
    %260 = vector.broadcast %259 : vector<16x1xf32> to vector<16x5xf32>
    %261 = arith.mulf %260, %256 : vector<16x5xf32>
    %cst_86 = arith.constant 1.000000e+00 : f32
    %262 = vector.broadcast %cst_86 : f32 to vector<16x1xf32>
    %263 = arith.subf %262, %259 : vector<16x1xf32>
    %264 = vector.broadcast %263 : vector<16x1xf32> to vector<16x5xf32>
    %265 = arith.mulf %264, %212 : vector<16x5xf32>
    %266 = arith.addf %261, %265 : vector<16x5xf32>
    %267 = vector.broadcast %259 : vector<16x1xf32> to vector<16x5xf32>
    %268 = arith.mulf %267, %254 : vector<16x5xf32>
    %cst_87 = arith.constant 1.000000e+00 : f32
    %269 = vector.broadcast %cst_87 : f32 to vector<16x1xf32>
    %270 = arith.subf %269, %259 : vector<16x1xf32>
    %271 = vector.broadcast %270 : vector<16x1xf32> to vector<16x5xf32>
    %272 = arith.mulf %271, %219 : vector<16x5xf32>
    %273 = arith.addf %268, %272 : vector<16x5xf32>
    %c5_i32 = arith.constant 5 : i32
    %c0_i32_88 = arith.constant 0 : i32
    %274 = arith.addi %c0_i32_88, %c5_i32 : i32
    %275 = arith.index_cast %274 : i32 to index
    %c0_89 = arith.constant 0 : index
    %c0_90 = arith.constant 0 : index
    %276 = vector.load %arg1[%275, %c0_89, %c0_90] : memref<12x16x20xf32, #tpu.memory_space<vmem>>, vector<1x16x20xf32>
    %277 = vector.shape_cast %276 : vector<1x16x20xf32> to vector<16x20xf32>
    %cst_91 = arith.constant dense<0.000000e+00> : vector<16x20xf32>
    %278 = tpu.matmul %266, %1, %cst_91 {dimension_numbers = #tpu.dot_dimension_numbers<[1], [0], [0], [1], [0, 0, 1, 1], [], []>} : vector<16x5xf32>, vector<5x20xf32>, vector<16x20xf32> -> vector<16x20xf32>
    %279 = arith.addf %277, %278 : vector<16x20xf32>
    %280 = vector.extract_strided_slice %279 {offsets = [0, 0], sizes = [16, 5], strides = [1, 1]} : vector<16x20xf32> to vector<16x5xf32>
    %cst_92 = arith.constant 5.000000e-01 : f32
    %281 = vector.broadcast %cst_92 : f32 to vector<16x5xf32>
    %282 = arith.mulf %281, %280 : vector<16x5xf32>
    %283 = math.tanh %282 : vector<16x5xf32>
    %cst_93 = arith.constant 1.000000e+00 : f32
    %284 = vector.broadcast %cst_93 : f32 to vector<16x5xf32>
    %285 = arith.addf %283, %284 : vector<16x5xf32>
    %cst_94 = arith.constant 5.000000e-01 : f32
    %286 = vector.broadcast %cst_94 : f32 to vector<16x5xf32>
    %287 = arith.mulf %286, %285 : vector<16x5xf32>
    %288 = vector.extract_strided_slice %279 {offsets = [0, 5], sizes = [16, 5], strides = [1, 1]} : vector<16x20xf32> to vector<16x5xf32>
    %cst_95 = arith.constant 5.000000e-01 : f32
    %289 = vector.broadcast %cst_95 : f32 to vector<16x5xf32>
    %290 = arith.mulf %289, %288 : vector<16x5xf32>
    %291 = math.tanh %290 : vector<16x5xf32>
    %cst_96 = arith.constant 1.000000e+00 : f32
    %292 = vector.broadcast %cst_96 : f32 to vector<16x5xf32>
    %293 = arith.addf %291, %292 : vector<16x5xf32>
    %cst_97 = arith.constant 5.000000e-01 : f32
    %294 = vector.broadcast %cst_97 : f32 to vector<16x5xf32>
    %295 = arith.mulf %294, %293 : vector<16x5xf32>
    %296 = vector.extract_strided_slice %279 {offsets = [0, 10], sizes = [16, 5], strides = [1, 1]} : vector<16x20xf32> to vector<16x5xf32>
    %297 = math.tanh %296 : vector<16x5xf32>
    %298 = vector.extract_strided_slice %279 {offsets = [0, 15], sizes = [16, 5], strides = [1, 1]} : vector<16x20xf32> to vector<16x5xf32>
    %cst_98 = arith.constant 5.000000e-01 : f32
    %299 = vector.broadcast %cst_98 : f32 to vector<16x5xf32>
    %300 = arith.mulf %299, %298 : vector<16x5xf32>
    %301 = math.tanh %300 : vector<16x5xf32>
    %cst_99 = arith.constant 1.000000e+00 : f32
    %302 = vector.broadcast %cst_99 : f32 to vector<16x5xf32>
    %303 = arith.addf %301, %302 : vector<16x5xf32>
    %cst_100 = arith.constant 5.000000e-01 : f32
    %304 = vector.broadcast %cst_100 : f32 to vector<16x5xf32>
    %305 = arith.mulf %304, %303 : vector<16x5xf32>
    %306 = arith.mulf %295, %273 : vector<16x5xf32>
    %307 = arith.mulf %287, %297 : vector<16x5xf32>
    %308 = arith.addf %306, %307 : vector<16x5xf32>
    %309 = math.tanh %308 : vector<16x5xf32>
    %310 = arith.mulf %305, %309 : vector<16x5xf32>
    %311 = arith.index_cast %274 : i32 to index
    %c0_101 = arith.constant 0 : index
    %c0_102 = arith.constant 0 : index
    %312 = vector.load %arg2[%311, %c0_101, %c0_102] : memref<12x16x1xf32, #tpu.memory_space<vmem>>, vector<1x16x1xf32>
    %313 = vector.shape_cast %312 : vector<1x16x1xf32> to vector<16x1xf32>
    %314 = vector.broadcast %313 : vector<16x1xf32> to vector<16x5xf32>
    %315 = arith.mulf %314, %310 : vector<16x5xf32>
    %cst_103 = arith.constant 1.000000e+00 : f32
    %316 = vector.broadcast %cst_103 : f32 to vector<16x1xf32>
    %317 = arith.subf %316, %313 : vector<16x1xf32>
    %318 = vector.broadcast %317 : vector<16x1xf32> to vector<16x5xf32>
    %319 = arith.mulf %318, %266 : vector<16x5xf32>
    %320 = arith.addf %315, %319 : vector<16x5xf32>
    %321 = vector.broadcast %313 : vector<16x1xf32> to vector<16x5xf32>
    %322 = arith.mulf %321, %308 : vector<16x5xf32>
    %cst_104 = arith.constant 1.000000e+00 : f32
    %323 = vector.broadcast %cst_104 : f32 to vector<16x1xf32>
    %324 = arith.subf %323, %313 : vector<16x1xf32>
    %325 = vector.broadcast %324 : vector<16x1xf32> to vector<16x5xf32>
    %326 = arith.mulf %325, %273 : vector<16x5xf32>
    %327 = arith.addf %322, %326 : vector<16x5xf32>
    %c6_i32 = arith.constant 6 : i32
    %c1 = arith.constant 1 : index
    %c0_105 = arith.constant 0 : index
    %c0_106 = arith.constant 0 : index
    %328 = vector.load %arg3[%c1, %c0_105, %c0_106] : memref<2x5x20xf32, #tpu.memory_space<vmem>>, vector<1x5x20xf32>
    %329 = vector.shape_cast %328 : vector<1x5x20xf32> to vector<5x20xf32>
    %cst_107 = arith.constant 0.000000e+00 : f32
    %330 = vector.broadcast %cst_107 : f32 to vector<16x5xf32>
    %cst_108 = arith.constant 0.000000e+00 : f32
    %331 = vector.broadcast %cst_108 : f32 to vector<16x5xf32>
    %c0_i32_109 = arith.constant 0 : i32
    %c6_i32_110 = arith.constant 6 : i32
    %332 = arith.addi %c6_i32_110, %c0_i32_109 : i32
    %333 = arith.index_cast %332 : i32 to index
    %c0_111 = arith.constant 0 : index
    %c0_112 = arith.constant 0 : index
    %334 = vector.load %arg1[%333, %c0_111, %c0_112] : memref<12x16x20xf32, #tpu.memory_space<vmem>>, vector<1x16x20xf32>
    %335 = vector.shape_cast %334 : vector<1x16x20xf32> to vector<16x20xf32>
    %cst_113 = arith.constant dense<0.000000e+00> : vector<16x20xf32>
    %336 = tpu.matmul %330, %329, %cst_113 {dimension_numbers = #tpu.dot_dimension_numbers<[1], [0], [0], [1], [0, 0, 1, 1], [], []>} : vector<16x5xf32>, vector<5x20xf32>, vector<16x20xf32> -> vector<16x20xf32>
    %337 = arith.addf %335, %336 : vector<16x20xf32>
    %338 = vector.extract_strided_slice %337 {offsets = [0, 0], sizes = [16, 5], strides = [1, 1]} : vector<16x20xf32> to vector<16x5xf32>
    %cst_114 = arith.constant 5.000000e-01 : f32
    %339 = vector.broadcast %cst_114 : f32 to vector<16x5xf32>
    %340 = arith.mulf %339, %338 : vector<16x5xf32>
    %341 = math.tanh %340 : vector<16x5xf32>
    %cst_115 = arith.constant 1.000000e+00 : f32
    %342 = vector.broadcast %cst_115 : f32 to vector<16x5xf32>
    %343 = arith.addf %341, %342 : vector<16x5xf32>
    %cst_116 = arith.constant 5.000000e-01 : f32
    %344 = vector.broadcast %cst_116 : f32 to vector<16x5xf32>
    %345 = arith.mulf %344, %343 : vector<16x5xf32>
    %346 = vector.extract_strided_slice %337 {offsets = [0, 5], sizes = [16, 5], strides = [1, 1]} : vector<16x20xf32> to vector<16x5xf32>
    %cst_117 = arith.constant 5.000000e-01 : f32
    %347 = vector.broadcast %cst_117 : f32 to vector<16x5xf32>
    %348 = arith.mulf %347, %346 : vector<16x5xf32>
    %349 = math.tanh %348 : vector<16x5xf32>
    %cst_118 = arith.constant 1.000000e+00 : f32
    %350 = vector.broadcast %cst_118 : f32 to vector<16x5xf32>
    %351 = arith.addf %349, %350 : vector<16x5xf32>
    %cst_119 = arith.constant 5.000000e-01 : f32
    %352 = vector.broadcast %cst_119 : f32 to vector<16x5xf32>
    %353 = arith.mulf %352, %351 : vector<16x5xf32>
    %354 = vector.extract_strided_slice %337 {offsets = [0, 10], sizes = [16, 5], strides = [1, 1]} : vector<16x20xf32> to vector<16x5xf32>
    %355 = math.tanh %354 : vector<16x5xf32>
    %356 = vector.extract_strided_slice %337 {offsets = [0, 15], sizes = [16, 5], strides = [1, 1]} : vector<16x20xf32> to vector<16x5xf32>
    %cst_120 = arith.constant 5.000000e-01 : f32
    %357 = vector.broadcast %cst_120 : f32 to vector<16x5xf32>
    %358 = arith.mulf %357, %356 : vector<16x5xf32>
    %359 = math.tanh %358 : vector<16x5xf32>
    %cst_121 = arith.constant 1.000000e+00 : f32
    %360 = vector.broadcast %cst_121 : f32 to vector<16x5xf32>
    %361 = arith.addf %359, %360 : vector<16x5xf32>
    %cst_122 = arith.constant 5.000000e-01 : f32
    %362 = vector.broadcast %cst_122 : f32 to vector<16x5xf32>
    %363 = arith.mulf %362, %361 : vector<16x5xf32>
    %364 = arith.mulf %353, %331 : vector<16x5xf32>
    %365 = arith.mulf %345, %355 : vector<16x5xf32>
    %366 = arith.addf %364, %365 : vector<16x5xf32>
    %367 = math.tanh %366 : vector<16x5xf32>
    %368 = arith.mulf %363, %367 : vector<16x5xf32>
    %369 = arith.index_cast %332 : i32 to index
    %c0_123 = arith.constant 0 : index
    %c0_124 = arith.constant 0 : index
    %370 = vector.load %arg2[%369, %c0_123, %c0_124] : memref<12x16x1xf32, #tpu.memory_space<vmem>>, vector<1x16x1xf32>
    %371 = vector.shape_cast %370 : vector<1x16x1xf32> to vector<16x1xf32>
    %372 = vector.broadcast %371 : vector<16x1xf32> to vector<16x5xf32>
    %373 = arith.mulf %372, %368 : vector<16x5xf32>
    %cst_125 = arith.constant 1.000000e+00 : f32
    %374 = vector.broadcast %cst_125 : f32 to vector<16x1xf32>
    %375 = arith.subf %374, %371 : vector<16x1xf32>
    %376 = vector.broadcast %375 : vector<16x1xf32> to vector<16x5xf32>
    %377 = arith.mulf %376, %330 : vector<16x5xf32>
    %378 = arith.addf %373, %377 : vector<16x5xf32>
    %379 = vector.broadcast %371 : vector<16x1xf32> to vector<16x5xf32>
    %380 = arith.mulf %379, %366 : vector<16x5xf32>
    %cst_126 = arith.constant 1.000000e+00 : f32
    %381 = vector.broadcast %cst_126 : f32 to vector<16x1xf32>
    %382 = arith.subf %381, %371 : vector<16x1xf32>
    %383 = vector.broadcast %382 : vector<16x1xf32> to vector<16x5xf32>
    %384 = arith.mulf %383, %331 : vector<16x5xf32>
    %385 = arith.addf %380, %384 : vector<16x5xf32>
    %c1_i32_127 = arith.constant 1 : i32
    %c6_i32_128 = arith.constant 6 : i32
    %386 = arith.addi %c6_i32_128, %c1_i32_127 : i32
    %387 = arith.index_cast %386 : i32 to index
    %c0_129 = arith.constant 0 : index
    %c0_130 = arith.constant 0 : index
    %388 = vector.load %arg1[%387, %c0_129, %c0_130] : memref<12x16x20xf32, #tpu.memory_space<vmem>>, vector<1x16x20xf32>
    %389 = vector.shape_cast %388 : vector<1x16x20xf32> to vector<16x20xf32>
    %cst_131 = arith.constant dense<0.000000e+00> : vector<16x20xf32>
    %390 = tpu.matmul %378, %329, %cst_131 {dimension_numbers = #tpu.dot_dimension_numbers<[1], [0], [0], [1], [0, 0, 1, 1], [], []>} : vector<16x5xf32>, vector<5x20xf32>, vector<16x20xf32> -> vector<16x20xf32>
    %391 = arith.addf %389, %390 : vector<16x20xf32>
    %392 = vector.extract_strided_slice %391 {offsets = [0, 0], sizes = [16, 5], strides = [1, 1]} : vector<16x20xf32> to vector<16x5xf32>
    %cst_132 = arith.constant 5.000000e-01 : f32
    %393 = vector.broadcast %cst_132 : f32 to vector<16x5xf32>
    %394 = arith.mulf %393, %392 : vector<16x5xf32>
    %395 = math.tanh %394 : vector<16x5xf32>
    %cst_133 = arith.constant 1.000000e+00 : f32
    %396 = vector.broadcast %cst_133 : f32 to vector<16x5xf32>
    %397 = arith.addf %395, %396 : vector<16x5xf32>
    %cst_134 = arith.constant 5.000000e-01 : f32
    %398 = vector.broadcast %cst_134 : f32 to vector<16x5xf32>
    %399 = arith.mulf %398, %397 : vector<16x5xf32>
    %400 = vector.extract_strided_slice %391 {offsets = [0, 5], sizes = [16, 5], strides = [1, 1]} : vector<16x20xf32> to vector<16x5xf32>
    %cst_135 = arith.constant 5.000000e-01 : f32
    %401 = vector.broadcast %cst_135 : f32 to vector<16x5xf32>
    %402 = arith.mulf %401, %400 : vector<16x5xf32>
    %403 = math.tanh %402 : vector<16x5xf32>
    %cst_136 = arith.constant 1.000000e+00 : f32
    %404 = vector.broadcast %cst_136 : f32 to vector<16x5xf32>
    %405 = arith.addf %403, %404 : vector<16x5xf32>
    %cst_137 = arith.constant 5.000000e-01 : f32
    %406 = vector.broadcast %cst_137 : f32 to vector<16x5xf32>
    %407 = arith.mulf %406, %405 : vector<16x5xf32>
    %408 = vector.extract_strided_slice %391 {offsets = [0, 10], sizes = [16, 5], strides = [1, 1]} : vector<16x20xf32> to vector<16x5xf32>
    %409 = math.tanh %408 : vector<16x5xf32>
    %410 = vector.extract_strided_slice %391 {offsets = [0, 15], sizes = [16, 5], strides = [1, 1]} : vector<16x20xf32> to vector<16x5xf32>
    %cst_138 = arith.constant 5.000000e-01 : f32
    %411 = vector.broadcast %cst_138 : f32 to vector<16x5xf32>
    %412 = arith.mulf %411, %410 : vector<16x5xf32>
    %413 = math.tanh %412 : vector<16x5xf32>
    %cst_139 = arith.constant 1.000000e+00 : f32
    %414 = vector.broadcast %cst_139 : f32 to vector<16x5xf32>
    %415 = arith.addf %413, %414 : vector<16x5xf32>
    %cst_140 = arith.constant 5.000000e-01 : f32
    %416 = vector.broadcast %cst_140 : f32 to vector<16x5xf32>
    %417 = arith.mulf %416, %415 : vector<16x5xf32>
    %418 = arith.mulf %407, %385 : vector<16x5xf32>
    %419 = arith.mulf %399, %409 : vector<16x5xf32>
    %420 = arith.addf %418, %419 : vector<16x5xf32>
    %421 = math.tanh %420 : vector<16x5xf32>
    %422 = arith.mulf %417, %421 : vector<16x5xf32>
    %423 = arith.index_cast %386 : i32 to index
    %c0_141 = arith.constant 0 : index
    %c0_142 = arith.constant 0 : index
    %424 = vector.load %arg2[%423, %c0_141, %c0_142] : memref<12x16x1xf32, #tpu.memory_space<vmem>>, vector<1x16x1xf32>
    %425 = vector.shape_cast %424 : vector<1x16x1xf32> to vector<16x1xf32>
    %426 = vector.broadcast %425 : vector<16x1xf32> to vector<16x5xf32>
    %427 = arith.mulf %426, %422 : vector<16x5xf32>
    %cst_143 = arith.constant 1.000000e+00 : f32
    %428 = vector.broadcast %cst_143 : f32 to vector<16x1xf32>
    %429 = arith.subf %428, %425 : vector<16x1xf32>
    %430 = vector.broadcast %429 : vector<16x1xf32> to vector<16x5xf32>
    %431 = arith.mulf %430, %378 : vector<16x5xf32>
    %432 = arith.addf %427, %431 : vector<16x5xf32>
    %433 = vector.broadcast %425 : vector<16x1xf32> to vector<16x5xf32>
    %434 = arith.mulf %433, %420 : vector<16x5xf32>
    %cst_144 = arith.constant 1.000000e+00 : f32
    %435 = vector.broadcast %cst_144 : f32 to vector<16x1xf32>
    %436 = arith.subf %435, %425 : vector<16x1xf32>
    %437 = vector.broadcast %436 : vector<16x1xf32> to vector<16x5xf32>
    %438 = arith.mulf %437, %385 : vector<16x5xf32>
    %439 = arith.addf %434, %438 : vector<16x5xf32>
    %c2_i32_145 = arith.constant 2 : i32
    %c6_i32_146 = arith.constant 6 : i32
    %440 = arith.addi %c6_i32_146, %c2_i32_145 : i32
    %441 = arith.index_cast %440 : i32 to index
    %c0_147 = arith.constant 0 : index
    %c0_148 = arith.constant 0 : index
    %442 = vector.load %arg1[%441, %c0_147, %c0_148] : memref<12x16x20xf32, #tpu.memory_space<vmem>>, vector<1x16x20xf32>
    %443 = vector.shape_cast %442 : vector<1x16x20xf32> to vector<16x20xf32>
    %cst_149 = arith.constant dense<0.000000e+00> : vector<16x20xf32>
    %444 = tpu.matmul %432, %329, %cst_149 {dimension_numbers = #tpu.dot_dimension_numbers<[1], [0], [0], [1], [0, 0, 1, 1], [], []>} : vector<16x5xf32>, vector<5x20xf32>, vector<16x20xf32> -> vector<16x20xf32>
    %445 = arith.addf %443, %444 : vector<16x20xf32>
    %446 = vector.extract_strided_slice %445 {offsets = [0, 0], sizes = [16, 5], strides = [1, 1]} : vector<16x20xf32> to vector<16x5xf32>
    %cst_150 = arith.constant 5.000000e-01 : f32
    %447 = vector.broadcast %cst_150 : f32 to vector<16x5xf32>
    %448 = arith.mulf %447, %446 : vector<16x5xf32>
    %449 = math.tanh %448 : vector<16x5xf32>
    %cst_151 = arith.constant 1.000000e+00 : f32
    %450 = vector.broadcast %cst_151 : f32 to vector<16x5xf32>
    %451 = arith.addf %449, %450 : vector<16x5xf32>
    %cst_152 = arith.constant 5.000000e-01 : f32
    %452 = vector.broadcast %cst_152 : f32 to vector<16x5xf32>
    %453 = arith.mulf %452, %451 : vector<16x5xf32>
    %454 = vector.extract_strided_slice %445 {offsets = [0, 5], sizes = [16, 5], strides = [1, 1]} : vector<16x20xf32> to vector<16x5xf32>
    %cst_153 = arith.constant 5.000000e-01 : f32
    %455 = vector.broadcast %cst_153 : f32 to vector<16x5xf32>
    %456 = arith.mulf %455, %454 : vector<16x5xf32>
    %457 = math.tanh %456 : vector<16x5xf32>
    %cst_154 = arith.constant 1.000000e+00 : f32
    %458 = vector.broadcast %cst_154 : f32 to vector<16x5xf32>
    %459 = arith.addf %457, %458 : vector<16x5xf32>
    %cst_155 = arith.constant 5.000000e-01 : f32
    %460 = vector.broadcast %cst_155 : f32 to vector<16x5xf32>
    %461 = arith.mulf %460, %459 : vector<16x5xf32>
    %462 = vector.extract_strided_slice %445 {offsets = [0, 10], sizes = [16, 5], strides = [1, 1]} : vector<16x20xf32> to vector<16x5xf32>
    %463 = math.tanh %462 : vector<16x5xf32>
    %464 = vector.extract_strided_slice %445 {offsets = [0, 15], sizes = [16, 5], strides = [1, 1]} : vector<16x20xf32> to vector<16x5xf32>
    %cst_156 = arith.constant 5.000000e-01 : f32
    %465 = vector.broadcast %cst_156 : f32 to vector<16x5xf32>
    %466 = arith.mulf %465, %464 : vector<16x5xf32>
    %467 = math.tanh %466 : vector<16x5xf32>
    %cst_157 = arith.constant 1.000000e+00 : f32
    %468 = vector.broadcast %cst_157 : f32 to vector<16x5xf32>
    %469 = arith.addf %467, %468 : vector<16x5xf32>
    %cst_158 = arith.constant 5.000000e-01 : f32
    %470 = vector.broadcast %cst_158 : f32 to vector<16x5xf32>
    %471 = arith.mulf %470, %469 : vector<16x5xf32>
    %472 = arith.mulf %461, %439 : vector<16x5xf32>
    %473 = arith.mulf %453, %463 : vector<16x5xf32>
    %474 = arith.addf %472, %473 : vector<16x5xf32>
    %475 = math.tanh %474 : vector<16x5xf32>
    %476 = arith.mulf %471, %475 : vector<16x5xf32>
    %477 = arith.index_cast %440 : i32 to index
    %c0_159 = arith.constant 0 : index
    %c0_160 = arith.constant 0 : index
    %478 = vector.load %arg2[%477, %c0_159, %c0_160] : memref<12x16x1xf32, #tpu.memory_space<vmem>>, vector<1x16x1xf32>
    %479 = vector.shape_cast %478 : vector<1x16x1xf32> to vector<16x1xf32>
    %480 = vector.broadcast %479 : vector<16x1xf32> to vector<16x5xf32>
    %481 = arith.mulf %480, %476 : vector<16x5xf32>
    %cst_161 = arith.constant 1.000000e+00 : f32
    %482 = vector.broadcast %cst_161 : f32 to vector<16x1xf32>
    %483 = arith.subf %482, %479 : vector<16x1xf32>
    %484 = vector.broadcast %483 : vector<16x1xf32> to vector<16x5xf32>
    %485 = arith.mulf %484, %432 : vector<16x5xf32>
    %486 = arith.addf %481, %485 : vector<16x5xf32>
    %487 = vector.broadcast %479 : vector<16x1xf32> to vector<16x5xf32>
    %488 = arith.mulf %487, %474 : vector<16x5xf32>
    %cst_162 = arith.constant 1.000000e+00 : f32
    %489 = vector.broadcast %cst_162 : f32 to vector<16x1xf32>
    %490 = arith.subf %489, %479 : vector<16x1xf32>
    %491 = vector.broadcast %490 : vector<16x1xf32> to vector<16x5xf32>
    %492 = arith.mulf %491, %439 : vector<16x5xf32>
    %493 = arith.addf %488, %492 : vector<16x5xf32>
    %c3_i32_163 = arith.constant 3 : i32
    %c6_i32_164 = arith.constant 6 : i32
    %494 = arith.addi %c6_i32_164, %c3_i32_163 : i32
    %495 = arith.index_cast %494 : i32 to index
    %c0_165 = arith.constant 0 : index
    %c0_166 = arith.constant 0 : index
    %496 = vector.load %arg1[%495, %c0_165, %c0_166] : memref<12x16x20xf32, #tpu.memory_space<vmem>>, vector<1x16x20xf32>
    %497 = vector.shape_cast %496 : vector<1x16x20xf32> to vector<16x20xf32>
    %cst_167 = arith.constant dense<0.000000e+00> : vector<16x20xf32>
    %498 = tpu.matmul %486, %329, %cst_167 {dimension_numbers = #tpu.dot_dimension_numbers<[1], [0], [0], [1], [0, 0, 1, 1], [], []>} : vector<16x5xf32>, vector<5x20xf32>, vector<16x20xf32> -> vector<16x20xf32>
    %499 = arith.addf %497, %498 : vector<16x20xf32>
    %500 = vector.extract_strided_slice %499 {offsets = [0, 0], sizes = [16, 5], strides = [1, 1]} : vector<16x20xf32> to vector<16x5xf32>
    %cst_168 = arith.constant 5.000000e-01 : f32
    %501 = vector.broadcast %cst_168 : f32 to vector<16x5xf32>
    %502 = arith.mulf %501, %500 : vector<16x5xf32>
    %503 = math.tanh %502 : vector<16x5xf32>
    %cst_169 = arith.constant 1.000000e+00 : f32
    %504 = vector.broadcast %cst_169 : f32 to vector<16x5xf32>
    %505 = arith.addf %503, %504 : vector<16x5xf32>
    %cst_170 = arith.constant 5.000000e-01 : f32
    %506 = vector.broadcast %cst_170 : f32 to vector<16x5xf32>
    %507 = arith.mulf %506, %505 : vector<16x5xf32>
    %508 = vector.extract_strided_slice %499 {offsets = [0, 5], sizes = [16, 5], strides = [1, 1]} : vector<16x20xf32> to vector<16x5xf32>
    %cst_171 = arith.constant 5.000000e-01 : f32
    %509 = vector.broadcast %cst_171 : f32 to vector<16x5xf32>
    %510 = arith.mulf %509, %508 : vector<16x5xf32>
    %511 = math.tanh %510 : vector<16x5xf32>
    %cst_172 = arith.constant 1.000000e+00 : f32
    %512 = vector.broadcast %cst_172 : f32 to vector<16x5xf32>
    %513 = arith.addf %511, %512 : vector<16x5xf32>
    %cst_173 = arith.constant 5.000000e-01 : f32
    %514 = vector.broadcast %cst_173 : f32 to vector<16x5xf32>
    %515 = arith.mulf %514, %513 : vector<16x5xf32>
    %516 = vector.extract_strided_slice %499 {offsets = [0, 10], sizes = [16, 5], strides = [1, 1]} : vector<16x20xf32> to vector<16x5xf32>
    %517 = math.tanh %516 : vector<16x5xf32>
    %518 = vector.extract_strided_slice %499 {offsets = [0, 15], sizes = [16, 5], strides = [1, 1]} : vector<16x20xf32> to vector<16x5xf32>
    %cst_174 = arith.constant 5.000000e-01 : f32
    %519 = vector.broadcast %cst_174 : f32 to vector<16x5xf32>
    %520 = arith.mulf %519, %518 : vector<16x5xf32>
    %521 = math.tanh %520 : vector<16x5xf32>
    %cst_175 = arith.constant 1.000000e+00 : f32
    %522 = vector.broadcast %cst_175 : f32 to vector<16x5xf32>
    %523 = arith.addf %521, %522 : vector<16x5xf32>
    %cst_176 = arith.constant 5.000000e-01 : f32
    %524 = vector.broadcast %cst_176 : f32 to vector<16x5xf32>
    %525 = arith.mulf %524, %523 : vector<16x5xf32>
    %526 = arith.mulf %515, %493 : vector<16x5xf32>
    %527 = arith.mulf %507, %517 : vector<16x5xf32>
    %528 = arith.addf %526, %527 : vector<16x5xf32>
    %529 = math.tanh %528 : vector<16x5xf32>
    %530 = arith.mulf %525, %529 : vector<16x5xf32>
    %531 = arith.index_cast %494 : i32 to index
    %c0_177 = arith.constant 0 : index
    %c0_178 = arith.constant 0 : index
    %532 = vector.load %arg2[%531, %c0_177, %c0_178] : memref<12x16x1xf32, #tpu.memory_space<vmem>>, vector<1x16x1xf32>
    %533 = vector.shape_cast %532 : vector<1x16x1xf32> to vector<16x1xf32>
    %534 = vector.broadcast %533 : vector<16x1xf32> to vector<16x5xf32>
    %535 = arith.mulf %534, %530 : vector<16x5xf32>
    %cst_179 = arith.constant 1.000000e+00 : f32
    %536 = vector.broadcast %cst_179 : f32 to vector<16x1xf32>
    %537 = arith.subf %536, %533 : vector<16x1xf32>
    %538 = vector.broadcast %537 : vector<16x1xf32> to vector<16x5xf32>
    %539 = arith.mulf %538, %486 : vector<16x5xf32>
    %540 = arith.addf %535, %539 : vector<16x5xf32>
    %541 = vector.broadcast %533 : vector<16x1xf32> to vector<16x5xf32>
    %542 = arith.mulf %541, %528 : vector<16x5xf32>
    %cst_180 = arith.constant 1.000000e+00 : f32
    %543 = vector.broadcast %cst_180 : f32 to vector<16x1xf32>
    %544 = arith.subf %543, %533 : vector<16x1xf32>
    %545 = vector.broadcast %544 : vector<16x1xf32> to vector<16x5xf32>
    %546 = arith.mulf %545, %493 : vector<16x5xf32>
    %547 = arith.addf %542, %546 : vector<16x5xf32>
    %c4_i32_181 = arith.constant 4 : i32
    %c6_i32_182 = arith.constant 6 : i32
    %548 = arith.addi %c6_i32_182, %c4_i32_181 : i32
    %549 = arith.index_cast %548 : i32 to index
    %c0_183 = arith.constant 0 : index
    %c0_184 = arith.constant 0 : index
    %550 = vector.load %arg1[%549, %c0_183, %c0_184] : memref<12x16x20xf32, #tpu.memory_space<vmem>>, vector<1x16x20xf32>
    %551 = vector.shape_cast %550 : vector<1x16x20xf32> to vector<16x20xf32>
    %cst_185 = arith.constant dense<0.000000e+00> : vector<16x20xf32>
    %552 = tpu.matmul %540, %329, %cst_185 {dimension_numbers = #tpu.dot_dimension_numbers<[1], [0], [0], [1], [0, 0, 1, 1], [], []>} : vector<16x5xf32>, vector<5x20xf32>, vector<16x20xf32> -> vector<16x20xf32>
    %553 = arith.addf %551, %552 : vector<16x20xf32>
    %554 = vector.extract_strided_slice %553 {offsets = [0, 0], sizes = [16, 5], strides = [1, 1]} : vector<16x20xf32> to vector<16x5xf32>
    %cst_186 = arith.constant 5.000000e-01 : f32
    %555 = vector.broadcast %cst_186 : f32 to vector<16x5xf32>
    %556 = arith.mulf %555, %554 : vector<16x5xf32>
    %557 = math.tanh %556 : vector<16x5xf32>
    %cst_187 = arith.constant 1.000000e+00 : f32
    %558 = vector.broadcast %cst_187 : f32 to vector<16x5xf32>
    %559 = arith.addf %557, %558 : vector<16x5xf32>
    %cst_188 = arith.constant 5.000000e-01 : f32
    %560 = vector.broadcast %cst_188 : f32 to vector<16x5xf32>
    %561 = arith.mulf %560, %559 : vector<16x5xf32>
    %562 = vector.extract_strided_slice %553 {offsets = [0, 5], sizes = [16, 5], strides = [1, 1]} : vector<16x20xf32> to vector<16x5xf32>
    %cst_189 = arith.constant 5.000000e-01 : f32
    %563 = vector.broadcast %cst_189 : f32 to vector<16x5xf32>
    %564 = arith.mulf %563, %562 : vector<16x5xf32>
    %565 = math.tanh %564 : vector<16x5xf32>
    %cst_190 = arith.constant 1.000000e+00 : f32
    %566 = vector.broadcast %cst_190 : f32 to vector<16x5xf32>
    %567 = arith.addf %565, %566 : vector<16x5xf32>
    %cst_191 = arith.constant 5.000000e-01 : f32
    %568 = vector.broadcast %cst_191 : f32 to vector<16x5xf32>
    %569 = arith.mulf %568, %567 : vector<16x5xf32>
    %570 = vector.extract_strided_slice %553 {offsets = [0, 10], sizes = [16, 5], strides = [1, 1]} : vector<16x20xf32> to vector<16x5xf32>
    %571 = math.tanh %570 : vector<16x5xf32>
    %572 = vector.extract_strided_slice %553 {offsets = [0, 15], sizes = [16, 5], strides = [1, 1]} : vector<16x20xf32> to vector<16x5xf32>
    %cst_192 = arith.constant 5.000000e-01 : f32
    %573 = vector.broadcast %cst_192 : f32 to vector<16x5xf32>
    %574 = arith.mulf %573, %572 : vector<16x5xf32>
    %575 = math.tanh %574 : vector<16x5xf32>
    %cst_193 = arith.constant 1.000000e+00 : f32
    %576 = vector.broadcast %cst_193 : f32 to vector<16x5xf32>
    %577 = arith.addf %575, %576 : vector<16x5xf32>
    %cst_194 = arith.constant 5.000000e-01 : f32
    %578 = vector.broadcast %cst_194 : f32 to vector<16x5xf32>
    %579 = arith.mulf %578, %577 : vector<16x5xf32>
    %580 = arith.mulf %569, %547 : vector<16x5xf32>
    %581 = arith.mulf %561, %571 : vector<16x5xf32>
    %582 = arith.addf %580, %581 : vector<16x5xf32>
    %583 = math.tanh %582 : vector<16x5xf32>
    %584 = arith.mulf %579, %583 : vector<16x5xf32>
    %585 = arith.index_cast %548 : i32 to index
    %c0_195 = arith.constant 0 : index
    %c0_196 = arith.constant 0 : index
    %586 = vector.load %arg2[%585, %c0_195, %c0_196] : memref<12x16x1xf32, #tpu.memory_space<vmem>>, vector<1x16x1xf32>
    %587 = vector.shape_cast %586 : vector<1x16x1xf32> to vector<16x1xf32>
    %588 = vector.broadcast %587 : vector<16x1xf32> to vector<16x5xf32>
    %589 = arith.mulf %588, %584 : vector<16x5xf32>
    %cst_197 = arith.constant 1.000000e+00 : f32
    %590 = vector.broadcast %cst_197 : f32 to vector<16x1xf32>
    %591 = arith.subf %590, %587 : vector<16x1xf32>
    %592 = vector.broadcast %591 : vector<16x1xf32> to vector<16x5xf32>
    %593 = arith.mulf %592, %540 : vector<16x5xf32>
    %594 = arith.addf %589, %593 : vector<16x5xf32>
    %595 = vector.broadcast %587 : vector<16x1xf32> to vector<16x5xf32>
    %596 = arith.mulf %595, %582 : vector<16x5xf32>
    %cst_198 = arith.constant 1.000000e+00 : f32
    %597 = vector.broadcast %cst_198 : f32 to vector<16x1xf32>
    %598 = arith.subf %597, %587 : vector<16x1xf32>
    %599 = vector.broadcast %598 : vector<16x1xf32> to vector<16x5xf32>
    %600 = arith.mulf %599, %547 : vector<16x5xf32>
    %601 = arith.addf %596, %600 : vector<16x5xf32>
    %c5_i32_199 = arith.constant 5 : i32
    %c6_i32_200 = arith.constant 6 : i32
    %602 = arith.addi %c6_i32_200, %c5_i32_199 : i32
    %603 = arith.index_cast %602 : i32 to index
    %c0_201 = arith.constant 0 : index
    %c0_202 = arith.constant 0 : index
    %604 = vector.load %arg1[%603, %c0_201, %c0_202] : memref<12x16x20xf32, #tpu.memory_space<vmem>>, vector<1x16x20xf32>
    %605 = vector.shape_cast %604 : vector<1x16x20xf32> to vector<16x20xf32>
    %cst_203 = arith.constant dense<0.000000e+00> : vector<16x20xf32>
    %606 = tpu.matmul %594, %329, %cst_203 {dimension_numbers = #tpu.dot_dimension_numbers<[1], [0], [0], [1], [0, 0, 1, 1], [], []>} : vector<16x5xf32>, vector<5x20xf32>, vector<16x20xf32> -> vector<16x20xf32>
    %607 = arith.addf %605, %606 : vector<16x20xf32>
    %608 = vector.extract_strided_slice %607 {offsets = [0, 0], sizes = [16, 5], strides = [1, 1]} : vector<16x20xf32> to vector<16x5xf32>
    %cst_204 = arith.constant 5.000000e-01 : f32
    %609 = vector.broadcast %cst_204 : f32 to vector<16x5xf32>
    %610 = arith.mulf %609, %608 : vector<16x5xf32>
    %611 = math.tanh %610 : vector<16x5xf32>
    %cst_205 = arith.constant 1.000000e+00 : f32
    %612 = vector.broadcast %cst_205 : f32 to vector<16x5xf32>
    %613 = arith.addf %611, %612 : vector<16x5xf32>
    %cst_206 = arith.constant 5.000000e-01 : f32
    %614 = vector.broadcast %cst_206 : f32 to vector<16x5xf32>
    %615 = arith.mulf %614, %613 : vector<16x5xf32>
    %616 = vector.extract_strided_slice %607 {offsets = [0, 5], sizes = [16, 5], strides = [1, 1]} : vector<16x20xf32> to vector<16x5xf32>
    %cst_207 = arith.constant 5.000000e-01 : f32
    %617 = vector.broadcast %cst_207 : f32 to vector<16x5xf32>
    %618 = arith.mulf %617, %616 : vector<16x5xf32>
    %619 = math.tanh %618 : vector<16x5xf32>
    %cst_208 = arith.constant 1.000000e+00 : f32
    %620 = vector.broadcast %cst_208 : f32 to vector<16x5xf32>
    %621 = arith.addf %619, %620 : vector<16x5xf32>
    %cst_209 = arith.constant 5.000000e-01 : f32
    %622 = vector.broadcast %cst_209 : f32 to vector<16x5xf32>
    %623 = arith.mulf %622, %621 : vector<16x5xf32>
    %624 = vector.extract_strided_slice %607 {offsets = [0, 10], sizes = [16, 5], strides = [1, 1]} : vector<16x20xf32> to vector<16x5xf32>
    %625 = math.tanh %624 : vector<16x5xf32>
    %626 = vector.extract_strided_slice %607 {offsets = [0, 15], sizes = [16, 5], strides = [1, 1]} : vector<16x20xf32> to vector<16x5xf32>
    %cst_210 = arith.constant 5.000000e-01 : f32
    %627 = vector.broadcast %cst_210 : f32 to vector<16x5xf32>
    %628 = arith.mulf %627, %626 : vector<16x5xf32>
    %629 = math.tanh %628 : vector<16x5xf32>
    %cst_211 = arith.constant 1.000000e+00 : f32
    %630 = vector.broadcast %cst_211 : f32 to vector<16x5xf32>
    %631 = arith.addf %629, %630 : vector<16x5xf32>
    %cst_212 = arith.constant 5.000000e-01 : f32
    %632 = vector.broadcast %cst_212 : f32 to vector<16x5xf32>
    %633 = arith.mulf %632, %631 : vector<16x5xf32>
    %634 = arith.mulf %623, %601 : vector<16x5xf32>
    %635 = arith.mulf %615, %625 : vector<16x5xf32>
    %636 = arith.addf %634, %635 : vector<16x5xf32>
    %637 = math.tanh %636 : vector<16x5xf32>
    %638 = arith.mulf %633, %637 : vector<16x5xf32>
    %639 = arith.index_cast %602 : i32 to index
    %c0_213 = arith.constant 0 : index
    %c0_214 = arith.constant 0 : index
    %640 = vector.load %arg2[%639, %c0_213, %c0_214] : memref<12x16x1xf32, #tpu.memory_space<vmem>>, vector<1x16x1xf32>
    %641 = vector.shape_cast %640 : vector<1x16x1xf32> to vector<16x1xf32>
    %642 = vector.broadcast %641 : vector<16x1xf32> to vector<16x5xf32>
    %643 = arith.mulf %642, %638 : vector<16x5xf32>
    %cst_215 = arith.constant 1.000000e+00 : f32
    %644 = vector.broadcast %cst_215 : f32 to vector<16x1xf32>
    %645 = arith.subf %644, %641 : vector<16x1xf32>
    %646 = vector.broadcast %645 : vector<16x1xf32> to vector<16x5xf32>
    %647 = arith.mulf %646, %594 : vector<16x5xf32>
    %648 = arith.addf %643, %647 : vector<16x5xf32>
    %649 = vector.broadcast %641 : vector<16x1xf32> to vector<16x5xf32>
    %650 = arith.mulf %649, %636 : vector<16x5xf32>
    %cst_216 = arith.constant 1.000000e+00 : f32
    %651 = vector.broadcast %cst_216 : f32 to vector<16x1xf32>
    %652 = arith.subf %651, %641 : vector<16x1xf32>
    %653 = vector.broadcast %652 : vector<16x1xf32> to vector<16x5xf32>
    %654 = arith.mulf %653, %601 : vector<16x5xf32>
    %655 = arith.addf %650, %654 : vector<16x5xf32>
    %c6_i32_217 = arith.constant 6 : i32
    %656 = tpu.concatenate %320, %648 in 1 : vector<16x5xf32>, vector<16x5xf32> -> vector<16x10xf32>
    %c0_218 = arith.constant 0 : index
    %c0_219 = arith.constant 0 : index
    %657 = vector.load %arg4[%c0_218, %c0_219] : memref<16x10xf32, #tpu.memory_space<vmem>>, vector<16x10xf32>
    tpu.vector_store %arg4[%c0_218, %c0_219], %656 {strides = array<i32>} : memref<16x10xf32, #tpu.memory_space<vmem>>, vector<16x10xf32>,
    return
  }
  func.func @transform_0(%arg0: i32) -> (i32, i32, i32) {
    %c0_i32 = arith.constant 0 : i32
    %c0_i32_0 = arith.constant 0 : i32
    %c0_i32_1 = arith.constant 0 : i32
    %c0_i32_2 = arith.constant 0 : i32
    return %c0_i32, %c0_i32_0, %c0_i32_1 : i32, i32, i32
  }
  func.func @transform_1(%arg0: i32) -> (i32, i32, i32) {
    %c0_i32 = arith.constant 0 : i32
    %c0_i32_0 = arith.constant 0 : i32
    %c0_i32_1 = arith.constant 0 : i32
    %c0_i32_2 = arith.constant 0 : i32
    return %c0_i32, %c0_i32_0, %c0_i32_1 : i32, i32, i32
  }
  func.func @transform_2(%arg0: i32) -> (i32, i32, i32) {
    %c0_i32 = arith.constant 0 : i32
    %c0_i32_0 = arith.constant 0 : i32
    %c0_i32_1 = arith.constant 0 : i32
    %c0_i32_2 = arith.constant 0 : i32
    return %c0_i32, %c0_i32_0, %c0_i32_1 : i32, i32, i32
  }
  func.func @transform_3(%arg0: i32) -> (i32, i32) {
    %c0_i32 = arith.constant 0 : i32
    %c0_i32_0 = arith.constant 0 : i32
    %c0_i32_1 = arith.constant 0 : i32
    return %c0_i32, %c0_i32_0 : i32, i32
  }
}

module attributes {stable_mosaic.version = 11 : i64} {
  func.func @kernel(%arg0: i32, %arg1: memref<24x32xf32, #tpu.memory_space<vmem>>, %arg2: memref<96x8xf32, #tpu.memory_space<vmem>>, %arg3: memref<128x8xf32, #tpu.memory_space<vmem>>, %arg4: memref<160x8xf32, #tpu.memory_space<vmem>>, %arg5: memref<24x32xf32, #tpu.memory_space<vmem>>, %arg6: memref<1x32xf32, #tpu.memory_space<vmem>>, %arg7: memref<32x5xf32, #tpu.memory_space<vmem>>, %arg8: memref<1x5xf32, #tpu.memory_space<vmem>>, %arg9: memref<2x5xf32, #tpu.memory_space<vmem>>) attributes {dimension_semantics = [#tpu.dimension_semantics<arbitrary>], iteration_bounds = array<i64: 1>, scalar_prefetch = 0 : i64, scratch_operands = 0 : i64, tpu.core_type = #tpu.core_type<tc>, window_params = [{pipeline_mode = #tpu.pipeline_mode<synchronous>, transform_indices = @transform_0, window_bounds = array<i64: 24, 32>}, {pipeline_mode = #tpu.pipeline_mode<synchronous>, transform_indices = @transform_1, window_bounds = array<i64: 96, 8>}, {pipeline_mode = #tpu.pipeline_mode<synchronous>, transform_indices = @transform_2, window_bounds = array<i64: 128, 8>}, {pipeline_mode = #tpu.pipeline_mode<synchronous>, transform_indices = @transform_3, window_bounds = array<i64: 160, 8>}, {pipeline_mode = #tpu.pipeline_mode<synchronous>, transform_indices = @transform_4, window_bounds = array<i64: 24, 32>}, {pipeline_mode = #tpu.pipeline_mode<synchronous>, transform_indices = @transform_5, window_bounds = array<i64: 1, 32>}, {pipeline_mode = #tpu.pipeline_mode<synchronous>, transform_indices = @transform_6, window_bounds = array<i64: 32, 5>}, {pipeline_mode = #tpu.pipeline_mode<synchronous>, transform_indices = @transform_7, window_bounds = array<i64: 1, 5>}, {pipeline_mode = #tpu.pipeline_mode<synchronous>, transform_indices = @transform_8, window_bounds = array<i64: 2, 5>}]} {
    %c0 = arith.constant 0 : index
    %c0_0 = arith.constant 0 : index
    %0 = vector.load %arg1[%c0, %c0_0] : memref<24x32xf32, #tpu.memory_space<vmem>>, vector<24x32xf32>
    %1 = vector.extract_strided_slice %0 {offsets = [1, 0], sizes = [8, 32], strides = [1, 1]} : vector<24x32xf32> to vector<8x32xf32>
    %2 = vector.extract_strided_slice %0 {offsets = [2, 0], sizes = [8, 32], strides = [1, 1]} : vector<24x32xf32> to vector<8x32xf32>
    %3 = vector.extract_strided_slice %0 {offsets = [3, 0], sizes = [8, 32], strides = [1, 1]} : vector<24x32xf32> to vector<8x32xf32>
    %4 = tpu.concatenate %1, %2, %3 in 1 : vector<8x32xf32>, vector<8x32xf32>, vector<8x32xf32> -> vector<8x96xf32>
    %5 = vector.extract_strided_slice %0 {offsets = [13, 0], sizes = [8, 32], strides = [1, 1]} : vector<24x32xf32> to vector<8x32xf32>
    %6 = vector.extract_strided_slice %0 {offsets = [14, 0], sizes = [8, 32], strides = [1, 1]} : vector<24x32xf32> to vector<8x32xf32>
    %7 = vector.extract_strided_slice %0 {offsets = [15, 0], sizes = [8, 32], strides = [1, 1]} : vector<24x32xf32> to vector<8x32xf32>
    %8 = tpu.concatenate %5, %6, %7 in 1 : vector<8x32xf32>, vector<8x32xf32>, vector<8x32xf32> -> vector<8x96xf32>
    %9 = tpu.concatenate %4, %8 in 0 : vector<8x96xf32>, vector<8x96xf32> -> vector<16x96xf32>
    %c0_1 = arith.constant 0 : index
    %c0_2 = arith.constant 0 : index
    %10 = vector.load %arg2[%c0_1, %c0_2] : memref<96x8xf32, #tpu.memory_space<vmem>>, vector<96x8xf32>
    %cst = arith.constant dense<0.000000e+00> : vector<16x8xf32>
    %11 = tpu.matmul %9, %10, %cst {dimension_numbers = #tpu.dot_dimension_numbers<[1], [0], [0], [1], [0, 0, 1, 1], [], []>} : vector<16x96xf32>, vector<96x8xf32>, vector<16x8xf32> -> vector<16x8xf32>
    %cst_3 = arith.constant 0.000000e+00 : f32
    %12 = vector.broadcast %cst_3 : f32 to vector<16x8xf32>
    %13 = arith.maximumf %11, %12 : vector<16x8xf32>
    %14 = vector.extract_strided_slice %13 {offsets = [0, 0], sizes = [8, 8], strides = [1, 1]} : vector<16x8xf32> to vector<8x8xf32>
    %cst_4 = arith.constant dense<0xFF800000> : vector<8xf32>
    %15 = vector.multi_reduction <maximumf>, %14, %cst_4 [0] : vector<8x8xf32> to vector<8xf32>
    %16 = vector.shape_cast %15 : vector<8xf32> to vector<1x8xf32>
    %17 = vector.extract_strided_slice %13 {offsets = [8, 0], sizes = [8, 8], strides = [1, 1]} : vector<16x8xf32> to vector<8x8xf32>
    %cst_5 = arith.constant dense<0xFF800000> : vector<8xf32>
    %18 = vector.multi_reduction <maximumf>, %17, %cst_5 [0] : vector<8x8xf32> to vector<8xf32>
    %19 = vector.shape_cast %18 : vector<8xf32> to vector<1x8xf32>
    %20 = vector.extract_strided_slice %0 {offsets = [0, 0], sizes = [9, 32], strides = [1, 1]} : vector<24x32xf32> to vector<9x32xf32>
    %21 = vector.extract_strided_slice %0 {offsets = [1, 0], sizes = [9, 32], strides = [1, 1]} : vector<24x32xf32> to vector<9x32xf32>
    %22 = vector.extract_strided_slice %0 {offsets = [2, 0], sizes = [9, 32], strides = [1, 1]} : vector<24x32xf32> to vector<9x32xf32>
    %23 = vector.extract_strided_slice %0 {offsets = [3, 0], sizes = [9, 32], strides = [1, 1]} : vector<24x32xf32> to vector<9x32xf32>
    %24 = tpu.concatenate %20, %21, %22, %23 in 1 : vector<9x32xf32>, vector<9x32xf32>, vector<9x32xf32>, vector<9x32xf32> -> vector<9x128xf32>
    %25 = vector.extract_strided_slice %0 {offsets = [12, 0], sizes = [9, 32], strides = [1, 1]} : vector<24x32xf32> to vector<9x32xf32>
    %26 = vector.extract_strided_slice %0 {offsets = [13, 0], sizes = [9, 32], strides = [1, 1]} : vector<24x32xf32> to vector<9x32xf32>
    %27 = vector.extract_strided_slice %0 {offsets = [14, 0], sizes = [9, 32], strides = [1, 1]} : vector<24x32xf32> to vector<9x32xf32>
    %28 = vector.extract_strided_slice %0 {offsets = [15, 0], sizes = [9, 32], strides = [1, 1]} : vector<24x32xf32> to vector<9x32xf32>
    %29 = tpu.concatenate %25, %26, %27, %28 in 1 : vector<9x32xf32>, vector<9x32xf32>, vector<9x32xf32>, vector<9x32xf32> -> vector<9x128xf32>
    %30 = tpu.concatenate %24, %29 in 0 : vector<9x128xf32>, vector<9x128xf32> -> vector<18x128xf32>
    %c0_6 = arith.constant 0 : index
    %c0_7 = arith.constant 0 : index
    %31 = vector.load %arg3[%c0_6, %c0_7] : memref<128x8xf32, #tpu.memory_space<vmem>>, vector<128x8xf32>
    %cst_8 = arith.constant dense<0.000000e+00> : vector<18x8xf32>
    %32 = tpu.matmul %30, %31, %cst_8 {dimension_numbers = #tpu.dot_dimension_numbers<[1], [0], [0], [1], [0, 0, 1, 1], [], []>} : vector<18x128xf32>, vector<128x8xf32>, vector<18x8xf32> -> vector<18x8xf32>
    %cst_9 = arith.constant 0.000000e+00 : f32
    %33 = vector.broadcast %cst_9 : f32 to vector<18x8xf32>
    %34 = arith.maximumf %32, %33 : vector<18x8xf32>
    %35 = vector.extract_strided_slice %34 {offsets = [0, 0], sizes = [9, 8], strides = [1, 1]} : vector<18x8xf32> to vector<9x8xf32>
    %cst_10 = arith.constant dense<0xFF800000> : vector<8xf32>
    %36 = vector.multi_reduction <maximumf>, %35, %cst_10 [0] : vector<9x8xf32> to vector<8xf32>
    %37 = vector.shape_cast %36 : vector<8xf32> to vector<1x8xf32>
    %38 = vector.extract_strided_slice %34 {offsets = [9, 0], sizes = [9, 8], strides = [1, 1]} : vector<18x8xf32> to vector<9x8xf32>
    %cst_11 = arith.constant dense<0xFF800000> : vector<8xf32>
    %39 = vector.multi_reduction <maximumf>, %38, %cst_11 [0] : vector<9x8xf32> to vector<8xf32>
    %40 = vector.shape_cast %39 : vector<8xf32> to vector<1x8xf32>
    %41 = vector.extract_strided_slice %0 {offsets = [0, 0], sizes = [8, 32], strides = [1, 1]} : vector<24x32xf32> to vector<8x32xf32>
    %42 = vector.extract_strided_slice %0 {offsets = [1, 0], sizes = [8, 32], strides = [1, 1]} : vector<24x32xf32> to vector<8x32xf32>
    %43 = vector.extract_strided_slice %0 {offsets = [2, 0], sizes = [8, 32], strides = [1, 1]} : vector<24x32xf32> to vector<8x32xf32>
    %44 = vector.extract_strided_slice %0 {offsets = [3, 0], sizes = [8, 32], strides = [1, 1]} : vector<24x32xf32> to vector<8x32xf32>
    %45 = vector.extract_strided_slice %0 {offsets = [4, 0], sizes = [8, 32], strides = [1, 1]} : vector<24x32xf32> to vector<8x32xf32>
    %46 = tpu.concatenate %41, %42, %43, %44, %45 in 1 : vector<8x32xf32>, vector<8x32xf32>, vector<8x32xf32>, vector<8x32xf32>, vector<8x32xf32> -> vector<8x160xf32>
    %47 = vector.extract_strided_slice %0 {offsets = [12, 0], sizes = [8, 32], strides = [1, 1]} : vector<24x32xf32> to vector<8x32xf32>
    %48 = vector.extract_strided_slice %0 {offsets = [13, 0], sizes = [8, 32], strides = [1, 1]} : vector<24x32xf32> to vector<8x32xf32>
    %49 = vector.extract_strided_slice %0 {offsets = [14, 0], sizes = [8, 32], strides = [1, 1]} : vector<24x32xf32> to vector<8x32xf32>
    %50 = vector.extract_strided_slice %0 {offsets = [15, 0], sizes = [8, 32], strides = [1, 1]} : vector<24x32xf32> to vector<8x32xf32>
    %51 = vector.extract_strided_slice %0 {offsets = [16, 0], sizes = [8, 32], strides = [1, 1]} : vector<24x32xf32> to vector<8x32xf32>
    %52 = tpu.concatenate %47, %48, %49, %50, %51 in 1 : vector<8x32xf32>, vector<8x32xf32>, vector<8x32xf32>, vector<8x32xf32>, vector<8x32xf32> -> vector<8x160xf32>
    %53 = tpu.concatenate %46, %52 in 0 : vector<8x160xf32>, vector<8x160xf32> -> vector<16x160xf32>
    %c0_12 = arith.constant 0 : index
    %c0_13 = arith.constant 0 : index
    %54 = vector.load %arg4[%c0_12, %c0_13] : memref<160x8xf32, #tpu.memory_space<vmem>>, vector<160x8xf32>
    %cst_14 = arith.constant dense<0.000000e+00> : vector<16x8xf32>
    %55 = tpu.matmul %53, %54, %cst_14 {dimension_numbers = #tpu.dot_dimension_numbers<[1], [0], [0], [1], [0, 0, 1, 1], [], []>} : vector<16x160xf32>, vector<160x8xf32>, vector<16x8xf32> -> vector<16x8xf32>
    %cst_15 = arith.constant 0.000000e+00 : f32
    %56 = vector.broadcast %cst_15 : f32 to vector<16x8xf32>
    %57 = arith.maximumf %55, %56 : vector<16x8xf32>
    %58 = vector.extract_strided_slice %57 {offsets = [0, 0], sizes = [8, 8], strides = [1, 1]} : vector<16x8xf32> to vector<8x8xf32>
    %cst_16 = arith.constant dense<0xFF800000> : vector<8xf32>
    %59 = vector.multi_reduction <maximumf>, %58, %cst_16 [0] : vector<8x8xf32> to vector<8xf32>
    %60 = vector.shape_cast %59 : vector<8xf32> to vector<1x8xf32>
    %61 = vector.extract_strided_slice %57 {offsets = [8, 0], sizes = [8, 8], strides = [1, 1]} : vector<16x8xf32> to vector<8x8xf32>
    %cst_17 = arith.constant dense<0xFF800000> : vector<8xf32>
    %62 = vector.multi_reduction <maximumf>, %61, %cst_17 [0] : vector<8x8xf32> to vector<8xf32>
    %63 = vector.shape_cast %62 : vector<8xf32> to vector<1x8xf32>
    %64 = tpu.concatenate %16, %37, %60 in 1 : vector<1x8xf32>, vector<1x8xf32>, vector<1x8xf32> -> vector<1x24xf32>
    %65 = tpu.concatenate %19, %40, %63 in 1 : vector<1x8xf32>, vector<1x8xf32>, vector<1x8xf32> -> vector<1x24xf32>
    %66 = tpu.concatenate %64, %65 in 0 : vector<1x24xf32>, vector<1x24xf32> -> vector<2x24xf32>
    %c0_18 = arith.constant 0 : index
    %c0_19 = arith.constant 0 : index
    %67 = vector.load %arg5[%c0_18, %c0_19] : memref<24x32xf32, #tpu.memory_space<vmem>>, vector<24x32xf32>
    %cst_20 = arith.constant dense<0.000000e+00> : vector<2x32xf32>
    %68 = tpu.matmul %66, %67, %cst_20 {dimension_numbers = #tpu.dot_dimension_numbers<[1], [0], [0], [1], [0, 0, 1, 1], [], []>} : vector<2x24xf32>, vector<24x32xf32>, vector<2x32xf32> -> vector<2x32xf32>
    %c0_21 = arith.constant 0 : index
    %c0_22 = arith.constant 0 : index
    %69 = vector.load %arg6[%c0_21, %c0_22] : memref<1x32xf32, #tpu.memory_space<vmem>>, vector<1x32xf32>
    %70 = vector.broadcast %69 : vector<1x32xf32> to vector<2x32xf32>
    %71 = arith.addf %68, %70 : vector<2x32xf32>
    %c0_23 = arith.constant 0 : index
    %c0_24 = arith.constant 0 : index
    %72 = vector.load %arg7[%c0_23, %c0_24] : memref<32x5xf32, #tpu.memory_space<vmem>>, vector<32x5xf32>
    %cst_25 = arith.constant dense<0.000000e+00> : vector<2x5xf32>
    %73 = tpu.matmul %71, %72, %cst_25 {dimension_numbers = #tpu.dot_dimension_numbers<[1], [0], [0], [1], [0, 0, 1, 1], [], []>} : vector<2x32xf32>, vector<32x5xf32>, vector<2x5xf32> -> vector<2x5xf32>
    %c0_26 = arith.constant 0 : index
    %c0_27 = arith.constant 0 : index
    %74 = vector.load %arg8[%c0_26, %c0_27] : memref<1x5xf32, #tpu.memory_space<vmem>>, vector<1x5xf32>
    %75 = vector.broadcast %74 : vector<1x5xf32> to vector<2x5xf32>
    %76 = arith.addf %73, %75 : vector<2x5xf32>
    %c0_28 = arith.constant 0 : index
    %c0_29 = arith.constant 0 : index
    %77 = vector.load %arg9[%c0_28, %c0_29] : memref<2x5xf32, #tpu.memory_space<vmem>>, vector<2x5xf32>
    tpu.vector_store %arg9[%c0_28, %c0_29], %76 {strides = array<i32>} : memref<2x5xf32, #tpu.memory_space<vmem>>, vector<2x5xf32>,
    return
  }
  func.func @transform_0(%arg0: i32) -> (i32, i32) {
    %c0_i32 = arith.constant 0 : i32
    %c0_i32_0 = arith.constant 0 : i32
    %c0_i32_1 = arith.constant 0 : i32
    return %c0_i32, %c0_i32_0 : i32, i32
  }
  func.func @transform_1(%arg0: i32) -> (i32, i32) {
    %c0_i32 = arith.constant 0 : i32
    %c0_i32_0 = arith.constant 0 : i32
    %c0_i32_1 = arith.constant 0 : i32
    return %c0_i32, %c0_i32_0 : i32, i32
  }
  func.func @transform_2(%arg0: i32) -> (i32, i32) {
    %c0_i32 = arith.constant 0 : i32
    %c0_i32_0 = arith.constant 0 : i32
    %c0_i32_1 = arith.constant 0 : i32
    return %c0_i32, %c0_i32_0 : i32, i32
  }
  func.func @transform_3(%arg0: i32) -> (i32, i32) {
    %c0_i32 = arith.constant 0 : i32
    %c0_i32_0 = arith.constant 0 : i32
    %c0_i32_1 = arith.constant 0 : i32
    return %c0_i32, %c0_i32_0 : i32, i32
  }
  func.func @transform_4(%arg0: i32) -> (i32, i32) {
    %c0_i32 = arith.constant 0 : i32
    %c0_i32_0 = arith.constant 0 : i32
    %c0_i32_1 = arith.constant 0 : i32
    return %c0_i32, %c0_i32_0 : i32, i32
  }
  func.func @transform_5(%arg0: i32) -> (i32, i32) {
    %c0_i32 = arith.constant 0 : i32
    %c0_i32_0 = arith.constant 0 : i32
    %c0_i32_1 = arith.constant 0 : i32
    return %c0_i32, %c0_i32_0 : i32, i32
  }
  func.func @transform_6(%arg0: i32) -> (i32, i32) {
    %c0_i32 = arith.constant 0 : i32
    %c0_i32_0 = arith.constant 0 : i32
    %c0_i32_1 = arith.constant 0 : i32
    return %c0_i32, %c0_i32_0 : i32, i32
  }
  func.func @transform_7(%arg0: i32) -> (i32, i32) {
    %c0_i32 = arith.constant 0 : i32
    %c0_i32_0 = arith.constant 0 : i32
    %c0_i32_1 = arith.constant 0 : i32
    return %c0_i32, %c0_i32_0 : i32, i32
  }
  func.func @transform_8(%arg0: i32) -> (i32, i32) {
    %c0_i32 = arith.constant 0 : i32
    %c0_i32_0 = arith.constant 0 : i32
    %c0_i32_1 = arith.constant 0 : i32
    return %c0_i32, %c0_i32_0 : i32, i32
  }
}

</mosaic_0001>

<llo_original>
// kernel: cnnlstm_forward.3
$region0: #{cnnlstm_forward.3}
  #allocation0 [shape = 'u32[]', space=smem, size = 0x4, offset = 0x4, fixed_abs, tag = 'smem constant byte address 0x4 - core index']
  #allocation1 [shape = 'u32[144,128]{1,0:T(1,128)}', space=vmem, size = 0x12000, scoped, tag = 'internal scratch']
  %s0 = inlined_call_operand.vmem [shape: f32[24,32], index: 0, kind: input, shape index: {}]
  %s1 = inlined_call_operand.vmem [shape: f32[96,8], index: 1, kind: input, shape index: {}]
  %s2 = inlined_call_operand.vmem [shape: f32[128,8], index: 2, kind: input, shape index: {}]
  %s3 = inlined_call_operand.vmem [shape: f32[160,8], index: 3, kind: input, shape index: {}]
  %s4 = inlined_call_operand.vmem [shape: f32[24,32], index: 4, kind: input, shape index: {}]
  %s5 = inlined_call_operand.vmem [shape: f32[1,32], index: 5, kind: input, shape index: {}]
  %s6 = inlined_call_operand.vmem [shape: f32[32,5], index: 6, kind: input, shape index: {}]
  %s7 = inlined_call_operand.vmem [shape: f32[1,5], index: 7, kind: input, shape index: {}]
  %s8 = inlined_call_operand.hbm [shape: f32[2,5], index: 8, kind: output, shape index: {}]
  %s9 = sld [smem:[#allocation0]]
  $region42: #{cnnlstm_forward.3} parent=0
    _
  %s11 = ssub.s32 1, %s9
  %s12 = scalar_select 0, %s11, %s9
  $region1: #{cnnlstm_forward.3} parent=0
    #allocation2 [shape = 'u8[1024]{0}', space=vmem, size = 0x400, scoped, tag = 'output window, operand 0, single buffered']
    #allocation3 [shape = 's32[1]{0}', space=sflag, size = 0x4, scoped, tag = 'scoped memory for cnnlstm_forward.3']
    %13 = vsyncpa [#allocation3], 0
    // Predicated region
    $region2: #{cnnlstm_forward.3} parent=1 // pred_check
      _
    $region3: #{cnnlstm_forward.3} parent=1 // pred_check_branch
      %15 = sbr.rel (0) target = $region5
    $region4: #{cnnlstm_forward.3} parent=1 // pred_region
      _
    $region5: #{cnnlstm_forward.3} parent=1 // pred_fallthru
      _
    // Predicated region
    $region6: #{cnnlstm_forward.3} parent=1 // pred_check
      _
    $region7: #{cnnlstm_forward.3} parent=1 // pred_check_branch
      %17 = sbr.rel (0) target = $region9
    $region8: #{cnnlstm_forward.3} parent=1 // pred_region
      _
    $region9: #{cnnlstm_forward.3} parent=1 // pred_fallthru
      _
    // Predicated region
    $region10: #{cnnlstm_forward.3} parent=1 // pred_check
      _
    $region11: #{cnnlstm_forward.3} parent=1 // pred_check_branch
      %19 = sbr.rel (0) target = $region13
    $region12: #{cnnlstm_forward.3} parent=1 // pred_region
      _
    $region13: #{cnnlstm_forward.3} parent=1 // pred_fallthru
      _
    // Predicated region
    $region14: #{cnnlstm_forward.3} parent=1 // pred_check
      _
    $region15: #{cnnlstm_forward.3} parent=1 // pred_check_branch
      %21 = sbr.rel (0) target = $region17
    $region16: #{cnnlstm_forward.3} parent=1 // pred_region
      _
    $region17: #{cnnlstm_forward.3} parent=1 // pred_fallthru
      _
    // Predicated region
    $region18: #{cnnlstm_forward.3} parent=1 // pred_check
      _
    $region19: #{cnnlstm_forward.3} parent=1 // pred_check_branch
      %23 = sbr.rel (0) target = $region21
    $region20: #{cnnlstm_forward.3} parent=1 // pred_region
      _
    $region21: #{cnnlstm_forward.3} parent=1 // pred_fallthru
      _
    // Predicated region
    $region22: #{cnnlstm_forward.3} parent=1 // pred_check
      _
    $region23: #{cnnlstm_forward.3} parent=1 // pred_check_branch
      %25 = sbr.rel (0) target = $region25
    $region24: #{cnnlstm_forward.3} parent=1 // pred_region
      _
    $region25: #{cnnlstm_forward.3} parent=1 // pred_fallthru
      _
    // Predicated region
    $region26: #{cnnlstm_forward.3} parent=1 // pred_check
      _
    $region27: #{cnnlstm_forward.3} parent=1 // pred_check_branch
      %27 = sbr.rel (0) target = $region29
    $region28: #{cnnlstm_forward.3} parent=1 // pred_region
      _
    $region29: #{cnnlstm_forward.3} parent=1 // pred_fallthru
      _
    // Predicated region
    $region30: #{cnnlstm_forward.3} parent=1 // pred_check
      _
    $region31: #{cnnlstm_forward.3} parent=1 // pred_check_branch
      %29 = sbr.rel (0) target = $region33
    $region32: #{cnnlstm_forward.3} parent=1 // pred_region
      _
    $region33: #{cnnlstm_forward.3} parent=1 // pred_fallthru
      _
    %v30 = vld [vmem:[%s0] sm:$0xff]
    %v31 = vld [vmem:[%s0 + $0x8] sm:$0xff]
    %v32 = vld [vmem:[%s0 + $0x10] sm:$0xff]
    %vm35 = vcmask 1046528
    %v36 = vrot.slane %v30, 1
    %v37 = vrot.slane %v31, 1
    %v38 = vsel %vm35, %v36, %v37
    %39 = vrot.lane.b32.xlu0 %v38, 32
    %v40 = vpop.permute.xlu0 %39
    %41 = vrot.lane.b32.xlu0 %v37, 32
    %v42 = vpop.permute.xlu0 %41
    %vm45 = vcmask 1045504
    %v46 = vrot.slane %v30, 2
    %v47 = vrot.slane %v31, 2
    %v48 = vsel %vm45, %v46, %v47
    %49 = vrot.lane.b32.xlu0 %v48, 64
    %v50 = vpop.permute.xlu0 %49
    %51 = vrot.lane.b32.xlu0 %v47, 64
    %v52 = vpop.permute.xlu0 %51
    %vm55 = vcmask 261120
    %v56 = vsel %vm55, %v30, %v40
    %v57 = vsel %vm55, %v31, %v42
    %vm58 = vcmask 523264
    %v59 = vsel %vm58, %v56, %v50
    %v60 = vsel %vm58, %v57, %v52
    %v62 = vrot.slane %v32, 1
    %v63 = vsel %vm35, %v37, %v62
    %64 = vrot.lane.b32.xlu0 %v63, 32
    %v65 = vpop.permute.xlu0 %64
    %66 = vrot.lane.b32.xlu0 %v62, 32
    %v67 = vpop.permute.xlu0 %66
    %v70 = vrot.slane %v32, 2
    %v71 = vsel %vm45, %v47, %v70
    %72 = vrot.lane.b32.xlu0 %v71, 64
    %v73 = vpop.permute.xlu0 %72
    %74 = vrot.lane.b32.xlu0 %v70, 64
    %v75 = vpop.permute.xlu0 %74
    %v78 = vsel %vm55, %v31, %v65
    %v79 = vsel %vm55, %v32, %v67
    %v80 = vsel %vm58, %v78, %v73
    %v81 = vsel %vm58, %v79, %v75
    %v84 = vrot.slane %v59, 1
    %v85 = vrot.slane %v60, 1
    %v86 = vsel %vm35, %v84, %v85
    %vm89 = vcmask 1042432
    %v90 = vrot.slane %v80, 5
    %v91 = vrot.slane %v81, 5
    %v92 = vsel %vm89, %v90, %v91
    %v93 = vld [vmem:[%s1] sm:$0xff]
    %v94 = vld [vmem:[%s1 + $0x8] sm:$0xff]
    %v95 = vld [vmem:[%s1 + $0x10] sm:$0xff]
    %v96 = vld [vmem:[%s1 + $0x18] sm:$0xff]
    %v97 = vld [vmem:[%s1 + $0x20] sm:$0xff]
    %v98 = vld [vmem:[%s1 + $0x28] sm:$0xff]
    %v99 = vld [vmem:[%s1 + $0x30] sm:$0xff]
    %v100 = vld [vmem:[%s1 + $0x38] sm:$0xff]
    %v101 = vld [vmem:[%s1 + $0x40] sm:$0xff]
    %v102 = vld [vmem:[%s1 + $0x48] sm:$0xff]
    %v103 = vld [vmem:[%s1 + $0x50] sm:$0xff]
    %v104 = vld [vmem:[%s1 + $0x58] sm:$0xff]
    %vm105 = vcmask 785408
    %v106 = vsel %vm105, %v86, 0
    %v108 = vsel %vm105, %v92, 0
    %110 = vmatprep.subr.mxu0 0.0
    %111 = vmatpush1.msra.mxu0 0.0
    %112 = vmatprep.subr.mxu0 0.0
    %113 = vmatpush1.msra.mxu0 0.0
    %114 = vmatprep.subr.mxu0 0.0
    %115 = vmatpush1.msra.mxu0 0.0
    %116 = vmatprep.subr.mxu0 0.0
    %117 = vmatpush1.msra.mxu0 0.0
    %118 = vmatprep.subr.mxu0 0.0
    %119 = vmatpush1.msra.mxu0 %v104
    %120 = vmatprep.subr.mxu0 0.0
    %121 = vmatpush1.msra.mxu0 %v103
    %122 = vmatprep.subr.mxu0 0.0
    %123 = vmatpush1.msra.mxu0 %v102
    %124 = vmatprep.subr.mxu0 0.0
    %125 = vmatpush1.msra.mxu0 %v101
    %126 = vmatprep.subr.mxu0 0.0
    %127 = vmatpush1.msra.mxu0 %v100
    %128 = vmatprep.subr.mxu0 0.0
    %129 = vmatpush1.msra.mxu0 %v99
    %130 = vmatprep.subr.mxu0 0.0
    %131 = vmatpush1.msra.mxu0 %v98
    %132 = vmatprep.subr.mxu0 0.0
    %133 = vmatpush1.msra.mxu0 %v97
    %134 = vmatprep.subr.mxu0 0.0
    %135 = vmatpush1.msra.mxu0 %v96
    %136 = vmatprep.subr.mxu0 0.0
    %137 = vmatpush1.msra.mxu0 %v95
    %138 = vmatprep.subr.mxu0 0.0
    %139 = vmatpush1.msra.mxu0 %v94
    %140 = vmatprep.subr.mxu0 0.0
    %141 = vmatpush1.msra.mxu0 %v93
    %142 = vmatprep.subr.mxu0 0.0
    %143 = vmatpush2.msra.mxu0 0.0
    %144 = vmatprep.subr.mxu0 0.0
    %145 = vmatpush2.msra.mxu0 0.0
    %146 = vmatprep.subr.mxu0 0.0
    %147 = vmatpush2.msra.mxu0 0.0
    %148 = vmatprep.subr.mxu0 0.0
    %149 = vmatpush2.msra.mxu0 0.0
    %150 = vmatprep.subr.mxu0 0.0
    %151 = vmatpush2.msra.mxu0 0.0
    %152 = vmatprep.subr.mxu0 0.0
    %153 = vmatpush2.msra.mxu0 0.0
    %154 = vmatprep.subr.mxu0 0.0
    %155 = vmatpush2.msra.mxu0 0.0
    %156 = vmatprep.subr.mxu0 0.0
    %157 = vmatpush2.msra.mxu0 0.0
    %158 = vmatprep.subr.mxu0 0.0
    %159 = vmatpush2.msra.mxu0 0.0
    %160 = vmatprep.subr.mxu0 0.0
    %161 = vmatpush2.msra.mxu0 0.0
    %162 = vmatprep.subr.mxu0 0.0
    %163 = vmatpush2.msra.mxu0 0.0
    %164 = vmatprep.subr.mxu0 0.0
    %165 = vmatpush2.msra.mxu0 0.0
    %166 = vmatprep.subr.mxu0 0.0
    %167 = vmatpush2.msra.mxu0 0.0
    %168 = vmatprep.subr.mxu0 0.0
    %169 = vmatpush2.msra.mxu0 0.0
    %170 = vmatprep.subr.mxu0 0.0
    %171 = vmatpush2.msra.mxu0 0.0
    %172 = vmatprep.subr.mxu0 0.0
    %173 = vmatpush2.msra.mxu0 0.0
    %174 = vmatprep.mubr.f32.mxu0 0.0
    %175 = vmatmul.mubr.f32.gmra.mxu0 %v106
    %v176 = vpop.f32.mrf.mxu0
    %v177 = vadd.f32 0.0, %v176
    %v178 = vpop.f32.mrf.mxu0
    %179 = vmatprep.mubr.f32.mxu0 0.0
    %180 = vmatmul.mubr.f32.gmra.mxu0 %v108
    %v181 = vpop.f32.mrf.mxu0
    %v182 = vadd.f32 0.0, %v181
    %v183 = vpop.f32.mrf.mxu0
    %184 = vdwg.mxu0
    %v185 = vmax.f32 %v177, 0.0
    %v186 = vmax.f32 %v182, 0.0
    %vm187 = vcmask 64512
    %v188 = vsel %vm187, %v185, -inf
    %v189 = vrot.slane %v188, 4
    %v190 = vmax.f32 %v188, %v189
    %v191 = vrot.slane %v190, 2
    %v192 = vmax.f32 %v190, %v191
    %v193 = vrot.slane %v192, 1
    %v194 = vmax.f32 %v192, %v193
    %v195 = vsel %vm187, %v186, -inf
    %v196 = vrot.slane %v195, 4
    %v197 = vmax.f32 %v195, %v196
    %v198 = vrot.slane %v197, 2
    %v199 = vmax.f32 %v197, %v198
    %v200 = vrot.slane %v199, 1
    %v201 = vmax.f32 %v199, %v200
    %vm202 = vcmask 1044480
    %v203 = vrot.slane %v30, 3
    %v204 = vrot.slane %v31, 3
    %v205 = vsel %vm202, %v203, %v204
    %206 = vrot.lane.b32.xlu0 %v205, 96
    %v207 = vpop.permute.xlu0 %206
    %208 = vrot.lane.b32.xlu0 %v204, 96
    %v209 = vpop.permute.xlu0 %208
    %v212 = vsel %vm105, %v59, %v207
    %v213 = vsel %vm105, %v60, %v209
    %v214 = vrot.slane %v32, 3
    %v215 = vsel %vm202, %v204, %v214
    %216 = vrot.lane.b32.xlu0 %v215, 96
    %v217 = vpop.permute.xlu0 %216
    %218 = vrot.lane.b32.xlu0 %v214, 96
    %v219 = vpop.permute.xlu0 %218
    %v222 = vsel %vm105, %v80, %v217
    %v223 = vsel %vm105, %v81, %v219
    %v226 = vrot.slane %v222, 3
    %v227 = vrot.slane %v223, 3
    %v228 = vsel %vm202, %v226, %v227
    %vm231 = vcmask 1040384
    %v232 = vsel %vm231, %v213, %v228
    %v233 = vld [vmem:[%s2] sm:$0xff]
    %v234 = vld [vmem:[%s2 + $0x8] sm:$0xff]
    %v235 = vld [vmem:[%s2 + $0x10] sm:$0xff]
    %v236 = vld [vmem:[%s2 + $0x18] sm:$0xff]
    %v237 = vld [vmem:[%s2 + $0x20] sm:$0xff]
    %v238 = vld [vmem:[%s2 + $0x28] sm:$0xff]
    %v239 = vld [vmem:[%s2 + $0x30] sm:$0xff]
    %v240 = vld [vmem:[%s2 + $0x38] sm:$0xff]
    %v241 = vld [vmem:[%s2 + $0x40] sm:$0xff]
    %v242 = vld [vmem:[%s2 + $0x48] sm:$0xff]
    %v243 = vld [vmem:[%s2 + $0x50] sm:$0xff]
    %v244 = vld [vmem:[%s2 + $0x58] sm:$0xff]
    %v245 = vld [vmem:[%s2 + $0x60] sm:$0xff]
    %v246 = vld [vmem:[%s2 + $0x68] sm:$0xff]
    %v247 = vld [vmem:[%s2 + $0x70] sm:$0xff]
    %v248 = vld [vmem:[%s2 + $0x78] sm:$0xff]
    %249 = vmatprep.subr.mxu0 0.0
    %250 = vmatpush1.msra.mxu0 %v248
    %251 = vmatprep.subr.mxu0 0.0
    %252 = vmatpush1.msra.mxu0 %v247
    %253 = vmatprep.subr.mxu0 0.0
    %254 = vmatpush1.msra.mxu0 %v246
    %255 = vmatprep.subr.mxu0 0.0
    %256 = vmatpush1.msra.mxu0 %v245
    %257 = vmatprep.subr.mxu0 0.0
    %258 = vmatpush1.msra.mxu0 %v244
    %259 = vmatprep.subr.mxu0 0.0
    %260 = vmatpush1.msra.mxu0 %v243
    %261 = vmatprep.subr.mxu0 0.0
    %262 = vmatpush1.msra.mxu0 %v242
    %263 = vmatprep.subr.mxu0 0.0
    %264 = vmatpush1.msra.mxu0 %v241
    %265 = vmatprep.subr.mxu0 0.0
    %266 = vmatpush1.msra.mxu0 %v240
    %267 = vmatprep.subr.mxu0 0.0
    %268 = vmatpush1.msra.mxu0 %v239
    %269 = vmatprep.subr.mxu0 0.0
    %270 = vmatpush1.msra.mxu0 %v238
    %271 = vmatprep.subr.mxu0 0.0
    %272 = vmatpush1.msra.mxu0 %v237
    %273 = vmatprep.subr.mxu0 0.0
    %274 = vmatpush1.msra.mxu0 %v236
    %275 = vmatprep.subr.mxu0 0.0
    %276 = vmatpush1.msra.mxu0 %v235
    %277 = vmatprep.subr.mxu0 0.0
    %278 = vmatpush1.msra.mxu0 %v234
    %279 = vmatprep.subr.mxu0 0.0
    %280 = vmatpush1.msra.mxu0 %v233
    %281 = vmatprep.subr.mxu0 0.0
    %282 = vmatpush2.msra.mxu0 0.0
    %283 = vmatprep.subr.mxu0 0.0
    %284 = vmatpush2.msra.mxu0 0.0
    %285 = vmatprep.subr.mxu0 0.0
    %286 = vmatpush2.msra.mxu0 0.0
    %287 = vmatprep.subr.mxu0 0.0
    %288 = vmatpush2.msra.mxu0 0.0
    %289 = vmatprep.subr.mxu0 0.0
    %290 = vmatpush2.msra.mxu0 0.0
    %291 = vmatprep.subr.mxu0 0.0
    %292 = vmatpush2.msra.mxu0 0.0
    %293 = vmatprep.subr.mxu0 0.0
    %294 = vmatpush2.msra.mxu0 0.0
    %295 = vmatprep.subr.mxu0 0.0
    %296 = vmatpush2.msra.mxu0 0.0
    %297 = vmatprep.subr.mxu0 0.0
    %298 = vmatpush2.msra.mxu0 0.0
    %299 = vmatprep.subr.mxu0 0.0
    %300 = vmatpush2.msra.mxu0 0.0
    %301 = vmatprep.subr.mxu0 0.0
    %302 = vmatpush2.msra.mxu0 0.0
    %303 = vmatprep.subr.mxu0 0.0
    %304 = vmatpush2.msra.mxu0 0.0
    %305 = vmatprep.subr.mxu0 0.0
    %306 = vmatpush2.msra.mxu0 0.0
    %307 = vmatprep.subr.mxu0 0.0
    %308 = vmatpush2.msra.mxu0 0.0
    %309 = vmatprep.subr.mxu0 0.0
    %310 = vmatpush2.msra.mxu0 0.0
    %311 = vmatprep.subr.mxu0 0.0
    %312 = vmatpush2.msra.mxu0 0.0
    %313 = vmatprep.mubr.f32.mxu0 0.0
    %314 = vmatmul.mubr.f32.gmra.mxu0 %v212
    %v315 = vpop.f32.mrf.mxu0
    %v316 = vadd.f32 0.0, %v315
    %v317 = vpop.f32.mrf.mxu0
    %318 = vmatprep.mubr.f32.mxu0 0.0
    %319 = vmatmul.mubr.f32.gmra.mxu0 %v232
    %v320 = vpop.f32.mrf.mxu0
    %v321 = vadd.f32 0.0, %v320
    %v322 = vpop.f32.mrf.mxu0
    %323 = vmatprep.mubr.f32.mxu0 0.0
    %324 = vmatmul.mubr.f32.gmra.mxu0 %v227
    %v325 = vpop.f32.mrf.mxu0
    %v326 = vadd.f32 0.0, %v325
    %v327 = vpop.f32.mrf.mxu0
    %328 = vdwg.mxu0
    %v329 = vmax.f32 %v316, 0.0
    %v330 = vmax.f32 %v321, 0.0
    %v331 = vmax.f32 %v326, 0.0
    %v332 = vsel %vm187, %v329, -inf
    %vm333 = vcmask 57344
    %v334 = vsel %vm333, %v330, -inf
    %v335 = vmax.f32 %v332, %v334
    %v336 = vrot.slane %v335, 4
    %v337 = vmax.f32 %v335, %v336
    %v338 = vrot.slane %v337, 2
    %v339 = vmax.f32 %v337, %v338
    %v340 = vrot.slane %v339, 1
    %v341 = vmax.f32 %v339, %v340
    %vm342 = vcmask 64513
    %v343 = vsel %vm342, %v330, -inf
    %vm344 = vcmask 58368
    %v345 = vsel %vm344, %v331, -inf
    %v346 = vmax.f32 %v343, %v345
    %v347 = vrot.slane %v346, 4
    %v348 = vmax.f32 %v346, %v347
    %v349 = vrot.slane %v348, 2
    %v350 = vmax.f32 %v348, %v349
    %v351 = vrot.slane %v350, 1
    %v352 = vmax.f32 %v350, %v351
    %vm353 = vcmask 1043456
    %v354 = vrot.slane %v30, 4
    %v355 = vrot.slane %v31, 4
    %v356 = vsel %vm353, %v354, %v355
    %v357 = vrot.slane %v32, 4
    %v358 = vrot.slane %v222, 4
    %v359 = vrot.slane %v223, 4
    %v360 = vsel %vm353, %v358, %v359
    %v361 = vrot.slane %v357, 4
    %v362 = vsel %vm353, %v361, %v361
    %v364 = vld [vmem:[%s3] sm:$0xff]
    %v365 = vld [vmem:[%s3 + $0x8] sm:$0xff]
    %v366 = vld [vmem:[%s3 + $0x10] sm:$0xff]
    %v367 = vld [vmem:[%s3 + $0x18] sm:$0xff]
    %v368 = vld [vmem:[%s3 + $0x20] sm:$0xff]
    %v369 = vld [vmem:[%s3 + $0x28] sm:$0xff]
    %v370 = vld [vmem:[%s3 + $0x30] sm:$0xff]
    %v371 = vld [vmem:[%s3 + $0x38] sm:$0xff]
    %v372 = vld [vmem:[%s3 + $0x40] sm:$0xff]
    %v373 = vld [vmem:[%s3 + $0x48] sm:$0xff]
    %v374 = vld [vmem:[%s3 + $0x50] sm:$0xff]
    %v375 = vld [vmem:[%s3 + $0x58] sm:$0xff]
    %v376 = vld [vmem:[%s3 + $0x60] sm:$0xff]
    %v377 = vld [vmem:[%s3 + $0x68] sm:$0xff]
    %v378 = vld [vmem:[%s3 + $0x70] sm:$0xff]
    %v379 = vld [vmem:[%s3 + $0x78] sm:$0xff]
    %v380 = vld [vmem:[%s3 + $0x80] sm:$0xff]
    %v381 = vld [vmem:[%s3 + $0x88] sm:$0xff]
    %v382 = vld [vmem:[%s3 + $0x90] sm:$0xff]
    %v383 = vld [vmem:[%s3 + $0x98] sm:$0xff]
    %v384 = vsel %vm55, %v356, 0
    %v386 = vsel %vm55, %v362, 0
    %388 = vmatprep.subr.mxu0 0.0
    %389 = vmatpush1.msra.mxu0 %v379
    %390 = vmatprep.subr.mxu0 0.0
    %391 = vmatpush1.msra.mxu0 %v378
    %392 = vmatprep.subr.mxu0 0.0
    %393 = vmatpush1.msra.mxu0 %v377
    %394 = vmatprep.subr.mxu0 0.0
    %395 = vmatpush1.msra.mxu0 %v376
    %396 = vmatprep.subr.mxu0 0.0
    %397 = vmatpush1.msra.mxu0 %v375
    %398 = vmatprep.subr.mxu0 0.0
    %399 = vmatpush1.msra.mxu0 %v374
    %400 = vmatprep.subr.mxu0 0.0
    %401 = vmatpush1.msra.mxu0 %v373
    %402 = vmatprep.subr.mxu0 0.0
    %403 = vmatpush1.msra.mxu0 %v372
    %404 = vmatprep.subr.mxu0 0.0
    %405 = vmatpush1.msra.mxu0 %v371
    %406 = vmatprep.subr.mxu0 0.0
    %407 = vmatpush1.msra.mxu0 %v370
    %408 = vmatprep.subr.mxu0 0.0
    %409 = vmatpush1.msra.mxu0 %v369
    %410 = vmatprep.subr.mxu0 0.0
    %411 = vmatpush1.msra.mxu0 %v368
    %412 = vmatprep.subr.mxu0 0.0
    %413 = vmatpush1.msra.mxu0 %v367
    %414 = vmatprep.subr.mxu0 0.0
    %415 = vmatpush1.msra.mxu0 %v366
    %416 = vmatprep.subr.mxu0 0.0
    %417 = vmatpush1.msra.mxu0 %v365
    %418 = vmatprep.subr.mxu0 0.0
    %419 = vmatpush1.msra.mxu0 %v364
    %420 = vmatprep.subr.mxu0 0.0
    %421 = vmatpush2.msra.mxu0 0.0
    %422 = vmatprep.subr.mxu0 0.0
    %423 = vmatpush2.msra.mxu0 0.0
    %424 = vmatprep.subr.mxu0 0.0
    %425 = vmatpush2.msra.mxu0 0.0
    %426 = vmatprep.subr.mxu0 0.0
    %427 = vmatpush2.msra.mxu0 0.0
    %428 = vmatprep.subr.mxu0 0.0
    %429 = vmatpush2.msra.mxu0 0.0
    %430 = vmatprep.subr.mxu0 0.0
    %431 = vmatpush2.msra.mxu0 0.0
    %432 = vmatprep.subr.mxu0 0.0
    %433 = vmatpush2.msra.mxu0 0.0
    %434 = vmatprep.subr.mxu0 0.0
    %435 = vmatpush2.msra.mxu0 0.0
    %436 = vmatprep.subr.mxu0 0.0
    %437 = vmatpush2.msra.mxu0 0.0
    %438 = vmatprep.subr.mxu0 0.0
    %439 = vmatpush2.msra.mxu0 0.0
    %440 = vmatprep.subr.mxu0 0.0
    %441 = vmatpush2.msra.mxu0 0.0
    %442 = vmatprep.subr.mxu0 0.0
    %443 = vmatpush2.msra.mxu0 0.0
    %444 = vmatprep.subr.mxu0 0.0
    %445 = vmatpush2.msra.mxu0 %v383
    %446 = vmatprep.subr.mxu0 0.0
    %447 = vmatpush2.msra.mxu0 %v382
    %448 = vmatprep.subr.mxu0 0.0
    %449 = vmatpush2.msra.mxu0 %v381
    %450 = vmatprep.subr.mxu0 0.0
    %451 = vmatpush2.msra.mxu0 %v380
    %452 = vmatprep.mubr.f32.mxu0 %v384
    %453 = vmatmul.mubr.f32.gmra.mxu0 %v212
    %v454 = vpop.f32.mrf.mxu0
    %v455 = vadd.f32 0.0, %v454
    %v456 = vpop.f32.mrf.mxu0
    %457 = vmatprep.mubr.f32.mxu0 %v386
    %458 = vmatmul.mubr.f32.gmra.mxu0 %v360
    %v459 = vpop.f32.mrf.mxu0
    %v460 = vadd.f32 0.0, %v459
    %v461 = vpop.f32.mrf.mxu0
    %462 = vdwg.mxu0
    %v463 = vmax.f32 %v455, 0.0
    %v464 = vmax.f32 %v460, 0.0
    %v465 = vsel %vm187, %v463, -inf
    %v466 = vrot.slane %v465, 4
    %v467 = vmax.f32 %v465, %v466
    %v468 = vrot.slane %v467, 2
    %v469 = vmax.f32 %v467, %v468
    %v470 = vrot.slane %v469, 1
    %v471 = vmax.f32 %v469, %v470
    %v472 = vsel %vm187, %v464, -inf
    %v473 = vrot.slane %v472, 4
    %v474 = vmax.f32 %v472, %v473
    %v475 = vrot.slane %v474, 2
    %v476 = vmax.f32 %v474, %v475
    %v477 = vrot.slane %v476, 1
    %v478 = vmax.f32 %v476, %v477
    %480 = vrot.lane.b32.xlu0 %v341, 8
    %v481 = vpop.permute.xlu0 %480
    %484 = vrot.lane.b32.xlu0 %v471, 16
    %v485 = vpop.permute.xlu0 %484
    %v487 = vsel %vm187, %v194, %v481
    %vm488 = vcmask 130048
    %v489 = vsel %vm488, %v487, %v485
    %491 = vrot.lane.b32.xlu0 %v352, 8
    %v492 = vpop.permute.xlu0 %491
    %495 = vrot.lane.b32.xlu0 %v478, 16
    %v496 = vpop.permute.xlu0 %495
    %v498 = vsel %vm187, %v201, %v492
    %v499 = vsel %vm488, %v498, %v496
    %v501 = vrot.slane %v499, 7
    %v503 = vsel %vm231, %v489, %v501
    %v504 = vld [vmem:[%s4] sm:$0xff]
    %v505 = vld [vmem:[%s4 + $0x8] sm:$0xff]
    %v506 = vld [vmem:[%s4 + $0x10] sm:$0xff]
    %v507 = vld [vmem:[%s5] sm:$0x1]
    %v509 = vlaneseq
    %v510 = vshrl.u32 %v509, 7
    %v511 = vsub.s32 0, %v510
    %v512 = vrot.slane %v507, %v511
    %vm514 = vcmask 195584
    %v516 = vsel %vm514, %v503, 0
    %518 = vmatprep.subr.mxu0 0.0
    %519 = vmatpush1.msra.mxu0 0.0
    %520 = vmatprep.subr.mxu0 0.0
    %521 = vmatpush1.msra.mxu0 0.0
    %522 = vmatprep.subr.mxu0 0.0
    %523 = vmatpush1.msra.mxu0 0.0
    %524 = vmatprep.subr.mxu0 0.0
    %525 = vmatpush1.msra.mxu0 0.0
    %526 = vmatprep.subr.mxu0 0.0
    %527 = vmatpush1.msra.mxu0 0.0
    %528 = vmatprep.subr.mxu0 0.0
    %529 = vmatpush1.msra.mxu0 0.0
    %530 = vmatprep.subr.mxu0 0.0
    %531 = vmatpush1.msra.mxu0 0.0
    %532 = vmatprep.subr.mxu0 0.0
    %533 = vmatpush1.msra.mxu0 0.0
    %534 = vmatprep.subr.mxu0 0.0
    %535 = vmatpush1.msra.mxu0 0.0
    %536 = vmatprep.subr.mxu0 0.0
    %537 = vmatpush1.msra.mxu0 0.0
    %538 = vmatprep.subr.mxu0 0.0
    %539 = vmatpush1.msra.mxu0 0.0
    %540 = vmatprep.subr.mxu0 0.0
    %541 = vmatpush1.msra.mxu0 0.0
    %542 = vmatprep.subr.mxu0 0.0
    %543 = vmatpush1.msra.mxu0 0.0
    %544 = vmatprep.subr.mxu0 0.0
    %545 = vmatpush1.msra.mxu0 %v506
    %546 = vmatprep.subr.mxu0 0.0
    %547 = vmatpush1.msra.mxu0 %v505
    %548 = vmatprep.subr.mxu0 0.0
    %549 = vmatpush1.msra.mxu0 %v504
    %550 = vmatprep.subr.mxu0 0.0
    %551 = vmatpush2.msra.mxu0 0.0
    %552 = vmatprep.subr.mxu0 0.0
    %553 = vmatpush2.msra.mxu0 0.0
    %554 = vmatprep.subr.mxu0 0.0
    %555 = vmatpush2.msra.mxu0 0.0
    %556 = vmatprep.subr.mxu0 0.0
    %557 = vmatpush2.msra.mxu0 0.0
    %558 = vmatprep.subr.mxu0 0.0
    %559 = vmatpush2.msra.mxu0 0.0
    %560 = vmatprep.subr.mxu0 0.0
    %561 = vmatpush2.msra.mxu0 0.0
    %562 = vmatprep.subr.mxu0 0.0
    %563 = vmatpush2.msra.mxu0 0.0
    %564 = vmatprep.subr.mxu0 0.0
    %565 = vmatpush2.msra.mxu0 0.0
    %566 = vmatprep.subr.mxu0 0.0
    %567 = vmatpush2.msra.mxu0 0.0
    %568 = vmatprep.subr.mxu0 0.0
    %569 = vmatpush2.msra.mxu0 0.0
    %570 = vmatprep.subr.mxu0 0.0
    %571 = vmatpush2.msra.mxu0 0.0
    %572 = vmatprep.subr.mxu0 0.0
    %573 = vmatpush2.msra.mxu0 0.0
    %574 = vmatprep.subr.mxu0 0.0
    %575 = vmatpush2.msra.mxu0 0.0
    %576 = vmatprep.subr.mxu0 0.0
    %577 = vmatpush2.msra.mxu0 0.0
    %578 = vmatprep.subr.mxu0 0.0
    %579 = vmatpush2.msra.mxu0 0.0
    %580 = vmatprep.subr.mxu0 0.0
    %581 = vmatpush2.msra.mxu0 0.0
    %582 = vmatprep.mubr.f32.mxu0 0.0
    %583 = vmatmul.mubr.f32.gmra.mxu0 %v516
    %v584 = vpop.f32.mrf.mxu0
    %v585 = vadd.f32 %v512, %v584
    %v586 = vpop.f32.mrf.mxu0
    %587 = vdwg.mxu0
    %v588 = vld [vmem:[%s6] sm:$0xff]
    %v589 = vld [vmem:[%s6 + $0x8] sm:$0xff]
    %v590 = vld [vmem:[%s6 + $0x10] sm:$0xff]
    %v591 = vld [vmem:[%s6 + $0x18] sm:$0xff]
    %v592 = vld [vmem:[%s7] sm:$0x1]
    %v594 = vlaneseq
    %v595 = vshrl.u32 %v594, 7
    %v596 = vsub.s32 0, %v595
    %v597 = vrot.slane %v592, %v596
    %v600 = vsel %vm55, %v585, 0
    %602 = vmatprep.subr.mxu0 0.0
    %603 = vmatpush1.msra.mxu0 0.0
    %604 = vmatprep.subr.mxu0 0.0
    %605 = vmatpush1.msra.mxu0 0.0
    %606 = vmatprep.subr.mxu0 0.0
    %607 = vmatpush1.msra.mxu0 0.0
    %608 = vmatprep.subr.mxu0 0.0
    %609 = vmatpush1.msra.mxu0 0.0
    %610 = vmatprep.subr.mxu0 0.0
    %611 = vmatpush1.msra.mxu0 0.0
    %612 = vmatprep.subr.mxu0 0.0
    %613 = vmatpush1.msra.mxu0 0.0
    %614 = vmatprep.subr.mxu0 0.0
    %615 = vmatpush1.msra.mxu0 0.0
    %616 = vmatprep.subr.mxu0 0.0
    %617 = vmatpush1.msra.mxu0 0.0
    %618 = vmatprep.subr.mxu0 0.0
    %619 = vmatpush1.msra.mxu0 0.0
    %620 = vmatprep.subr.mxu0 0.0
    %621 = vmatpush1.msra.mxu0 0.0
    %622 = vmatprep.subr.mxu0 0.0
    %623 = vmatpush1.msra.mxu0 0.0
    %624 = vmatprep.subr.mxu0 0.0
    %625 = vmatpush1.msra.mxu0 0.0
    %626 = vmatprep.subr.mxu0 0.0
    %627 = vmatpush1.msra.mxu0 %v591
    %628 = vmatprep.subr.mxu0 0.0
    %629 = vmatpush1.msra.mxu0 %v590
    %630 = vmatprep.subr.mxu0 0.0
    %631 = vmatpush1.msra.mxu0 %v589
    %632 = vmatprep.subr.mxu0 0.0
    %633 = vmatpush1.msra.mxu0 %v588
    %634 = vmatprep.subr.mxu0 0.0
    %635 = vmatpush2.msra.mxu0 0.0
    %636 = vmatprep.subr.mxu0 0.0
    %637 = vmatpush2.msra.mxu0 0.0
    %638 = vmatprep.subr.mxu0 0.0
    %639 = vmatpush2.msra.mxu0 0.0
    %640 = vmatprep.subr.mxu0 0.0
    %641 = vmatpush2.msra.mxu0 0.0
    %642 = vmatprep.subr.mxu0 0.0
    %643 = vmatpush2.msra.mxu0 0.0
    %644 = vmatprep.subr.mxu0 0.0
    %645 = vmatpush2.msra.mxu0 0.0
    %646 = vmatprep.subr.mxu0 0.0
    %647 = vmatpush2.msra.mxu0 0.0
    %648 = vmatprep.subr.mxu0 0.0
    %649 = vmatpush2.msra.mxu0 0.0
    %650 = vmatprep.subr.mxu0 0.0
    %651 = vmatpush2.msra.mxu0 0.0
    %652 = vmatprep.subr.mxu0 0.0
    %653 = vmatpush2.msra.mxu0 0.0
    %654 = vmatprep.subr.mxu0 0.0
    %655 = vmatpush2.msra.mxu0 0.0
    %656 = vmatprep.subr.mxu0 0.0
    %657 = vmatpush2.msra.mxu0 0.0
    %658 = vmatprep.subr.mxu0 0.0
    %659 = vmatpush2.msra.mxu0 0.0
    %660 = vmatprep.subr.mxu0 0.0
    %661 = vmatpush2.msra.mxu0 0.0
    %662 = vmatprep.subr.mxu0 0.0
    %663 = vmatpush2.msra.mxu0 0.0
    %664 = vmatprep.subr.mxu0 0.0
    %665 = vmatpush2.msra.mxu0 0.0
    %666 = vmatprep.mubr.f32.mxu0 0.0
    %667 = vmatmul.mubr.f32.gmra.mxu0 %v600
    %v668 = vpop.f32.mrf.mxu0
    %v669 = vadd.f32 %v597, %v668
    %v670 = vpop.f32.mrf.mxu0
    %671 = vdwg.mxu0
    %vm672 = vcmask 33792
    %673 = vst.msk [vmem:[#allocation2] sm:$0x3] %vm672, %v669
    // Predicated region
    $region34: #{cnnlstm_forward.3} parent=1 // pred_check
      _
    $region35: #{cnnlstm_forward.3} parent=1 // pred_check_branch
      %675 = sbr.rel (0) target = $region37
    $region36: #{cnnlstm_forward.3} parent=1 // pred_region
      %s677 = ssub.s32 32, 32
      %678 = vsyncadd [#allocation3], %s677
      %s680 = sshll.u32 [#allocation2], 4
      %s681 = int_to_ptr.vmem [resolvable:$true] %s680
      %683 = dma.vmem_to_hbm [thread:$0]  %s681, 32, %s8, [#allocation3]
    $region37: #{cnnlstm_forward.3} parent=1 // pred_fallthru
      _
    // Predicated region
    $region38: #{cnnlstm_forward.3} parent=1 // pred_check
      _
    $region39: #{cnnlstm_forward.3} parent=1 // pred_check_branch
      %685 = sbr.rel (0) target = $region41
    $region40: #{cnnlstm_forward.3} parent=1 // pred_region
      %686 = dma.done [#allocation3], 32
    $region41: #{cnnlstm_forward.3} parent=1 // pred_fallthru
      _
    %687 = vsyncpa [#allocation3], 1

// kernel: cnnlstm_forward.2
$region0: #{cnnlstm_forward.2}
  #allocation0 [shape = 'u32[]', space=smem, size = 0x4, offset = 0x4, fixed_abs, tag = 'smem constant byte address 0x4 - core index']
  #allocation1 [shape = 'u32[144,128]{1,0:T(1,128)}', space=vmem, size = 0x12000, scoped, tag = 'internal scratch']
  %s0 = inlined_call_operand.vmem [shape: f32[12,16,20], index: 0, kind: input, shape index: {}]
  %s1 = inlined_call_operand.vmem [shape: f32[12,16,1], index: 1, kind: input, shape index: {}]
  %s2 = inlined_call_operand.vmem [shape: f32[2,5,20], index: 2, kind: input, shape index: {}]
  %s3 = inlined_call_operand.vmem [shape: f32[16,10], index: 3, kind: output, shape index: {}]
  %s4 = sld [smem:[#allocation0]]
  $region22: #{cnnlstm_forward.2} parent=0
    _
  %s6 = ssub.s32 1, %s4
  %s7 = scalar_select 0, %s6, %s4
  // Predicated region
  $region2: #{cnnlstm_forward.2} parent=0 // pred_check
    _
  $region3: #{cnnlstm_forward.2} parent=0 // pred_check_branch
    %9 = sbr.rel (0) target = $region5
  $region4: #{cnnlstm_forward.2} parent=0 // pred_region
    _
  $region5: #{cnnlstm_forward.2} parent=0 // pred_fallthru
    _
  // Predicated region
  $region6: #{cnnlstm_forward.2} parent=0 // pred_check
    _
  $region7: #{cnnlstm_forward.2} parent=0 // pred_check_branch
    %11 = sbr.rel (0) target = $region9
  $region8: #{cnnlstm_forward.2} parent=0 // pred_region
    _
  $region9: #{cnnlstm_forward.2} parent=0 // pred_fallthru
    _
  // Predicated region
  $region10: #{cnnlstm_forward.2} parent=0 // pred_check
    _
  $region11: #{cnnlstm_forward.2} parent=0 // pred_check_branch
    %13 = sbr.rel (0) target = $region13
  $region12: #{cnnlstm_forward.2} parent=0 // pred_region
    _
  $region13: #{cnnlstm_forward.2} parent=0 // pred_fallthru
    _
  %v14 = vld [vmem:[%s2] sm:$0x1f]
  %v15 = vld [vmem:[%s0] sm:$0xff]
  %v16 = vld [vmem:[%s0 + $0x8] sm:$0xff]
  %vm17 = vcmask 39936
  %v19 = vsel %vm17, 0.0, 0
  %vm21 = vcmask 1044480
  %v23 = vsel %vm21, %v14, 0
  %25 = vmatprep.subr.mxu0 0.0
  %26 = vmatpush1.msra.mxu0 0.0
  %27 = vmatprep.subr.mxu0 0.0
  %28 = vmatpush1.msra.mxu0 0.0
  %29 = vmatprep.subr.mxu0 0.0
  %30 = vmatpush1.msra.mxu0 0.0
  %31 = vmatprep.subr.mxu0 0.0
  %32 = vmatpush1.msra.mxu0 0.0
  %33 = vmatprep.subr.mxu0 0.0
  %34 = vmatpush1.msra.mxu0 0.0
  %35 = vmatprep.subr.mxu0 0.0
  %36 = vmatpush1.msra.mxu0 0.0
  %37 = vmatprep.subr.mxu0 0.0
  %38 = vmatpush1.msra.mxu0 0.0
  %39 = vmatprep.subr.mxu0 0.0
  %40 = vmatpush1.msra.mxu0 0.0
  %41 = vmatprep.subr.mxu0 0.0
  %42 = vmatpush1.msra.mxu0 0.0
  %43 = vmatprep.subr.mxu0 0.0
  %44 = vmatpush1.msra.mxu0 0.0
  %45 = vmatprep.subr.mxu0 0.0
  %46 = vmatpush1.msra.mxu0 0.0
  %47 = vmatprep.subr.mxu0 0.0
  %48 = vmatpush1.msra.mxu0 0.0
  %49 = vmatprep.subr.mxu0 0.0
  %50 = vmatpush1.msra.mxu0 0.0
  %51 = vmatprep.subr.mxu0 0.0
  %52 = vmatpush1.msra.mxu0 0.0
  %53 = vmatprep.subr.mxu0 0.0
  %54 = vmatpush1.msra.mxu0 0.0
  %55 = vmatprep.subr.mxu0 0.0
  %56 = vmatpush1.msra.mxu0 %v23
  %57 = vmatprep.subr.mxu0 0.0
  %58 = vmatpush2.msra.mxu0 0.0
  %59 = vmatprep.subr.mxu0 0.0
  %60 = vmatpush2.msra.mxu0 0.0
  %61 = vmatprep.subr.mxu0 0.0
  %62 = vmatpush2.msra.mxu0 0.0
  %63 = vmatprep.subr.mxu0 0.0
  %64 = vmatpush2.msra.mxu0 0.0
  %65 = vmatprep.subr.mxu0 0.0
  %66 = vmatpush2.msra.mxu0 0.0
  %67 = vmatprep.subr.mxu0 0.0
  %68 = vmatpush2.msra.mxu0 0.0
  %69 = vmatprep.subr.mxu0 0.0
  %70 = vmatpush2.msra.mxu0 0.0
  %71 = vmatprep.subr.mxu0 0.0
  %72 = vmatpush2.msra.mxu0 0.0
  %73 = vmatprep.subr.mxu0 0.0
  %74 = vmatpush2.msra.mxu0 0.0
  %75 = vmatprep.subr.mxu0 0.0
  %76 = vmatpush2.msra.mxu0 0.0
  %77 = vmatprep.subr.mxu0 0.0
  %78 = vmatpush2.msra.mxu0 0.0
  %79 = vmatprep.subr.mxu0 0.0
  %80 = vmatpush2.msra.mxu0 0.0
  %81 = vmatprep.subr.mxu0 0.0
  %82 = vmatpush2.msra.mxu0 0.0
  %83 = vmatprep.subr.mxu0 0.0
  %84 = vmatpush2.msra.mxu0 0.0
  %85 = vmatprep.subr.mxu0 0.0
  %86 = vmatpush2.msra.mxu0 0.0
  %87 = vmatprep.subr.mxu0 0.0
  %88 = vmatpush2.msra.mxu0 0.0
  %89 = vmatprep.mubr.f32.mxu0 0.0
  %90 = vmatmul.mubr.f32.gmra.mxu0 %v19
  %v91 = vpop.f32.mrf.mxu0
  %v92 = vadd.f32 0.0, %v91
  %v93 = vpop.f32.mrf.mxu0
  %94 = vmatprep.mubr.f32.mxu0 0.0
  %95 = vmatmul.mubr.f32.gmra.mxu0 %v19
  %v96 = vpop.f32.mrf.mxu0
  %v97 = vadd.f32 0.0, %v96
  %v98 = vpop.f32.mrf.mxu0
  %99 = vdwg.mxu0
  %v100 = vadd.f32 %v15, %v92
  %v101 = vadd.f32 %v16, %v97
  %v102 = vmul.f32 %v100, 0.5
  %v103 = vmul.f32 %v101, 0.5
  %v104 = vtanh.pop %v102
  %v105 = vtanh.pop %v103
  %v106 = vadd.f32 %v104, 1.0
  %v107 = vadd.f32 %v105, 1.0
  %v108 = vmul.f32 %v106, 0.5
  %v109 = vmul.f32 %v107, 0.5
  %v110 = vtanh.pop %v100
  %v111 = vtanh.pop %v101
  %v112 = vmul.f32 %v108, 0.0
  %v113 = vmul.f32 %v109, 0.0
  %116 = vrot.lane.b32.xlu0 %v110, 118
  %v117 = vpop.permute.xlu0 %116
  %118 = vrot.lane.b32.xlu0 %v111, 118
  %v119 = vpop.permute.xlu0 %118
  %v122 = vmul.f32 %v108, %v117
  %v123 = vmul.f32 %v109, %v119
  %126 = vrot.lane.b32.xlu0 %v122, 5
  %v127 = vpop.permute.xlu0 %126
  %128 = vrot.lane.b32.xlu0 %v123, 5
  %v129 = vpop.permute.xlu0 %128
  %v132 = vadd.f32 %v112, %v127
  %v133 = vadd.f32 %v113, %v129
  %v134 = vtanh.pop %v132
  %v135 = vtanh.pop %v133
  %138 = vrot.lane.b32.xlu0 %v134, 10
  %v139 = vpop.permute.xlu0 %138
  %140 = vrot.lane.b32.xlu0 %v135, 10
  %v141 = vpop.permute.xlu0 %140
  %v144 = vmul.f32 %v108, %v139
  %v145 = vmul.f32 %v109, %v141
  %v146 = vld [vmem:[%s1] sm:$0xff]
  %v147 = vld [vmem:[%s1 + $0x8] sm:$0xff]
  %149 = vset.pattern.permute.xlu0 0
  %150 = vperm.xlu0 %149, %v146
  %v151 = vpop.permute.xlu0 %150
  %154 = vset.pattern.permute.xlu0 0
  %155 = vperm.xlu0 %154, %v147
  %v156 = vpop.permute.xlu0 %155
  %v158 = vmul.f32 %v151, %v144
  %v159 = vmul.f32 %v156, %v145
  %v160 = vsub.f32 1.0, %v146
  %v161 = vsub.f32 1.0, %v147
  %163 = vset.pattern.permute.xlu0 0
  %164 = vperm.xlu0 %163, %v160
  %v165 = vpop.permute.xlu0 %164
  %168 = vset.pattern.permute.xlu0 0
  %169 = vperm.xlu0 %168, %v161
  %v170 = vpop.permute.xlu0 %169
  %v172 = vmul.f32 %v165, 0.0
  %v173 = vmul.f32 %v170, 0.0
  %v174 = vadd.f32 %v158, %v172
  %v175 = vadd.f32 %v159, %v173
  %v176 = vmul.f32 %v151, %v132
  %v177 = vmul.f32 %v156, %v133
  %v178 = vadd.f32 %v176, %v172
  %v179 = vadd.f32 %v177, %v173
  %s180 = scalar_lea.vmem %s0, 16
  %v181 = vld [vmem:[%s180] sm:$0xff]
  %v182 = vld [vmem:[%s180 + $0x8] sm:$0xff]
  %185 = vrot.lane.b32.xlu0 %v174, 113
  %v186 = vpop.permute.xlu0 %185
  %187 = vrot.lane.b32.xlu0 %v175, 113
  %v188 = vpop.permute.xlu0 %187
  %v189 = vsel %vm17, %v186, 0
  %v191 = vsel %vm17, %v188, 0
  %193 = vmatprep.subr.mxu0 0.0
  %194 = vmatpush1.msra.mxu0 0.0
  %195 = vmatprep.subr.mxu0 0.0
  %196 = vmatpush1.msra.mxu0 0.0
  %197 = vmatprep.subr.mxu0 0.0
  %198 = vmatpush1.msra.mxu0 0.0
  %199 = vmatprep.subr.mxu0 0.0
  %200 = vmatpush1.msra.mxu0 0.0
  %201 = vmatprep.subr.mxu0 0.0
  %202 = vmatpush1.msra.mxu0 0.0
  %203 = vmatprep.subr.mxu0 0.0
  %204 = vmatpush1.msra.mxu0 0.0
  %205 = vmatprep.subr.mxu0 0.0
  %206 = vmatpush1.msra.mxu0 0.0
  %207 = vmatprep.subr.mxu0 0.0
  %208 = vmatpush1.msra.mxu0 0.0
  %209 = vmatprep.subr.mxu0 0.0
  %210 = vmatpush1.msra.mxu0 0.0
  %211 = vmatprep.subr.mxu0 0.0
  %212 = vmatpush1.msra.mxu0 0.0
  %213 = vmatprep.subr.mxu0 0.0
  %214 = vmatpush1.msra.mxu0 0.0
  %215 = vmatprep.subr.mxu0 0.0
  %216 = vmatpush1.msra.mxu0 0.0
  %217 = vmatprep.subr.mxu0 0.0
  %218 = vmatpush1.msra.mxu0 0.0
  %219 = vmatprep.subr.mxu0 0.0
  %220 = vmatpush1.msra.mxu0 0.0
  %221 = vmatprep.subr.mxu0 0.0
  %222 = vmatpush1.msra.mxu0 0.0
  %223 = vmatprep.subr.mxu0 0.0
  %224 = vmatpush1.msra.mxu0 %v23
  %225 = vmatprep.subr.mxu0 0.0
  %226 = vmatpush2.msra.mxu0 0.0
  %227 = vmatprep.subr.mxu0 0.0
  %228 = vmatpush2.msra.mxu0 0.0
  %229 = vmatprep.subr.mxu0 0.0
  %230 = vmatpush2.msra.mxu0 0.0
  %231 = vmatprep.subr.mxu0 0.0
  %232 = vmatpush2.msra.mxu0 0.0
  %233 = vmatprep.subr.mxu0 0.0
  %234 = vmatpush2.msra.mxu0 0.0
  %235 = vmatprep.subr.mxu0 0.0
  %236 = vmatpush2.msra.mxu0 0.0
  %237 = vmatprep.subr.mxu0 0.0
  %238 = vmatpush2.msra.mxu0 0.0
  %239 = vmatprep.subr.mxu0 0.0
  %240 = vmatpush2.msra.mxu0 0.0
  %241 = vmatprep.subr.mxu0 0.0
  %242 = vmatpush2.msra.mxu0 0.0
  %243 = vmatprep.subr.mxu0 0.0
  %244 = vmatpush2.msra.mxu0 0.0
  %245 = vmatprep.subr.mxu0 0.0
  %246 = vmatpush2.msra.mxu0 0.0
  %247 = vmatprep.subr.mxu0 0.0
  %248 = vmatpush2.msra.mxu0 0.0
  %249 = vmatprep.subr.mxu0 0.0
  %250 = vmatpush2.msra.mxu0 0.0
  %251 = vmatprep.subr.mxu0 0.0
  %252 = vmatpush2.msra.mxu0 0.0
  %253 = vmatprep.subr.mxu0 0.0
  %254 = vmatpush2.msra.mxu0 0.0
  %255 = vmatprep.subr.mxu0 0.0
  %256 = vmatpush2.msra.mxu0 0.0
  %257 = vmatprep.mubr.f32.mxu0 0.0
  %258 = vmatmul.mubr.f32.gmra.mxu0 %v189
  %v259 = vpop.f32.mrf.mxu0
  %v260 = vadd.f32 0.0, %v259
  %v261 = vpop.f32.mrf.mxu0
  %262 = vmatprep.mubr.f32.mxu0 0.0
  %263 = vmatmul.mubr.f32.gmra.mxu0 %v191
  %v264 = vpop.f32.mrf.mxu0
  %v265 = vadd.f32 0.0, %v264
  %v266 = vpop.f32.mrf.mxu0
  %267 = vdwg.mxu0
  %v268 = vadd.f32 %v181, %v260
  %v269 = vadd.f32 %v182, %v265
  %v270 = vmul.f32 %v268, 0.5
  %v271 = vmul.f32 %v269, 0.5
  %v272 = vtanh.pop %v270
  %v273 = vtanh.pop %v271
  %v274 = vadd.f32 %v272, 1.0
  %v275 = vadd.f32 %v273, 1.0
  %v276 = vmul.f32 %v274, 0.5
  %v277 = vmul.f32 %v275, 0.5
  %v278 = vtanh.pop %v268
  %v279 = vtanh.pop %v269
  %v280 = vmul.f32 %v276, %v178
  %v281 = vmul.f32 %v277, %v179
  %284 = vrot.lane.b32.xlu0 %v278, 118
  %v285 = vpop.permute.xlu0 %284
  %286 = vrot.lane.b32.xlu0 %v279, 118
  %v287 = vpop.permute.xlu0 %286
  %v290 = vmul.f32 %v276, %v285
  %v291 = vmul.f32 %v277, %v287
  %294 = vrot.lane.b32.xlu0 %v290, 5
  %v295 = vpop.permute.xlu0 %294
  %296 = vrot.lane.b32.xlu0 %v291, 5
  %v297 = vpop.permute.xlu0 %296
  %v300 = vadd.f32 %v280, %v295
  %v301 = vadd.f32 %v281, %v297
  %v302 = vtanh.pop %v300
  %v303 = vtanh.pop %v301
  %306 = vrot.lane.b32.xlu0 %v302, 10
  %v307 = vpop.permute.xlu0 %306
  %308 = vrot.lane.b32.xlu0 %v303, 10
  %v309 = vpop.permute.xlu0 %308
  %v312 = vmul.f32 %v276, %v307
  %v313 = vmul.f32 %v277, %v309
  %s314 = scalar_lea.vmem %s1, 16
  %v315 = vld [vmem:[%s314] sm:$0xff]
  %v316 = vld [vmem:[%s314 + $0x8] sm:$0xff]
  %318 = vset.pattern.permute.xlu0 0
  %319 = vperm.xlu0 %318, %v315
  %v320 = vpop.permute.xlu0 %319
  %323 = vset.pattern.permute.xlu0 0
  %324 = vperm.xlu0 %323, %v316
  %v325 = vpop.permute.xlu0 %324
  %v327 = vmul.f32 %v320, %v312
  %v328 = vmul.f32 %v325, %v313
  %v329 = vsub.f32 1.0, %v315
  %v330 = vsub.f32 1.0, %v316
  %332 = vset.pattern.permute.xlu0 0
  %333 = vperm.xlu0 %332, %v329
  %v334 = vpop.permute.xlu0 %333
  %337 = vset.pattern.permute.xlu0 0
  %338 = vperm.xlu0 %337, %v330
  %v339 = vpop.permute.xlu0 %338
  %v341 = vmul.f32 %v334, %v174
  %v342 = vmul.f32 %v339, %v175
  %v343 = vadd.f32 %v327, %v341
  %v344 = vadd.f32 %v328, %v342
  %v345 = vmul.f32 %v320, %v300
  %v346 = vmul.f32 %v325, %v301
  %v347 = vmul.f32 %v334, %v178
  %v348 = vmul.f32 %v339, %v179
  %v349 = vadd.f32 %v345, %v347
  %v350 = vadd.f32 %v346, %v348
  %s351 = scalar_lea.vmem %s0, 32
  %v352 = vld [vmem:[%s351] sm:$0xff]
  %v353 = vld [vmem:[%s351 + $0x8] sm:$0xff]
  %356 = vrot.lane.b32.xlu0 %v343, 113
  %v357 = vpop.permute.xlu0 %356
  %358 = vrot.lane.b32.xlu0 %v344, 113
  %v359 = vpop.permute.xlu0 %358
  %v360 = vsel %vm17, %v357, 0
  %v362 = vsel %vm17, %v359, 0
  %364 = vmatprep.subr.mxu0 0.0
  %365 = vmatpush1.msra.mxu0 0.0
  %366 = vmatprep.subr.mxu0 0.0
  %367 = vmatpush1.msra.mxu0 0.0
  %368 = vmatprep.subr.mxu0 0.0
  %369 = vmatpush1.msra.mxu0 0.0
  %370 = vmatprep.subr.mxu0 0.0
  %371 = vmatpush1.msra.mxu0 0.0
  %372 = vmatprep.subr.mxu0 0.0
  %373 = vmatpush1.msra.mxu0 0.0
  %374 = vmatprep.subr.mxu0 0.0
  %375 = vmatpush1.msra.mxu0 0.0
  %376 = vmatprep.subr.mxu0 0.0
  %377 = vmatpush1.msra.mxu0 0.0
  %378 = vmatprep.subr.mxu0 0.0
  %379 = vmatpush1.msra.mxu0 0.0
  %380 = vmatprep.subr.mxu0 0.0
  %381 = vmatpush1.msra.mxu0 0.0
  %382 = vmatprep.subr.mxu0 0.0
  %383 = vmatpush1.msra.mxu0 0.0
  %384 = vmatprep.subr.mxu0 0.0
  %385 = vmatpush1.msra.mxu0 0.0
  %386 = vmatprep.subr.mxu0 0.0
  %387 = vmatpush1.msra.mxu0 0.0
  %388 = vmatprep.subr.mxu0 0.0
  %389 = vmatpush1.msra.mxu0 0.0
  %390 = vmatprep.subr.mxu0 0.0
  %391 = vmatpush1.msra.mxu0 0.0
  %392 = vmatprep.subr.mxu0 0.0
  %393 = vmatpush1.msra.mxu0 0.0
  %394 = vmatprep.subr.mxu0 0.0
  %395 = vmatpush1.msra.mxu0 %v23
  %396 = vmatprep.subr.mxu0 0.0
  %397 = vmatpush2.msra.mxu0 0.0
  %398 = vmatprep.subr.mxu0 0.0
  %399 = vmatpush2.msra.mxu0 0.0
  %400 = vmatprep.subr.mxu0 0.0
  %401 = vmatpush2.msra.mxu0 0.0
  %402 = vmatprep.subr.mxu0 0.0
  %403 = vmatpush2.msra.mxu0 0.0
  %404 = vmatprep.subr.mxu0 0.0
  %405 = vmatpush2.msra.mxu0 0.0
  %406 = vmatprep.subr.mxu0 0.0
  %407 = vmatpush2.msra.mxu0 0.0
  %408 = vmatprep.subr.mxu0 0.0
  %409 = vmatpush2.msra.mxu0 0.0
  %410 = vmatprep.subr.mxu0 0.0
  %411 = vmatpush2.msra.mxu0 0.0
  %412 = vmatprep.subr.mxu0 0.0
  %413 = vmatpush2.msra.mxu0 0.0
  %414 = vmatprep.subr.mxu0 0.0
  %415 = vmatpush2.msra.mxu0 0.0
  %416 = vmatprep.subr.mxu0 0.0
  %417 = vmatpush2.msra.mxu0 0.0
  %418 = vmatprep.subr.mxu0 0.0
  %419 = vmatpush2.msra.mxu0 0.0
  %420 = vmatprep.subr.mxu0 0.0
  %421 = vmatpush2.msra.mxu0 0.0
  %422 = vmatprep.subr.mxu0 0.0
  %423 = vmatpush2.msra.mxu0 0.0
  %424 = vmatprep.subr.mxu0 0.0
  %425 = vmatpush2.msra.mxu0 0.0
  %426 = vmatprep.subr.mxu0 0.0
  %427 = vmatpush2.msra.mxu0 0.0
  %428 = vmatprep.mubr.f32.mxu0 0.0
  %429 = vmatmul.mubr.f32.gmra.mxu0 %v360
  %v430 = vpop.f32.mrf.mxu0
  %v431 = vadd.f32 0.0, %v430
  %v432 = vpop.f32.mrf.mxu0
  %433 = vmatprep.mubr.f32.mxu0 0.0
  %434 = vmatmul.mubr.f32.gmra.mxu0 %v362
  %v435 = vpop.f32.mrf.mxu0
  %v436 = vadd.f32 0.0, %v435
  %v437 = vpop.f32.mrf.mxu0
  %438 = vdwg.mxu0
  %v439 = vadd.f32 %v352, %v431
  %v440 = vadd.f32 %v353, %v436
  %v441 = vmul.f32 %v439, 0.5
  %v442 = vmul.f32 %v440, 0.5
  %v443 = vtanh.pop %v441
  %v444 = vtanh.pop %v442
  %v445 = vadd.f32 %v443, 1.0
  %v446 = vadd.f32 %v444, 1.0
  %v447 = vmul.f32 %v445, 0.5
  %v448 = vmul.f32 %v446, 0.5
  %v449 = vtanh.pop %v439
  %v450 = vtanh.pop %v440
  %v451 = vmul.f32 %v447, %v349
  %v452 = vmul.f32 %v448, %v350
  %455 = vrot.lane.b32.xlu0 %v449, 118
  %v456 = vpop.permute.xlu0 %455
  %457 = vrot.lane.b32.xlu0 %v450, 118
  %v458 = vpop.permute.xlu0 %457
  %v461 = vmul.f32 %v447, %v456
  %v462 = vmul.f32 %v448, %v458
  %465 = vrot.lane.b32.xlu0 %v461, 5
  %v466 = vpop.permute.xlu0 %465
  %467 = vrot.lane.b32.xlu0 %v462, 5
  %v468 = vpop.permute.xlu0 %467
  %v471 = vadd.f32 %v451, %v466
  %v472 = vadd.f32 %v452, %v468
  %v473 = vtanh.pop %v471
  %v474 = vtanh.pop %v472
  %477 = vrot.lane.b32.xlu0 %v473, 10
  %v478 = vpop.permute.xlu0 %477
  %479 = vrot.lane.b32.xlu0 %v474, 10
  %v480 = vpop.permute.xlu0 %479
  %v483 = vmul.f32 %v447, %v478
  %v484 = vmul.f32 %v448, %v480
  %s485 = scalar_lea.vmem %s1, 32
  %v486 = vld [vmem:[%s485] sm:$0xff]
  %v487 = vld [vmem:[%s485 + $0x8] sm:$0xff]
  %489 = vset.pattern.permute.xlu0 0
  %490 = vperm.xlu0 %489, %v486
  %v491 = vpop.permute.xlu0 %490
  %494 = vset.pattern.permute.xlu0 0
  %495 = vperm.xlu0 %494, %v487
  %v496 = vpop.permute.xlu0 %495
  %v498 = vmul.f32 %v491, %v483
  %v499 = vmul.f32 %v496, %v484
  %v500 = vsub.f32 1.0, %v486
  %v501 = vsub.f32 1.0, %v487
  %503 = vset.pattern.permute.xlu0 0
  %504 = vperm.xlu0 %503, %v500
  %v505 = vpop.permute.xlu0 %504
  %508 = vset.pattern.permute.xlu0 0
  %509 = vperm.xlu0 %508, %v501
  %v510 = vpop.permute.xlu0 %509
  %v512 = vmul.f32 %v505, %v343
  %v513 = vmul.f32 %v510, %v344
  %v514 = vadd.f32 %v498, %v512
  %v515 = vadd.f32 %v499, %v513
  %v516 = vmul.f32 %v491, %v471
  %v517 = vmul.f32 %v496, %v472
  %v518 = vmul.f32 %v505, %v349
  %v519 = vmul.f32 %v510, %v350
  %v520 = vadd.f32 %v516, %v518
  %v521 = vadd.f32 %v517, %v519
  %s522 = scalar_lea.vmem %s0, 48
  %v523 = vld [vmem:[%s522] sm:$0xff]
  %v524 = vld [vmem:[%s522 + $0x8] sm:$0xff]
  %527 = vrot.lane.b32.xlu0 %v514, 113
  %v528 = vpop.permute.xlu0 %527
  %529 = vrot.lane.b32.xlu0 %v515, 113
  %v530 = vpop.permute.xlu0 %529
  %v531 = vsel %vm17, %v528, 0
  %v533 = vsel %vm17, %v530, 0
  %535 = vmatprep.subr.mxu0 0.0
  %536 = vmatpush1.msra.mxu0 0.0
  %537 = vmatprep.subr.mxu0 0.0
  %538 = vmatpush1.msra.mxu0 0.0
  %539 = vmatprep.subr.mxu0 0.0
  %540 = vmatpush1.msra.mxu0 0.0
  %541 = vmatprep.subr.mxu0 0.0
  %542 = vmatpush1.msra.mxu0 0.0
  %543 = vmatprep.subr.mxu0 0.0
  %544 = vmatpush1.msra.mxu0 0.0
  %545 = vmatprep.subr.mxu0 0.0
  %546 = vmatpush1.msra.mxu0 0.0
  %547 = vmatprep.subr.mxu0 0.0
  %548 = vmatpush1.msra.mxu0 0.0
  %549 = vmatprep.subr.mxu0 0.0
  %550 = vmatpush1.msra.mxu0 0.0
  %551 = vmatprep.subr.mxu0 0.0
  %552 = vmatpush1.msra.mxu0 0.0
  %553 = vmatprep.subr.mxu0 0.0
  %554 = vmatpush1.msra.mxu0 0.0
  %555 = vmatprep.subr.mxu0 0.0
  %556 = vmatpush1.msra.mxu0 0.0
  %557 = vmatprep.subr.mxu0 0.0
  %558 = vmatpush1.msra.mxu0 0.0
  %559 = vmatprep.subr.mxu0 0.0
  %560 = vmatpush1.msra.mxu0 0.0
  %561 = vmatprep.subr.mxu0 0.0
  %562 = vmatpush1.msra.mxu0 0.0
  %563 = vmatprep.subr.mxu0 0.0
  %564 = vmatpush1.msra.mxu0 0.0
  %565 = vmatprep.subr.mxu0 0.0
  %566 = vmatpush1.msra.mxu0 %v23
  %567 = vmatprep.subr.mxu0 0.0
  %568 = vmatpush2.msra.mxu0 0.0
  %569 = vmatprep.subr.mxu0 0.0
  %570 = vmatpush2.msra.mxu0 0.0
  %571 = vmatprep.subr.mxu0 0.0
  %572 = vmatpush2.msra.mxu0 0.0
  %573 = vmatprep.subr.mxu0 0.0
  %574 = vmatpush2.msra.mxu0 0.0
  %575 = vmatprep.subr.mxu0 0.0
  %576 = vmatpush2.msra.mxu0 0.0
  %577 = vmatprep.subr.mxu0 0.0
  %578 = vmatpush2.msra.mxu0 0.0
  %579 = vmatprep.subr.mxu0 0.0
  %580 = vmatpush2.msra.mxu0 0.0
  %581 = vmatprep.subr.mxu0 0.0
  %582 = vmatpush2.msra.mxu0 0.0
  %583 = vmatprep.subr.mxu0 0.0
  %584 = vmatpush2.msra.mxu0 0.0
  %585 = vmatprep.subr.mxu0 0.0
  %586 = vmatpush2.msra.mxu0 0.0
  %587 = vmatprep.subr.mxu0 0.0
  %588 = vmatpush2.msra.mxu0 0.0
  %589 = vmatprep.subr.mxu0 0.0
  %590 = vmatpush2.msra.mxu0 0.0
  %591 = vmatprep.subr.mxu0 0.0
  %592 = vmatpush2.msra.mxu0 0.0
  %593 = vmatprep.subr.mxu0 0.0
  %594 = vmatpush2.msra.mxu0 0.0
  %595 = vmatprep.subr.mxu0 0.0
  %596 = vmatpush2.msra.mxu0 0.0
  %597 = vmatprep.subr.mxu0 0.0
  %598 = vmatpush2.msra.mxu0 0.0
  %599 = vmatprep.mubr.f32.mxu0 0.0
  %600 = vmatmul.mubr.f32.gmra.mxu0 %v531
  %v601 = vpop.f32.mrf.mxu0
  %v602 = vadd.f32 0.0, %v601
  %v603 = vpop.f32.mrf.mxu0
  %604 = vmatprep.mubr.f32.mxu0 0.0
  %605 = vmatmul.mubr.f32.gmra.mxu0 %v533
  %v606 = vpop.f32.mrf.mxu0
  %v607 = vadd.f32 0.0, %v606
  %v608 = vpop.f32.mrf.mxu0
  %609 = vdwg.mxu0
  %v610 = vadd.f32 %v523, %v602
  %v611 = vadd.f32 %v524, %v607
  %v612 = vmul.f32 %v610, 0.5
  %v613 = vmul.f32 %v611, 0.5
  %v614 = vtanh.pop %v612
  %v615 = vtanh.pop %v613
  %v616 = vadd.f32 %v614, 1.0
  %v617 = vadd.f32 %v615, 1.0
  %v618 = vmul.f32 %v616, 0.5
  %v619 = vmul.f32 %v617, 0.5
  %v620 = vtanh.pop %v610
  %v621 = vtanh.pop %v611
  %v622 = vmul.f32 %v618, %v520
  %v623 = vmul.f32 %v619, %v521
  %626 = vrot.lane.b32.xlu0 %v620, 118
  %v627 = vpop.permute.xlu0 %626
  %628 = vrot.lane.b32.xlu0 %v621, 118
  %v629 = vpop.permute.xlu0 %628
  %v632 = vmul.f32 %v618, %v627
  %v633 = vmul.f32 %v619, %v629
  %636 = vrot.lane.b32.xlu0 %v632, 5
  %v637 = vpop.permute.xlu0 %636
  %638 = vrot.lane.b32.xlu0 %v633, 5
  %v639 = vpop.permute.xlu0 %638
  %v642 = vadd.f32 %v622, %v637
  %v643 = vadd.f32 %v623, %v639
  %v644 = vtanh.pop %v642
  %v645 = vtanh.pop %v643
  %648 = vrot.lane.b32.xlu0 %v644, 10
  %v649 = vpop.permute.xlu0 %648
  %650 = vrot.lane.b32.xlu0 %v645, 10
  %v651 = vpop.permute.xlu0 %650
  %v654 = vmul.f32 %v618, %v649
  %v655 = vmul.f32 %v619, %v651
  %s656 = scalar_lea.vmem %s1, 48
  %v657 = vld [vmem:[%s656] sm:$0xff]
  %v658 = vld [vmem:[%s656 + $0x8] sm:$0xff]
  %660 = vset.pattern.permute.xlu0 0
  %661 = vperm.xlu0 %660, %v657
  %v662 = vpop.permute.xlu0 %661
  %665 = vset.pattern.permute.xlu0 0
  %666 = vperm.xlu0 %665, %v658
  %v667 = vpop.permute.xlu0 %666
  %v669 = vmul.f32 %v662, %v654
  %v670 = vmul.f32 %v667, %v655
  %v671 = vsub.f32 1.0, %v657
  %v672 = vsub.f32 1.0, %v658
  %674 = vset.pattern.permute.xlu0 0
  %675 = vperm.xlu0 %674, %v671
  %v676 = vpop.permute.xlu0 %675
  %679 = vset.pattern.permute.xlu0 0
  %680 = vperm.xlu0 %679, %v672
  %v681 = vpop.permute.xlu0 %680
  %v683 = vmul.f32 %v676, %v514
  %v684 = vmul.f32 %v681, %v515
  %v685 = vadd.f32 %v669, %v683
  %v686 = vadd.f32 %v670, %v684
  %v687 = vmul.f32 %v662, %v642
  %v688 = vmul.f32 %v667, %v643
  %v689 = vmul.f32 %v676, %v520
  %v690 = vmul.f32 %v681, %v521
  %v691 = vadd.f32 %v687, %v689
  %v692 = vadd.f32 %v688, %v690
  %s693 = scalar_lea.vmem %s0, 64
  %v694 = vld [vmem:[%s693] sm:$0xff]
  %v695 = vld [vmem:[%s693 + $0x8] sm:$0xff]
  %698 = vrot.lane.b32.xlu0 %v685, 113
  %v699 = vpop.permute.xlu0 %698
  %700 = vrot.lane.b32.xlu0 %v686, 113
  %v701 = vpop.permute.xlu0 %700
  %v702 = vsel %vm17, %v699, 0
  %v704 = vsel %vm17, %v701, 0
  %706 = vmatprep.subr.mxu0 0.0
  %707 = vmatpush1.msra.mxu0 0.0
  %708 = vmatprep.subr.mxu0 0.0
  %709 = vmatpush1.msra.mxu0 0.0
  %710 = vmatprep.subr.mxu0 0.0
  %711 = vmatpush1.msra.mxu0 0.0
  %712 = vmatprep.subr.mxu0 0.0
  %713 = vmatpush1.msra.mxu0 0.0
  %714 = vmatprep.subr.mxu0 0.0
  %715 = vmatpush1.msra.mxu0 0.0
  %716 = vmatprep.subr.mxu0 0.0
  %717 = vmatpush1.msra.mxu0 0.0
  %718 = vmatprep.subr.mxu0 0.0
  %719 = vmatpush1.msra.mxu0 0.0
  %720 = vmatprep.subr.mxu0 0.0
  %721 = vmatpush1.msra.mxu0 0.0
  %722 = vmatprep.subr.mxu0 0.0
  %723 = vmatpush1.msra.mxu0 0.0
  %724 = vmatprep.subr.mxu0 0.0
  %725 = vmatpush1.msra.mxu0 0.0
  %726 = vmatprep.subr.mxu0 0.0
  %727 = vmatpush1.msra.mxu0 0.0
  %728 = vmatprep.subr.mxu0 0.0
  %729 = vmatpush1.msra.mxu0 0.0
  %730 = vmatprep.subr.mxu0 0.0
  %731 = vmatpush1.msra.mxu0 0.0
  %732 = vmatprep.subr.mxu0 0.0
  %733 = vmatpush1.msra.mxu0 0.0
  %734 = vmatprep.subr.mxu0 0.0
  %735 = vmatpush1.msra.mxu0 0.0
  %736 = vmatprep.subr.mxu0 0.0
  %737 = vmatpush1.msra.mxu0 %v23
  %738 = vmatprep.subr.mxu0 0.0
  %739 = vmatpush2.msra.mxu0 0.0
  %740 = vmatprep.subr.mxu0 0.0
  %741 = vmatpush2.msra.mxu0 0.0
  %742 = vmatprep.subr.mxu0 0.0
  %743 = vmatpush2.msra.mxu0 0.0
  %744 = vmatprep.subr.mxu0 0.0
  %745 = vmatpush2.msra.mxu0 0.0
  %746 = vmatprep.subr.mxu0 0.0
  %747 = vmatpush2.msra.mxu0 0.0
  %748 = vmatprep.subr.mxu0 0.0
  %749 = vmatpush2.msra.mxu0 0.0
  %750 = vmatprep.subr.mxu0 0.0
  %751 = vmatpush2.msra.mxu0 0.0
  %752 = vmatprep.subr.mxu0 0.0
  %753 = vmatpush2.msra.mxu0 0.0
  %754 = vmatprep.subr.mxu0 0.0
  %755 = vmatpush2.msra.mxu0 0.0
  %756 = vmatprep.subr.mxu0 0.0
  %757 = vmatpush2.msra.mxu0 0.0
  %758 = vmatprep.subr.mxu0 0.0
  %759 = vmatpush2.msra.mxu0 0.0
  %760 = vmatprep.subr.mxu0 0.0
  %761 = vmatpush2.msra.mxu0 0.0
  %762 = vmatprep.subr.mxu0 0.0
  %763 = vmatpush2.msra.mxu0 0.0
  %764 = vmatprep.subr.mxu0 0.0
  %765 = vmatpush2.msra.mxu0 0.0
  %766 = vmatprep.subr.mxu0 0.0
  %767 = vmatpush2.msra.mxu0 0.0
  %768 = vmatprep.subr.mxu0 0.0
  %769 = vmatpush2.msra.mxu0 0.0
  %770 = vmatprep.mubr.f32.mxu0 0.0
  %771 = vmatmul.mubr.f32.gmra.mxu0 %v702
  %v772 = vpop.f32.mrf.mxu0
  %v773 = vadd.f32 0.0, %v772
  %v774 = vpop.f32.mrf.mxu0
  %775 = vmatprep.mubr.f32.mxu0 0.0
  %776 = vmatmul.mubr.f32.gmra.mxu0 %v704
  %v777 = vpop.f32.mrf.mxu0
  %v778 = vadd.f32 0.0, %v777
  %v779 = vpop.f32.mrf.mxu0
  %780 = vdwg.mxu0
  %v781 = vadd.f32 %v694, %v773
  %v782 = vadd.f32 %v695, %v778
  %v783 = vmul.f32 %v781, 0.5
  %v784 = vmul.f32 %v782, 0.5
  %v785 = vtanh.pop %v783
  %v786 = vtanh.pop %v784
  %v787 = vadd.f32 %v785, 1.0
  %v788 = vadd.f32 %v786, 1.0
  %v789 = vmul.f32 %v787, 0.5
  %v790 = vmul.f32 %v788, 0.5
  %v791 = vtanh.pop %v781
  %v792 = vtanh.pop %v782
  %v793 = vmul.f32 %v789, %v691
  %v794 = vmul.f32 %v790, %v692
  %797 = vrot.lane.b32.xlu0 %v791, 118
  %v798 = vpop.permute.xlu0 %797
  %799 = vrot.lane.b32.xlu0 %v792, 118
  %v800 = vpop.permute.xlu0 %799
  %v803 = vmul.f32 %v789, %v798
  %v804 = vmul.f32 %v790, %v800
  %807 = vrot.lane.b32.xlu0 %v803, 5
  %v808 = vpop.permute.xlu0 %807
  %809 = vrot.lane.b32.xlu0 %v804, 5
  %v810 = vpop.permute.xlu0 %809
  %v813 = vadd.f32 %v793, %v808
  %v814 = vadd.f32 %v794, %v810
  %v815 = vtanh.pop %v813
  %v816 = vtanh.pop %v814
  %819 = vrot.lane.b32.xlu0 %v815, 10
  %v820 = vpop.permute.xlu0 %819
  %821 = vrot.lane.b32.xlu0 %v816, 10
  %v822 = vpop.permute.xlu0 %821
  %v825 = vmul.f32 %v789, %v820
  %v826 = vmul.f32 %v790, %v822
  %s827 = scalar_lea.vmem %s1, 64
  %v828 = vld [vmem:[%s827] sm:$0xff]
  %v829 = vld [vmem:[%s827 + $0x8] sm:$0xff]
  %831 = vset.pattern.permute.xlu0 0
  %832 = vperm.xlu0 %831, %v828
  %v833 = vpop.permute.xlu0 %832
  %836 = vset.pattern.permute.xlu0 0
  %837 = vperm.xlu0 %836, %v829
  %v838 = vpop.permute.xlu0 %837
  %v840 = vmul.f32 %v833, %v825
  %v841 = vmul.f32 %v838, %v826
  %v842 = vsub.f32 1.0, %v828
  %v843 = vsub.f32 1.0, %v829
  %845 = vset.pattern.permute.xlu0 0
  %846 = vperm.xlu0 %845, %v842
  %v847 = vpop.permute.xlu0 %846
  %850 = vset.pattern.permute.xlu0 0
  %851 = vperm.xlu0 %850, %v843
  %v852 = vpop.permute.xlu0 %851
  %v854 = vmul.f32 %v847, %v685
  %v855 = vmul.f32 %v852, %v686
  %v856 = vadd.f32 %v840, %v854
  %v857 = vadd.f32 %v841, %v855
  %v858 = vmul.f32 %v833, %v813
  %v859 = vmul.f32 %v838, %v814
  %v860 = vmul.f32 %v847, %v691
  %v861 = vmul.f32 %v852, %v692
  %v862 = vadd.f32 %v858, %v860
  %v863 = vadd.f32 %v859, %v861
  %s864 = scalar_lea.vmem %s0, 80
  %v865 = vld [vmem:[%s864] sm:$0xff]
  %v866 = vld [vmem:[%s864 + $0x8] sm:$0xff]
  %869 = vrot.lane.b32.xlu0 %v856, 113
  %v870 = vpop.permute.xlu0 %869
  %871 = vrot.lane.b32.xlu0 %v857, 113
  %v872 = vpop.permute.xlu0 %871
  %v873 = vsel %vm17, %v870, 0
  %v875 = vsel %vm17, %v872, 0
  %877 = vmatprep.subr.mxu0 0.0
  %878 = vmatpush1.msra.mxu0 0.0
  %879 = vmatprep.subr.mxu0 0.0
  %880 = vmatpush1.msra.mxu0 0.0
  %881 = vmatprep.subr.mxu0 0.0
  %882 = vmatpush1.msra.mxu0 0.0
  %883 = vmatprep.subr.mxu0 0.0
  %884 = vmatpush1.msra.mxu0 0.0
  %885 = vmatprep.subr.mxu0 0.0
  %886 = vmatpush1.msra.mxu0 0.0
  %887 = vmatprep.subr.mxu0 0.0
  %888 = vmatpush1.msra.mxu0 0.0
  %889 = vmatprep.subr.mxu0 0.0
  %890 = vmatpush1.msra.mxu0 0.0
  %891 = vmatprep.subr.mxu0 0.0
  %892 = vmatpush1.msra.mxu0 0.0
  %893 = vmatprep.subr.mxu0 0.0
  %894 = vmatpush1.msra.mxu0 0.0
  %895 = vmatprep.subr.mxu0 0.0
  %896 = vmatpush1.msra.mxu0 0.0
  %897 = vmatprep.subr.mxu0 0.0
  %898 = vmatpush1.msra.mxu0 0.0
  %899 = vmatprep.subr.mxu0 0.0
  %900 = vmatpush1.msra.mxu0 0.0
  %901 = vmatprep.subr.mxu0 0.0
  %902 = vmatpush1.msra.mxu0 0.0
  %903 = vmatprep.subr.mxu0 0.0
  %904 = vmatpush1.msra.mxu0 0.0
  %905 = vmatprep.subr.mxu0 0.0
  %906 = vmatpush1.msra.mxu0 0.0
  %907 = vmatprep.subr.mxu0 0.0
  %908 = vmatpush1.msra.mxu0 %v23
  %909 = vmatprep.subr.mxu0 0.0
  %910 = vmatpush2.msra.mxu0 0.0
  %911 = vmatprep.subr.mxu0 0.0
  %912 = vmatpush2.msra.mxu0 0.0
  %913 = vmatprep.subr.mxu0 0.0
  %914 = vmatpush2.msra.mxu0 0.0
  %915 = vmatprep.subr.mxu0 0.0
  %916 = vmatpush2.msra.mxu0 0.0
  %917 = vmatprep.subr.mxu0 0.0
  %918 = vmatpush2.msra.mxu0 0.0
  %919 = vmatprep.subr.mxu0 0.0
  %920 = vmatpush2.msra.mxu0 0.0
  %921 = vmatprep.subr.mxu0 0.0
  %922 = vmatpush2.msra.mxu0 0.0
  %923 = vmatprep.subr.mxu0 0.0
  %924 = vmatpush2.msra.mxu0 0.0
  %925 = vmatprep.subr.mxu0 0.0
  %926 = vmatpush2.msra.mxu0 0.0
  %927 = vmatprep.subr.mxu0 0.0
  %928 = vmatpush2.msra.mxu0 0.0
  %929 = vmatprep.subr.mxu0 0.0
  %930 = vmatpush2.msra.mxu0 0.0
  %931 = vmatprep.subr.mxu0 0.0
  %932 = vmatpush2.msra.mxu0 0.0
  %933 = vmatprep.subr.mxu0 0.0
  %934 = vmatpush2.msra.mxu0 0.0
  %935 = vmatprep.subr.mxu0 0.0
  %936 = vmatpush2.msra.mxu0 0.0
  %937 = vmatprep.subr.mxu0 0.0
  %938 = vmatpush2.msra.mxu0 0.0
  %939 = vmatprep.subr.mxu0 0.0
  %940 = vmatpush2.msra.mxu0 0.0
  %941 = vmatprep.mubr.f32.mxu0 0.0
  %942 = vmatmul.mubr.f32.gmra.mxu0 %v873
  %v943 = vpop.f32.mrf.mxu0
  %v944 = vadd.f32 0.0, %v943
  %v945 = vpop.f32.mrf.mxu0
  %946 = vmatprep.mubr.f32.mxu0 0.0
  %947 = vmatmul.mubr.f32.gmra.mxu0 %v875
  %v948 = vpop.f32.mrf.mxu0
  %v949 = vadd.f32 0.0, %v948
  %v950 = vpop.f32.mrf.mxu0
  %951 = vdwg.mxu0
  %v952 = vadd.f32 %v865, %v944
  %v953 = vadd.f32 %v866, %v949
  %v954 = vmul.f32 %v952, 0.5
  %v955 = vmul.f32 %v953, 0.5
  %v956 = vtanh.pop %v954
  %v957 = vtanh.pop %v955
  %v958 = vadd.f32 %v956, 1.0
  %v959 = vadd.f32 %v957, 1.0
  %v960 = vmul.f32 %v958, 0.5
  %v961 = vmul.f32 %v959, 0.5
  %v962 = vtanh.pop %v952
  %v963 = vtanh.pop %v953
  %v964 = vmul.f32 %v960, %v862
  %v965 = vmul.f32 %v961, %v863
  %968 = vrot.lane.b32.xlu0 %v962, 118
  %v969 = vpop.permute.xlu0 %968
  %970 = vrot.lane.b32.xlu0 %v963, 118
  %v971 = vpop.permute.xlu0 %970
  %v974 = vmul.f32 %v960, %v969
  %v975 = vmul.f32 %v961, %v971
  %978 = vrot.lane.b32.xlu0 %v974, 5
  %v979 = vpop.permute.xlu0 %978
  %980 = vrot.lane.b32.xlu0 %v975, 5
  %v981 = vpop.permute.xlu0 %980
  %v984 = vadd.f32 %v964, %v979
  %v985 = vadd.f32 %v965, %v981
  %v986 = vtanh.pop %v984
  %v987 = vtanh.pop %v985
  %990 = vrot.lane.b32.xlu0 %v986, 10
  %v991 = vpop.permute.xlu0 %990
  %992 = vrot.lane.b32.xlu0 %v987, 10
  %v993 = vpop.permute.xlu0 %992
  %v996 = vmul.f32 %v960, %v991
  %v997 = vmul.f32 %v961, %v993
  %s998 = scalar_lea.vmem %s1, 80
  %v999 = vld [vmem:[%s998] sm:$0xff]
  %v1000 = vld [vmem:[%s998 + $0x8] sm:$0xff]
  %1002 = vset.pattern.permute.xlu0 0
  %1003 = vperm.xlu0 %1002, %v999
  %v1004 = vpop.permute.xlu0 %1003
  %1007 = vset.pattern.permute.xlu0 0
  %1008 = vperm.xlu0 %1007, %v1000
  %v1009 = vpop.permute.xlu0 %1008
  %v1011 = vmul.f32 %v1004, %v996
  %v1012 = vmul.f32 %v1009, %v997
  %v1013 = vsub.f32 1.0, %v999
  %v1014 = vsub.f32 1.0, %v1000
  %1016 = vset.pattern.permute.xlu0 0
  %1017 = vperm.xlu0 %1016, %v1013
  %v1018 = vpop.permute.xlu0 %1017
  %1021 = vset.pattern.permute.xlu0 0
  %1022 = vperm.xlu0 %1021, %v1014
  %v1023 = vpop.permute.xlu0 %1022
  %v1025 = vmul.f32 %v1018, %v856
  %v1026 = vmul.f32 %v1023, %v857
  %v1027 = vadd.f32 %v1011, %v1025
  %v1028 = vadd.f32 %v1012, %v1026
  %s1029 = scalar_lea.vmem %s2, 8
  %v1030 = vld [vmem:[%s1029] sm:$0x1f]
  %s1031 = scalar_lea.vmem %s0, 96
  %v1032 = vld [vmem:[%s1031] sm:$0xff]
  %v1033 = vld [vmem:[%s1031 + $0x8] sm:$0xff]
  %v1035 = vsel %vm21, %v1030, 0
  %1037 = vmatprep.subr.mxu0 0.0
  %1038 = vmatpush1.msra.mxu0 0.0
  %1039 = vmatprep.subr.mxu0 0.0
  %1040 = vmatpush1.msra.mxu0 0.0
  %1041 = vmatprep.subr.mxu0 0.0
  %1042 = vmatpush1.msra.mxu0 0.0
  %1043 = vmatprep.subr.mxu0 0.0
  %1044 = vmatpush1.msra.mxu0 0.0
  %1045 = vmatprep.subr.mxu0 0.0
  %1046 = vmatpush1.msra.mxu0 0.0
  %1047 = vmatprep.subr.mxu0 0.0
  %1048 = vmatpush1.msra.mxu0 0.0
  %1049 = vmatprep.subr.mxu0 0.0
  %1050 = vmatpush1.msra.mxu0 0.0
  %1051 = vmatprep.subr.mxu0 0.0
  %1052 = vmatpush1.msra.mxu0 0.0
  %1053 = vmatprep.subr.mxu0 0.0
  %1054 = vmatpush1.msra.mxu0 0.0
  %1055 = vmatprep.subr.mxu0 0.0
  %1056 = vmatpush1.msra.mxu0 0.0
  %1057 = vmatprep.subr.mxu0 0.0
  %1058 = vmatpush1.msra.mxu0 0.0
  %1059 = vmatprep.subr.mxu0 0.0
  %1060 = vmatpush1.msra.mxu0 0.0
  %1061 = vmatprep.subr.mxu0 0.0
  %1062 = vmatpush1.msra.mxu0 0.0
  %1063 = vmatprep.subr.mxu0 0.0
  %1064 = vmatpush1.msra.mxu0 0.0
  %1065 = vmatprep.subr.mxu0 0.0
  %1066 = vmatpush1.msra.mxu0 0.0
  %1067 = vmatprep.subr.mxu0 0.0
  %1068 = vmatpush1.msra.mxu0 %v1035
  %1069 = vmatprep.subr.mxu0 0.0
  %1070 = vmatpush2.msra.mxu0 0.0
  %1071 = vmatprep.subr.mxu0 0.0
  %1072 = vmatpush2.msra.mxu0 0.0
  %1073 = vmatprep.subr.mxu0 0.0
  %1074 = vmatpush2.msra.mxu0 0.0
  %1075 = vmatprep.subr.mxu0 0.0
  %1076 = vmatpush2.msra.mxu0 0.0
  %1077 = vmatprep.subr.mxu0 0.0
  %1078 = vmatpush2.msra.mxu0 0.0
  %1079 = vmatprep.subr.mxu0 0.0
  %1080 = vmatpush2.msra.mxu0 0.0
  %1081 = vmatprep.subr.mxu0 0.0
  %1082 = vmatpush2.msra.mxu0 0.0
  %1083 = vmatprep.subr.mxu0 0.0
  %1084 = vmatpush2.msra.mxu0 0.0
  %1085 = vmatprep.subr.mxu0 0.0
  %1086 = vmatpush2.msra.mxu0 0.0
  %1087 = vmatprep.subr.mxu0 0.0
  %1088 = vmatpush2.msra.mxu0 0.0
  %1089 = vmatprep.subr.mxu0 0.0
  %1090 = vmatpush2.msra.mxu0 0.0
  %1091 = vmatprep.subr.mxu0 0.0
  %1092 = vmatpush2.msra.mxu0 0.0
  %1093 = vmatprep.subr.mxu0 0.0
  %1094 = vmatpush2.msra.mxu0 0.0
  %1095 = vmatprep.subr.mxu0 0.0
  %1096 = vmatpush2.msra.mxu0 0.0
  %1097 = vmatprep.subr.mxu0 0.0
  %1098 = vmatpush2.msra.mxu0 0.0
  %1099 = vmatprep.subr.mxu0 0.0
  %1100 = vmatpush2.msra.mxu0 0.0
  %1101 = vmatprep.mubr.f32.mxu0 0.0
  %1102 = vmatmul.mubr.f32.gmra.mxu0 %v19
  %v1103 = vpop.f32.mrf.mxu0
  %v1104 = vadd.f32 0.0, %v1103
  %v1105 = vpop.f32.mrf.mxu0
  %1106 = vmatprep.mubr.f32.mxu0 0.0
  %1107 = vmatmul.mubr.f32.gmra.mxu0 %v19
  %v1108 = vpop.f32.mrf.mxu0
  %v1109 = vadd.f32 0.0, %v1108
  %v1110 = vpop.f32.mrf.mxu0
  %1111 = vdwg.mxu0
  %v1112 = vadd.f32 %v1032, %v1104
  %v1113 = vadd.f32 %v1033, %v1109
  %v1114 = vmul.f32 %v1112, 0.5
  %v1115 = vmul.f32 %v1113, 0.5
  %v1116 = vtanh.pop %v1114
  %v1117 = vtanh.pop %v1115
  %v1118 = vadd.f32 %v1116, 1.0
  %v1119 = vadd.f32 %v1117, 1.0
  %v1120 = vmul.f32 %v1118, 0.5
  %v1121 = vmul.f32 %v1119, 0.5
  %v1122 = vtanh.pop %v1112
  %v1123 = vtanh.pop %v1113
  %v1124 = vmul.f32 %v1120, 0.0
  %v1125 = vmul.f32 %v1121, 0.0
  %1128 = vrot.lane.b32.xlu0 %v1122, 118
  %v1129 = vpop.permute.xlu0 %1128
  %1130 = vrot.lane.b32.xlu0 %v1123, 118
  %v1131 = vpop.permute.xlu0 %1130
  %v1134 = vmul.f32 %v1120, %v1129
  %v1135 = vmul.f32 %v1121, %v1131
  %1138 = vrot.lane.b32.xlu0 %v1134, 5
  %v1139 = vpop.permute.xlu0 %1138
  %1140 = vrot.lane.b32.xlu0 %v1135, 5
  %v1141 = vpop.permute.xlu0 %1140
  %v1144 = vadd.f32 %v1124, %v1139
  %v1145 = vadd.f32 %v1125, %v1141
  %v1146 = vtanh.pop %v1144
  %v1147 = vtanh.pop %v1145
  %1150 = vrot.lane.b32.xlu0 %v1146, 10
  %v1151 = vpop.permute.xlu0 %1150
  %1152 = vrot.lane.b32.xlu0 %v1147, 10
  %v1153 = vpop.permute.xlu0 %1152
  %v1156 = vmul.f32 %v1120, %v1151
  %v1157 = vmul.f32 %v1121, %v1153
  %s1158 = scalar_lea.vmem %s1, 96
  %v1159 = vld [vmem:[%s1158] sm:$0xff]
  %v1160 = vld [vmem:[%s1158 + $0x8] sm:$0xff]
  %1162 = vset.pattern.permute.xlu0 0
  %1163 = vperm.xlu0 %1162, %v1159
  %v1164 = vpop.permute.xlu0 %1163
  %1167 = vset.pattern.permute.xlu0 0
  %1168 = vperm.xlu0 %1167, %v1160
  %v1169 = vpop.permute.xlu0 %1168
  %v1171 = vmul.f32 %v1164, %v1156
  %v1172 = vmul.f32 %v1169, %v1157
  %v1173 = vsub.f32 1.0, %v1159
  %v1174 = vsub.f32 1.0, %v1160
  %1176 = vset.pattern.permute.xlu0 0
  %1177 = vperm.xlu0 %1176, %v1173
  %v1178 = vpop.permute.xlu0 %1177
  %1181 = vset.pattern.permute.xlu0 0
  %1182 = vperm.xlu0 %1181, %v1174
  %v1183 = vpop.permute.xlu0 %1182
  %v1185 = vmul.f32 %v1178, 0.0
  %v1186 = vmul.f32 %v1183, 0.0
  %v1187 = vadd.f32 %v1171, %v1185
  %v1188 = vadd.f32 %v1172, %v1186
  %v1189 = vmul.f32 %v1164, %v1144
  %v1190 = vmul.f32 %v1169, %v1145
  %v1191 = vadd.f32 %v1189, %v1185
  %v1192 = vadd.f32 %v1190, %v1186
  %s1193 = scalar_lea.vmem %s0, 112
  %v1194 = vld [vmem:[%s1193] sm:$0xff]
  %v1195 = vld [vmem:[%s1193 + $0x8] sm:$0xff]
  %1198 = vrot.lane.b32.xlu0 %v1187, 113
  %v1199 = vpop.permute.xlu0 %1198
  %1200 = vrot.lane.b32.xlu0 %v1188, 113
  %v1201 = vpop.permute.xlu0 %1200
  %v1202 = vsel %vm17, %v1199, 0
  %v1204 = vsel %vm17, %v1201, 0
  %1206 = vmatprep.subr.mxu0 0.0
  %1207 = vmatpush1.msra.mxu0 0.0
  %1208 = vmatprep.subr.mxu0 0.0
  %1209 = vmatpush1.msra.mxu0 0.0
  %1210 = vmatprep.subr.mxu0 0.0
  %1211 = vmatpush1.msra.mxu0 0.0
  %1212 = vmatprep.subr.mxu0 0.0
  %1213 = vmatpush1.msra.mxu0 0.0
  %1214 = vmatprep.subr.mxu0 0.0
  %1215 = vmatpush1.msra.mxu0 0.0
  %1216 = vmatprep.subr.mxu0 0.0
  %1217 = vmatpush1.msra.mxu0 0.0
  %1218 = vmatprep.subr.mxu0 0.0
  %1219 = vmatpush1.msra.mxu0 0.0
  %1220 = vmatprep.subr.mxu0 0.0
  %1221 = vmatpush1.msra.mxu0 0.0
  %1222 = vmatprep.subr.mxu0 0.0
  %1223 = vmatpush1.msra.mxu0 0.0
  %1224 = vmatprep.subr.mxu0 0.0
  %1225 = vmatpush1.msra.mxu0 0.0
  %1226 = vmatprep.subr.mxu0 0.0
  %1227 = vmatpush1.msra.mxu0 0.0
  %1228 = vmatprep.subr.mxu0 0.0
  %1229 = vmatpush1.msra.mxu0 0.0
  %1230 = vmatprep.subr.mxu0 0.0
  %1231 = vmatpush1.msra.mxu0 0.0
  %1232 = vmatprep.subr.mxu0 0.0
  %1233 = vmatpush1.msra.mxu0 0.0
  %1234 = vmatprep.subr.mxu0 0.0
  %1235 = vmatpush1.msra.mxu0 0.0
  %1236 = vmatprep.subr.mxu0 0.0
  %1237 = vmatpush1.msra.mxu0 %v1035
  %1238 = vmatprep.subr.mxu0 0.0
  %1239 = vmatpush2.msra.mxu0 0.0
  %1240 = vmatprep.subr.mxu0 0.0
  %1241 = vmatpush2.msra.mxu0 0.0
  %1242 = vmatprep.subr.mxu0 0.0
  %1243 = vmatpush2.msra.mxu0 0.0
  %1244 = vmatprep.subr.mxu0 0.0
  %1245 = vmatpush2.msra.mxu0 0.0
  %1246 = vmatprep.subr.mxu0 0.0
  %1247 = vmatpush2.msra.mxu0 0.0
  %1248 = vmatprep.subr.mxu0 0.0
  %1249 = vmatpush2.msra.mxu0 0.0
  %1250 = vmatprep.subr.mxu0 0.0
  %1251 = vmatpush2.msra.mxu0 0.0
  %1252 = vmatprep.subr.mxu0 0.0
  %1253 = vmatpush2.msra.mxu0 0.0
  %1254 = vmatprep.subr.mxu0 0.0
  %1255 = vmatpush2.msra.mxu0 0.0
  %1256 = vmatprep.subr.mxu0 0.0
  %1257 = vmatpush2.msra.mxu0 0.0
  %1258 = vmatprep.subr.mxu0 0.0
  %1259 = vmatpush2.msra.mxu0 0.0
  %1260 = vmatprep.subr.mxu0 0.0
  %1261 = vmatpush2.msra.mxu0 0.0
  %1262 = vmatprep.subr.mxu0 0.0
  %1263 = vmatpush2.msra.mxu0 0.0
  %1264 = vmatprep.subr.mxu0 0.0
  %1265 = vmatpush2.msra.mxu0 0.0
  %1266 = vmatprep.subr.mxu0 0.0
  %1267 = vmatpush2.msra.mxu0 0.0
  %1268 = vmatprep.subr.mxu0 0.0
  %1269 = vmatpush2.msra.mxu0 0.0
  %1270 = vmatprep.mubr.f32.mxu0 0.0
  %1271 = vmatmul.mubr.f32.gmra.mxu0 %v1202
  %v1272 = vpop.f32.mrf.mxu0
  %v1273 = vadd.f32 0.0, %v1272
  %v1274 = vpop.f32.mrf.mxu0
  %1275 = vmatprep.mubr.f32.mxu0 0.0
  %1276 = vmatmul.mubr.f32.gmra.mxu0 %v1204
  %v1277 = vpop.f32.mrf.mxu0
  %v1278 = vadd.f32 0.0, %v1277
  %v1279 = vpop.f32.mrf.mxu0
  %1280 = vdwg.mxu0
  %v1281 = vadd.f32 %v1194, %v1273
  %v1282 = vadd.f32 %v1195, %v1278
  %v1283 = vmul.f32 %v1281, 0.5
  %v1284 = vmul.f32 %v1282, 0.5
  %v1285 = vtanh.pop %v1283
  %v1286 = vtanh.pop %v1284
  %v1287 = vadd.f32 %v1285, 1.0
  %v1288 = vadd.f32 %v1286, 1.0
  %v1289 = vmul.f32 %v1287, 0.5
  %v1290 = vmul.f32 %v1288, 0.5
  %v1291 = vtanh.pop %v1281
  %v1292 = vtanh.pop %v1282
  %v1293 = vmul.f32 %v1289, %v1191
  %v1294 = vmul.f32 %v1290, %v1192
  %1297 = vrot.lane.b32.xlu0 %v1291, 118
  %v1298 = vpop.permute.xlu0 %1297
  %1299 = vrot.lane.b32.xlu0 %v1292, 118
  %v1300 = vpop.permute.xlu0 %1299
  %v1303 = vmul.f32 %v1289, %v1298
  %v1304 = vmul.f32 %v1290, %v1300
  %1307 = vrot.lane.b32.xlu0 %v1303, 5
  %v1308 = vpop.permute.xlu0 %1307
  %1309 = vrot.lane.b32.xlu0 %v1304, 5
  %v1310 = vpop.permute.xlu0 %1309
  %v1313 = vadd.f32 %v1293, %v1308
  %v1314 = vadd.f32 %v1294, %v1310
  %v1315 = vtanh.pop %v1313
  %v1316 = vtanh.pop %v1314
  %1319 = vrot.lane.b32.xlu0 %v1315, 10
  %v1320 = vpop.permute.xlu0 %1319
  %1321 = vrot.lane.b32.xlu0 %v1316, 10
  %v1322 = vpop.permute.xlu0 %1321
  %v1325 = vmul.f32 %v1289, %v1320
  %v1326 = vmul.f32 %v1290, %v1322
  %s1327 = scalar_lea.vmem %s1, 112
  %v1328 = vld [vmem:[%s1327] sm:$0xff]
  %v1329 = vld [vmem:[%s1327 + $0x8] sm:$0xff]
  %1331 = vset.pattern.permute.xlu0 0
  %1332 = vperm.xlu0 %1331, %v1328
  %v1333 = vpop.permute.xlu0 %1332
  %1336 = vset.pattern.permute.xlu0 0
  %1337 = vperm.xlu0 %1336, %v1329
  %v1338 = vpop.permute.xlu0 %1337
  %v1340 = vmul.f32 %v1333, %v1325
  %v1341 = vmul.f32 %v1338, %v1326
  %v1342 = vsub.f32 1.0, %v1328
  %v1343 = vsub.f32 1.0, %v1329
  %1345 = vset.pattern.permute.xlu0 0
  %1346 = vperm.xlu0 %1345, %v1342
  %v1347 = vpop.permute.xlu0 %1346
  %1350 = vset.pattern.permute.xlu0 0
  %1351 = vperm.xlu0 %1350, %v1343
  %v1352 = vpop.permute.xlu0 %1351
  %v1354 = vmul.f32 %v1347, %v1187
  %v1355 = vmul.f32 %v1352, %v1188
  %v1356 = vadd.f32 %v1340, %v1354
  %v1357 = vadd.f32 %v1341, %v1355
  %v1358 = vmul.f32 %v1333, %v1313
  %v1359 = vmul.f32 %v1338, %v1314
  %v1360 = vmul.f32 %v1347, %v1191
  %v1361 = vmul.f32 %v1352, %v1192
  %v1362 = vadd.f32 %v1358, %v1360
  %v1363 = vadd.f32 %v1359, %v1361
  %s1364 = scalar_lea.vmem %s0, 128
  %v1365 = vld [vmem:[%s1364] sm:$0xff]
  %v1366 = vld [vmem:[%s1364 + $0x8] sm:$0xff]
  %1369 = vrot.lane.b32.xlu0 %v1356, 113
  %v1370 = vpop.permute.xlu0 %1369
  %1371 = vrot.lane.b32.xlu0 %v1357, 113
  %v1372 = vpop.permute.xlu0 %1371
  %v1373 = vsel %vm17, %v1370, 0
  %v1375 = vsel %vm17, %v1372, 0
  %1377 = vmatprep.subr.mxu0 0.0
  %1378 = vmatpush1.msra.mxu0 0.0
  %1379 = vmatprep.subr.mxu0 0.0
  %1380 = vmatpush1.msra.mxu0 0.0
  %1381 = vmatprep.subr.mxu0 0.0
  %1382 = vmatpush1.msra.mxu0 0.0
  %1383 = vmatprep.subr.mxu0 0.0
  %1384 = vmatpush1.msra.mxu0 0.0
  %1385 = vmatprep.subr.mxu0 0.0
  %1386 = vmatpush1.msra.mxu0 0.0
  %1387 = vmatprep.subr.mxu0 0.0
  %1388 = vmatpush1.msra.mxu0 0.0
  %1389 = vmatprep.subr.mxu0 0.0
  %1390 = vmatpush1.msra.mxu0 0.0
  %1391 = vmatprep.subr.mxu0 0.0
  %1392 = vmatpush1.msra.mxu0 0.0
  %1393 = vmatprep.subr.mxu0 0.0
  %1394 = vmatpush1.msra.mxu0 0.0
  %1395 = vmatprep.subr.mxu0 0.0
  %1396 = vmatpush1.msra.mxu0 0.0
  %1397 = vmatprep.subr.mxu0 0.0
  %1398 = vmatpush1.msra.mxu0 0.0
  %1399 = vmatprep.subr.mxu0 0.0
  %1400 = vmatpush1.msra.mxu0 0.0
  %1401 = vmatprep.subr.mxu0 0.0
  %1402 = vmatpush1.msra.mxu0 0.0
  %1403 = vmatprep.subr.mxu0 0.0
  %1404 = vmatpush1.msra.mxu0 0.0
  %1405 = vmatprep.subr.mxu0 0.0
  %1406 = vmatpush1.msra.mxu0 0.0
  %1407 = vmatprep.subr.mxu0 0.0
  %1408 = vmatpush1.msra.mxu0 %v1035
  %1409 = vmatprep.subr.mxu0 0.0
  %1410 = vmatpush2.msra.mxu0 0.0
  %1411 = vmatprep.subr.mxu0 0.0
  %1412 = vmatpush2.msra.mxu0 0.0
  %1413 = vmatprep.subr.mxu0 0.0
  %1414 = vmatpush2.msra.mxu0 0.0
  %1415 = vmatprep.subr.mxu0 0.0
  %1416 = vmatpush2.msra.mxu0 0.0
  %1417 = vmatprep.subr.mxu0 0.0
  %1418 = vmatpush2.msra.mxu0 0.0
  %1419 = vmatprep.subr.mxu0 0.0
  %1420 = vmatpush2.msra.mxu0 0.0
  %1421 = vmatprep.subr.mxu0 0.0
  %1422 = vmatpush2.msra.mxu0 0.0
  %1423 = vmatprep.subr.mxu0 0.0
  %1424 = vmatpush2.msra.mxu0 0.0
  %1425 = vmatprep.subr.mxu0 0.0
  %1426 = vmatpush2.msra.mxu0 0.0
  %1427 = vmatprep.subr.mxu0 0.0
  %1428 = vmatpush2.msra.mxu0 0.0
  %1429 = vmatprep.subr.mxu0 0.0
  %1430 = vmatpush2.msra.mxu0 0.0
  %1431 = vmatprep.subr.mxu0 0.0
  %1432 = vmatpush2.msra.mxu0 0.0
  %1433 = vmatprep.subr.mxu0 0.0
  %1434 = vmatpush2.msra.mxu0 0.0
  %1435 = vmatprep.subr.mxu0 0.0
  %1436 = vmatpush2.msra.mxu0 0.0
  %1437 = vmatprep.subr.mxu0 0.0
  %1438 = vmatpush2.msra.mxu0 0.0
  %1439 = vmatprep.subr.mxu0 0.0
  %1440 = vmatpush2.msra.mxu0 0.0
  %1441 = vmatprep.mubr.f32.mxu0 0.0
  %1442 = vmatmul.mubr.f32.gmra.mxu0 %v1373
  %v1443 = vpop.f32.mrf.mxu0
  %v1444 = vadd.f32 0.0, %v1443
  %v1445 = vpop.f32.mrf.mxu0
  %1446 = vmatprep.mubr.f32.mxu0 0.0
  %1447 = vmatmul.mubr.f32.gmra.mxu0 %v1375
  %v1448 = vpop.f32.mrf.mxu0
  %v1449 = vadd.f32 0.0, %v1448
  %v1450 = vpop.f32.mrf.mxu0
  %1451 = vdwg.mxu0
  %v1452 = vadd.f32 %v1365, %v1444
  %v1453 = vadd.f32 %v1366, %v1449
  %v1454 = vmul.f32 %v1452, 0.5
  %v1455 = vmul.f32 %v1453, 0.5
  %v1456 = vtanh.pop %v1454
  %v1457 = vtanh.pop %v1455
  %v1458 = vadd.f32 %v1456, 1.0
  %v1459 = vadd.f32 %v1457, 1.0
  %v1460 = vmul.f32 %v1458, 0.5
  %v1461 = vmul.f32 %v1459, 0.5
  %v1462 = vtanh.pop %v1452
  %v1463 = vtanh.pop %v1453
  %v1464 = vmul.f32 %v1460, %v1362
  %v1465 = vmul.f32 %v1461, %v1363
  %1468 = vrot.lane.b32.xlu0 %v1462, 118
  %v1469 = vpop.permute.xlu0 %1468
  %1470 = vrot.lane.b32.xlu0 %v1463, 118
  %v1471 = vpop.permute.xlu0 %1470
  %v1474 = vmul.f32 %v1460, %v1469
  %v1475 = vmul.f32 %v1461, %v1471
  %1478 = vrot.lane.b32.xlu0 %v1474, 5
  %v1479 = vpop.permute.xlu0 %1478
  %1480 = vrot.lane.b32.xlu0 %v1475, 5
  %v1481 = vpop.permute.xlu0 %1480
  %v1484 = vadd.f32 %v1464, %v1479
  %v1485 = vadd.f32 %v1465, %v1481
  %v1486 = vtanh.pop %v1484
  %v1487 = vtanh.pop %v1485
  %1490 = vrot.lane.b32.xlu0 %v1486, 10
  %v1491 = vpop.permute.xlu0 %1490
  %1492 = vrot.lane.b32.xlu0 %v1487, 10
  %v1493 = vpop.permute.xlu0 %1492
  %v1496 = vmul.f32 %v1460, %v1491
  %v1497 = vmul.f32 %v1461, %v1493
  %s1498 = scalar_lea.vmem %s1, 128
  %v1499 = vld [vmem:[%s1498] sm:$0xff]
  %v1500 = vld [vmem:[%s1498 + $0x8] sm:$0xff]
  %1502 = vset.pattern.permute.xlu0 0
  %1503 = vperm.xlu0 %1502, %v1499
  %v1504 = vpop.permute.xlu0 %1503
  %1507 = vset.pattern.permute.xlu0 0
  %1508 = vperm.xlu0 %1507, %v1500
  %v1509 = vpop.permute.xlu0 %1508
  %v1511 = vmul.f32 %v1504, %v1496
  %v1512 = vmul.f32 %v1509, %v1497
  %v1513 = vsub.f32 1.0, %v1499
  %v1514 = vsub.f32 1.0, %v1500
  %1516 = vset.pattern.permute.xlu0 0
  %1517 = vperm.xlu0 %1516, %v1513
  %v1518 = vpop.permute.xlu0 %1517
  %1521 = vset.pattern.permute.xlu0 0
  %1522 = vperm.xlu0 %1521, %v1514
  %v1523 = vpop.permute.xlu0 %1522
  %v1525 = vmul.f32 %v1518, %v1356
  %v1526 = vmul.f32 %v1523, %v1357
  %v1527 = vadd.f32 %v1511, %v1525
  %v1528 = vadd.f32 %v1512, %v1526
  %v1529 = vmul.f32 %v1504, %v1484
  %v1530 = vmul.f32 %v1509, %v1485
  %v1531 = vmul.f32 %v1518, %v1362
  %v1532 = vmul.f32 %v1523, %v1363
  %v1533 = vadd.f32 %v1529, %v1531
  %v1534 = vadd.f32 %v1530, %v1532
  %s1535 = scalar_lea.vmem %s0, 144
  %v1536 = vld [vmem:[%s1535] sm:$0xff]
  %v1537 = vld [vmem:[%s1535 + $0x8] sm:$0xff]
  %1540 = vrot.lane.b32.xlu0 %v1527, 113
  %v1541 = vpop.permute.xlu0 %1540
  %1542 = vrot.lane.b32.xlu0 %v1528, 113
  %v1543 = vpop.permute.xlu0 %1542
  %v1544 = vsel %vm17, %v1541, 0
  %v1546 = vsel %vm17, %v1543, 0
  %1548 = vmatprep.subr.mxu0 0.0
  %1549 = vmatpush1.msra.mxu0 0.0
  %1550 = vmatprep.subr.mxu0 0.0
  %1551 = vmatpush1.msra.mxu0 0.0
  %1552 = vmatprep.subr.mxu0 0.0
  %1553 = vmatpush1.msra.mxu0 0.0
  %1554 = vmatprep.subr.mxu0 0.0
  %1555 = vmatpush1.msra.mxu0 0.0
  %1556 = vmatprep.subr.mxu0 0.0
  %1557 = vmatpush1.msra.mxu0 0.0
  %1558 = vmatprep.subr.mxu0 0.0
  %1559 = vmatpush1.msra.mxu0 0.0
  %1560 = vmatprep.subr.mxu0 0.0
  %1561 = vmatpush1.msra.mxu0 0.0
  %1562 = vmatprep.subr.mxu0 0.0
  %1563 = vmatpush1.msra.mxu0 0.0
  %1564 = vmatprep.subr.mxu0 0.0
  %1565 = vmatpush1.msra.mxu0 0.0
  %1566 = vmatprep.subr.mxu0 0.0
  %1567 = vmatpush1.msra.mxu0 0.0
  %1568 = vmatprep.subr.mxu0 0.0
  %1569 = vmatpush1.msra.mxu0 0.0
  %1570 = vmatprep.subr.mxu0 0.0
  %1571 = vmatpush1.msra.mxu0 0.0
  %1572 = vmatprep.subr.mxu0 0.0
  %1573 = vmatpush1.msra.mxu0 0.0
  %1574 = vmatprep.subr.mxu0 0.0
  %1575 = vmatpush1.msra.mxu0 0.0
  %1576 = vmatprep.subr.mxu0 0.0
  %1577 = vmatpush1.msra.mxu0 0.0
  %1578 = vmatprep.subr.mxu0 0.0
  %1579 = vmatpush1.msra.mxu0 %v1035
  %1580 = vmatprep.subr.mxu0 0.0
  %1581 = vmatpush2.msra.mxu0 0.0
  %1582 = vmatprep.subr.mxu0 0.0
  %1583 = vmatpush2.msra.mxu0 0.0
  %1584 = vmatprep.subr.mxu0 0.0
  %1585 = vmatpush2.msra.mxu0 0.0
  %1586 = vmatprep.subr.mxu0 0.0
  %1587 = vmatpush2.msra.mxu0 0.0
  %1588 = vmatprep.subr.mxu0 0.0
  %1589 = vmatpush2.msra.mxu0 0.0
  %1590 = vmatprep.subr.mxu0 0.0
  %1591 = vmatpush2.msra.mxu0 0.0
  %1592 = vmatprep.subr.mxu0 0.0
  %1593 = vmatpush2.msra.mxu0 0.0
  %1594 = vmatprep.subr.mxu0 0.0
  %1595 = vmatpush2.msra.mxu0 0.0
  %1596 = vmatprep.subr.mxu0 0.0
  %1597 = vmatpush2.msra.mxu0 0.0
  %1598 = vmatprep.subr.mxu0 0.0
  %1599 = vmatpush2.msra.mxu0 0.0
  %1600 = vmatprep.subr.mxu0 0.0
  %1601 = vmatpush2.msra.mxu0 0.0
  %1602 = vmatprep.subr.mxu0 0.0
  %1603 = vmatpush2.msra.mxu0 0.0
  %1604 = vmatprep.subr.mxu0 0.0
  %1605 = vmatpush2.msra.mxu0 0.0
  %1606 = vmatprep.subr.mxu0 0.0
  %1607 = vmatpush2.msra.mxu0 0.0
  %1608 = vmatprep.subr.mxu0 0.0
  %1609 = vmatpush2.msra.mxu0 0.0
  %1610 = vmatprep.subr.mxu0 0.0
  %1611 = vmatpush2.msra.mxu0 0.0
  %1612 = vmatprep.mubr.f32.mxu0 0.0
  %1613 = vmatmul.mubr.f32.gmra.mxu0 %v1544
  %v1614 = vpop.f32.mrf.mxu0
  %v1615 = vadd.f32 0.0, %v1614
  %v1616 = vpop.f32.mrf.mxu0
  %1617 = vmatprep.mubr.f32.mxu0 0.0
  %1618 = vmatmul.mubr.f32.gmra.mxu0 %v1546
  %v1619 = vpop.f32.mrf.mxu0
  %v1620 = vadd.f32 0.0, %v1619
  %v1621 = vpop.f32.mrf.mxu0
  %1622 = vdwg.mxu0
  %v1623 = vadd.f32 %v1536, %v1615
  %v1624 = vadd.f32 %v1537, %v1620
  %v1625 = vmul.f32 %v1623, 0.5
  %v1626 = vmul.f32 %v1624, 0.5
  %v1627 = vtanh.pop %v1625
  %v1628 = vtanh.pop %v1626
  %v1629 = vadd.f32 %v1627, 1.0
  %v1630 = vadd.f32 %v1628, 1.0
  %v1631 = vmul.f32 %v1629, 0.5
  %v1632 = vmul.f32 %v1630, 0.5
  %v1633 = vtanh.pop %v1623
  %v1634 = vtanh.pop %v1624
  %v1635 = vmul.f32 %v1631, %v1533
  %v1636 = vmul.f32 %v1632, %v1534
  %1639 = vrot.lane.b32.xlu0 %v1633, 118
  %v1640 = vpop.permute.xlu0 %1639
  %1641 = vrot.lane.b32.xlu0 %v1634, 118
  %v1642 = vpop.permute.xlu0 %1641
  %v1645 = vmul.f32 %v1631, %v1640
  %v1646 = vmul.f32 %v1632, %v1642
  %1649 = vrot.lane.b32.xlu0 %v1645, 5
  %v1650 = vpop.permute.xlu0 %1649
  %1651 = vrot.lane.b32.xlu0 %v1646, 5
  %v1652 = vpop.permute.xlu0 %1651
  %v1655 = vadd.f32 %v1635, %v1650
  %v1656 = vadd.f32 %v1636, %v1652
  %v1657 = vtanh.pop %v1655
  %v1658 = vtanh.pop %v1656
  %1661 = vrot.lane.b32.xlu0 %v1657, 10
  %v1662 = vpop.permute.xlu0 %1661
  %1663 = vrot.lane.b32.xlu0 %v1658, 10
  %v1664 = vpop.permute.xlu0 %1663
  %v1667 = vmul.f32 %v1631, %v1662
  %v1668 = vmul.f32 %v1632, %v1664
  %s1669 = scalar_lea.vmem %s1, 144
  %v1670 = vld [vmem:[%s1669] sm:$0xff]
  %v1671 = vld [vmem:[%s1669 + $0x8] sm:$0xff]
  %1673 = vset.pattern.permute.xlu0 0
  %1674 = vperm.xlu0 %1673, %v1670
  %v1675 = vpop.permute.xlu0 %1674
  %1678 = vset.pattern.permute.xlu0 0
  %1679 = vperm.xlu0 %1678, %v1671
  %v1680 = vpop.permute.xlu0 %1679
  %v1682 = vmul.f32 %v1675, %v1667
  %v1683 = vmul.f32 %v1680, %v1668
  %v1684 = vsub.f32 1.0, %v1670
  %v1685 = vsub.f32 1.0, %v1671
  %1687 = vset.pattern.permute.xlu0 0
  %1688 = vperm.xlu0 %1687, %v1684
  %v1689 = vpop.permute.xlu0 %1688
  %1692 = vset.pattern.permute.xlu0 0
  %1693 = vperm.xlu0 %1692, %v1685
  %v1694 = vpop.permute.xlu0 %1693
  %v1696 = vmul.f32 %v1689, %v1527
  %v1697 = vmul.f32 %v1694, %v1528
  %v1698 = vadd.f32 %v1682, %v1696
  %v1699 = vadd.f32 %v1683, %v1697
  %v1700 = vmul.f32 %v1675, %v1655
  %v1701 = vmul.f32 %v1680, %v1656
  %v1702 = vmul.f32 %v1689, %v1533
  %v1703 = vmul.f32 %v1694, %v1534
  %v1704 = vadd.f32 %v1700, %v1702
  %v1705 = vadd.f32 %v1701, %v1703
  %s1706 = scalar_lea.vmem %s0, 160
  %v1707 = vld [vmem:[%s1706] sm:$0xff]
  %v1708 = vld [vmem:[%s1706 + $0x8] sm:$0xff]
  %1711 = vrot.lane.b32.xlu0 %v1698, 113
  %v1712 = vpop.permute.xlu0 %1711
  %1713 = vrot.lane.b32.xlu0 %v1699, 113
  %v1714 = vpop.permute.xlu0 %1713
  %v1715 = vsel %vm17, %v1712, 0
  %v1717 = vsel %vm17, %v1714, 0
  %1719 = vmatprep.subr.mxu0 0.0
  %1720 = vmatpush1.msra.mxu0 0.0
  %1721 = vmatprep.subr.mxu0 0.0
  %1722 = vmatpush1.msra.mxu0 0.0
  %1723 = vmatprep.subr.mxu0 0.0
  %1724 = vmatpush1.msra.mxu0 0.0
  %1725 = vmatprep.subr.mxu0 0.0
  %1726 = vmatpush1.msra.mxu0 0.0
  %1727 = vmatprep.subr.mxu0 0.0
  %1728 = vmatpush1.msra.mxu0 0.0
  %1729 = vmatprep.subr.mxu0 0.0
  %1730 = vmatpush1.msra.mxu0 0.0
  %1731 = vmatprep.subr.mxu0 0.0
  %1732 = vmatpush1.msra.mxu0 0.0
  %1733 = vmatprep.subr.mxu0 0.0
  %1734 = vmatpush1.msra.mxu0 0.0
  %1735 = vmatprep.subr.mxu0 0.0
  %1736 = vmatpush1.msra.mxu0 0.0
  %1737 = vmatprep.subr.mxu0 0.0
  %1738 = vmatpush1.msra.mxu0 0.0
  %1739 = vmatprep.subr.mxu0 0.0
  %1740 = vmatpush1.msra.mxu0 0.0
  %1741 = vmatprep.subr.mxu0 0.0
  %1742 = vmatpush1.msra.mxu0 0.0
  %1743 = vmatprep.subr.mxu0 0.0
  %1744 = vmatpush1.msra.mxu0 0.0
  %1745 = vmatprep.subr.mxu0 0.0
  %1746 = vmatpush1.msra.mxu0 0.0
  %1747 = vmatprep.subr.mxu0 0.0
  %1748 = vmatpush1.msra.mxu0 0.0
  %1749 = vmatprep.subr.mxu0 0.0
  %1750 = vmatpush1.msra.mxu0 %v1035
  %1751 = vmatprep.subr.mxu0 0.0
  %1752 = vmatpush2.msra.mxu0 0.0
  %1753 = vmatprep.subr.mxu0 0.0
  %1754 = vmatpush2.msra.mxu0 0.0
  %1755 = vmatprep.subr.mxu0 0.0
  %1756 = vmatpush2.msra.mxu0 0.0
  %1757 = vmatprep.subr.mxu0 0.0
  %1758 = vmatpush2.msra.mxu0 0.0
  %1759 = vmatprep.subr.mxu0 0.0
  %1760 = vmatpush2.msra.mxu0 0.0
  %1761 = vmatprep.subr.mxu0 0.0
  %1762 = vmatpush2.msra.mxu0 0.0
  %1763 = vmatprep.subr.mxu0 0.0
  %1764 = vmatpush2.msra.mxu0 0.0
  %1765 = vmatprep.subr.mxu0 0.0
  %1766 = vmatpush2.msra.mxu0 0.0
  %1767 = vmatprep.subr.mxu0 0.0
  %1768 = vmatpush2.msra.mxu0 0.0
  %1769 = vmatprep.subr.mxu0 0.0
  %1770 = vmatpush2.msra.mxu0 0.0
  %1771 = vmatprep.subr.mxu0 0.0
  %1772 = vmatpush2.msra.mxu0 0.0
  %1773 = vmatprep.subr.mxu0 0.0
  %1774 = vmatpush2.msra.mxu0 0.0
  %1775 = vmatprep.subr.mxu0 0.0
  %1776 = vmatpush2.msra.mxu0 0.0
  %1777 = vmatprep.subr.mxu0 0.0
  %1778 = vmatpush2.msra.mxu0 0.0
  %1779 = vmatprep.subr.mxu0 0.0
  %1780 = vmatpush2.msra.mxu0 0.0
  %1781 = vmatprep.subr.mxu0 0.0
  %1782 = vmatpush2.msra.mxu0 0.0
  %1783 = vmatprep.mubr.f32.mxu0 0.0
  %1784 = vmatmul.mubr.f32.gmra.mxu0 %v1715
  %v1785 = vpop.f32.mrf.mxu0
  %v1786 = vadd.f32 0.0, %v1785
  %v1787 = vpop.f32.mrf.mxu0
  %1788 = vmatprep.mubr.f32.mxu0 0.0
  %1789 = vmatmul.mubr.f32.gmra.mxu0 %v1717
  %v1790 = vpop.f32.mrf.mxu0
  %v1791 = vadd.f32 0.0, %v1790
  %v1792 = vpop.f32.mrf.mxu0
  %1793 = vdwg.mxu0
  %v1794 = vadd.f32 %v1707, %v1786
  %v1795 = vadd.f32 %v1708, %v1791
  %v1796 = vmul.f32 %v1794, 0.5
  %v1797 = vmul.f32 %v1795, 0.5
  %v1798 = vtanh.pop %v1796
  %v1799 = vtanh.pop %v1797
  %v1800 = vadd.f32 %v1798, 1.0
  %v1801 = vadd.f32 %v1799, 1.0
  %v1802 = vmul.f32 %v1800, 0.5
  %v1803 = vmul.f32 %v1801, 0.5
  %v1804 = vtanh.pop %v1794
  %v1805 = vtanh.pop %v1795
  %v1806 = vmul.f32 %v1802, %v1704
  %v1807 = vmul.f32 %v1803, %v1705
  %1810 = vrot.lane.b32.xlu0 %v1804, 118
  %v1811 = vpop.permute.xlu0 %1810
  %1812 = vrot.lane.b32.xlu0 %v1805, 118
  %v1813 = vpop.permute.xlu0 %1812
  %v1816 = vmul.f32 %v1802, %v1811
  %v1817 = vmul.f32 %v1803, %v1813
  %1820 = vrot.lane.b32.xlu0 %v1816, 5
  %v1821 = vpop.permute.xlu0 %1820
  %1822 = vrot.lane.b32.xlu0 %v1817, 5
  %v1823 = vpop.permute.xlu0 %1822
  %v1826 = vadd.f32 %v1806, %v1821
  %v1827 = vadd.f32 %v1807, %v1823
  %v1828 = vtanh.pop %v1826
  %v1829 = vtanh.pop %v1827
  %1832 = vrot.lane.b32.xlu0 %v1828, 10
  %v1833 = vpop.permute.xlu0 %1832
  %1834 = vrot.lane.b32.xlu0 %v1829, 10
  %v1835 = vpop.permute.xlu0 %1834
  %v1838 = vmul.f32 %v1802, %v1833
  %v1839 = vmul.f32 %v1803, %v1835
  %s1840 = scalar_lea.vmem %s1, 160
  %v1841 = vld [vmem:[%s1840] sm:$0xff]
  %v1842 = vld [vmem:[%s1840 + $0x8] sm:$0xff]
  %1844 = vset.pattern.permute.xlu0 0
  %1845 = vperm.xlu0 %1844, %v1841
  %v1846 = vpop.permute.xlu0 %1845
  %1849 = vset.pattern.permute.xlu0 0
  %1850 = vperm.xlu0 %1849, %v1842
  %v1851 = vpop.permute.xlu0 %1850
  %v1853 = vmul.f32 %v1846, %v1838
  %v1854 = vmul.f32 %v1851, %v1839
  %v1855 = vsub.f32 1.0, %v1841
  %v1856 = vsub.f32 1.0, %v1842
  %1858 = vset.pattern.permute.xlu0 0
  %1859 = vperm.xlu0 %1858, %v1855
  %v1860 = vpop.permute.xlu0 %1859
  %1863 = vset.pattern.permute.xlu0 0
  %1864 = vperm.xlu0 %1863, %v1856
  %v1865 = vpop.permute.xlu0 %1864
  %v1867 = vmul.f32 %v1860, %v1698
  %v1868 = vmul.f32 %v1865, %v1699
  %v1869 = vadd.f32 %v1853, %v1867
  %v1870 = vadd.f32 %v1854, %v1868
  %v1871 = vmul.f32 %v1846, %v1826
  %v1872 = vmul.f32 %v1851, %v1827
  %v1873 = vmul.f32 %v1860, %v1704
  %v1874 = vmul.f32 %v1865, %v1705
  %v1875 = vadd.f32 %v1871, %v1873
  %v1876 = vadd.f32 %v1872, %v1874
  %s1877 = scalar_lea.vmem %s0, 176
  %v1878 = vld [vmem:[%s1877] sm:$0xff]
  %v1879 = vld [vmem:[%s1877 + $0x8] sm:$0xff]
  %1882 = vrot.lane.b32.xlu0 %v1869, 113
  %v1883 = vpop.permute.xlu0 %1882
  %1884 = vrot.lane.b32.xlu0 %v1870, 113
  %v1885 = vpop.permute.xlu0 %1884
  %v1886 = vsel %vm17, %v1883, 0
  %v1888 = vsel %vm17, %v1885, 0
  %1890 = vmatprep.subr.mxu0 0.0
  %1891 = vmatpush1.msra.mxu0 0.0
  %1892 = vmatprep.subr.mxu0 0.0
  %1893 = vmatpush1.msra.mxu0 0.0
  %1894 = vmatprep.subr.mxu0 0.0
  %1895 = vmatpush1.msra.mxu0 0.0
  %1896 = vmatprep.subr.mxu0 0.0
  %1897 = vmatpush1.msra.mxu0 0.0
  %1898 = vmatprep.subr.mxu0 0.0
  %1899 = vmatpush1.msra.mxu0 0.0
  %1900 = vmatprep.subr.mxu0 0.0
  %1901 = vmatpush1.msra.mxu0 0.0
  %1902 = vmatprep.subr.mxu0 0.0
  %1903 = vmatpush1.msra.mxu0 0.0
  %1904 = vmatprep.subr.mxu0 0.0
  %1905 = vmatpush1.msra.mxu0 0.0
  %1906 = vmatprep.subr.mxu0 0.0
  %1907 = vmatpush1.msra.mxu0 0.0
  %1908 = vmatprep.subr.mxu0 0.0
  %1909 = vmatpush1.msra.mxu0 0.0
  %1910 = vmatprep.subr.mxu0 0.0
  %1911 = vmatpush1.msra.mxu0 0.0
  %1912 = vmatprep.subr.mxu0 0.0
  %1913 = vmatpush1.msra.mxu0 0.0
  %1914 = vmatprep.subr.mxu0 0.0
  %1915 = vmatpush1.msra.mxu0 0.0
  %1916 = vmatprep.subr.mxu0 0.0
  %1917 = vmatpush1.msra.mxu0 0.0
  %1918 = vmatprep.subr.mxu0 0.0
  %1919 = vmatpush1.msra.mxu0 0.0
  %1920 = vmatprep.subr.mxu0 0.0
  %1921 = vmatpush1.msra.mxu0 %v1035
  %1922 = vmatprep.subr.mxu0 0.0
  %1923 = vmatpush2.msra.mxu0 0.0
  %1924 = vmatprep.subr.mxu0 0.0
  %1925 = vmatpush2.msra.mxu0 0.0
  %1926 = vmatprep.subr.mxu0 0.0
  %1927 = vmatpush2.msra.mxu0 0.0
  %1928 = vmatprep.subr.mxu0 0.0
  %1929 = vmatpush2.msra.mxu0 0.0
  %1930 = vmatprep.subr.mxu0 0.0
  %1931 = vmatpush2.msra.mxu0 0.0
  %1932 = vmatprep.subr.mxu0 0.0
  %1933 = vmatpush2.msra.mxu0 0.0
  %1934 = vmatprep.subr.mxu0 0.0
  %1935 = vmatpush2.msra.mxu0 0.0
  %1936 = vmatprep.subr.mxu0 0.0
  %1937 = vmatpush2.msra.mxu0 0.0
  %1938 = vmatprep.subr.mxu0 0.0
  %1939 = vmatpush2.msra.mxu0 0.0
  %1940 = vmatprep.subr.mxu0 0.0
  %1941 = vmatpush2.msra.mxu0 0.0
  %1942 = vmatprep.subr.mxu0 0.0
  %1943 = vmatpush2.msra.mxu0 0.0
  %1944 = vmatprep.subr.mxu0 0.0
  %1945 = vmatpush2.msra.mxu0 0.0
  %1946 = vmatprep.subr.mxu0 0.0
  %1947 = vmatpush2.msra.mxu0 0.0
  %1948 = vmatprep.subr.mxu0 0.0
  %1949 = vmatpush2.msra.mxu0 0.0
  %1950 = vmatprep.subr.mxu0 0.0
  %1951 = vmatpush2.msra.mxu0 0.0
  %1952 = vmatprep.subr.mxu0 0.0
  %1953 = vmatpush2.msra.mxu0 0.0
  %1954 = vmatprep.mubr.f32.mxu0 0.0
  %1955 = vmatmul.mubr.f32.gmra.mxu0 %v1886
  %v1956 = vpop.f32.mrf.mxu0
  %v1957 = vadd.f32 0.0, %v1956
  %v1958 = vpop.f32.mrf.mxu0
  %1959 = vmatprep.mubr.f32.mxu0 0.0
  %1960 = vmatmul.mubr.f32.gmra.mxu0 %v1888
  %v1961 = vpop.f32.mrf.mxu0
  %v1962 = vadd.f32 0.0, %v1961
  %v1963 = vpop.f32.mrf.mxu0
  %1964 = vdwg.mxu0
  %v1965 = vadd.f32 %v1878, %v1957
  %v1966 = vadd.f32 %v1879, %v1962
  %v1967 = vmul.f32 %v1965, 0.5
  %v1968 = vmul.f32 %v1966, 0.5
  %v1969 = vtanh.pop %v1967
  %v1970 = vtanh.pop %v1968
  %v1971 = vadd.f32 %v1969, 1.0
  %v1972 = vadd.f32 %v1970, 1.0
  %v1973 = vmul.f32 %v1971, 0.5
  %v1974 = vmul.f32 %v1972, 0.5
  %v1975 = vtanh.pop %v1965
  %v1976 = vtanh.pop %v1966
  %v1977 = vmul.f32 %v1973, %v1875
  %v1978 = vmul.f32 %v1974, %v1876
  %1981 = vrot.lane.b32.xlu0 %v1975, 118
  %v1982 = vpop.permute.xlu0 %1981
  %1983 = vrot.lane.b32.xlu0 %v1976, 118
  %v1984 = vpop.permute.xlu0 %1983
  %v1987 = vmul.f32 %v1973, %v1982
  %v1988 = vmul.f32 %v1974, %v1984
  %1991 = vrot.lane.b32.xlu0 %v1987, 5
  %v1992 = vpop.permute.xlu0 %1991
  %1993 = vrot.lane.b32.xlu0 %v1988, 5
  %v1994 = vpop.permute.xlu0 %1993
  %v1997 = vadd.f32 %v1977, %v1992
  %v1998 = vadd.f32 %v1978, %v1994
  %v1999 = vtanh.pop %v1997
  %v2000 = vtanh.pop %v1998
  %2003 = vrot.lane.b32.xlu0 %v1999, 10
  %v2004 = vpop.permute.xlu0 %2003
  %2005 = vrot.lane.b32.xlu0 %v2000, 10
  %v2006 = vpop.permute.xlu0 %2005
  %v2009 = vmul.f32 %v1973, %v2004
  %v2010 = vmul.f32 %v1974, %v2006
  %s2011 = scalar_lea.vmem %s1, 176
  %v2012 = vld [vmem:[%s2011] sm:$0xff]
  %v2013 = vld [vmem:[%s2011 + $0x8] sm:$0xff]
  %2015 = vset.pattern.permute.xlu0 0
  %2016 = vperm.xlu0 %2015, %v2012
  %v2017 = vpop.permute.xlu0 %2016
  %2020 = vset.pattern.permute.xlu0 0
  %2021 = vperm.xlu0 %2020, %v2013
  %v2022 = vpop.permute.xlu0 %2021
  %v2024 = vmul.f32 %v2017, %v2009
  %v2025 = vmul.f32 %v2022, %v2010
  %v2026 = vsub.f32 1.0, %v2012
  %v2027 = vsub.f32 1.0, %v2013
  %2029 = vset.pattern.permute.xlu0 0
  %2030 = vperm.xlu0 %2029, %v2026
  %v2031 = vpop.permute.xlu0 %2030
  %2034 = vset.pattern.permute.xlu0 0
  %2035 = vperm.xlu0 %2034, %v2027
  %v2036 = vpop.permute.xlu0 %2035
  %v2038 = vmul.f32 %v2031, %v1869
  %v2039 = vmul.f32 %v2036, %v1870
  %v2040 = vadd.f32 %v2024, %v2038
  %v2041 = vadd.f32 %v2025, %v2039
  %2044 = vrot.lane.b32.xlu0 %v1027, 113
  %v2045 = vpop.permute.xlu0 %2044
  %2046 = vrot.lane.b32.xlu0 %v1028, 113
  %v2047 = vpop.permute.xlu0 %2046
  %2052 = vrot.lane.b32.xlu0 %v2040, 118
  %v2053 = vpop.permute.xlu0 %2052
  %2054 = vrot.lane.b32.xlu0 %v2041, 118
  %v2055 = vpop.permute.xlu0 %2054
  %v2058 = vsel %vm17, %v2045, %v2053
  %v2059 = vsel %vm17, %v2047, %v2055
  %vm2060 = vcmask 80896
  %2061 = vst.msk [vmem:[%s3] sm:$0xff] %vm2060, %v2058
  %2062 = vst.msk [vmem:[%s3 + $0x8] sm:$0xff] %vm2060, %v2059
  // Predicated region
  $region14: #{cnnlstm_forward.2} parent=0 // pred_check
    _
  $region15: #{cnnlstm_forward.2} parent=0 // pred_check_branch
    %2064 = sbr.rel (0) target = $region17
  $region16: #{cnnlstm_forward.2} parent=0 // pred_region
    _
  $region17: #{cnnlstm_forward.2} parent=0 // pred_fallthru
    _
  // Predicated region
  $region18: #{cnnlstm_forward.2} parent=0 // pred_check
    _
  $region19: #{cnnlstm_forward.2} parent=0 // pred_check_branch
    %2066 = sbr.rel (0) target = $region21
  $region20: #{cnnlstm_forward.2} parent=0 // pred_region
    _
  $region21: #{cnnlstm_forward.2} parent=0 // pred_fallthru
    _

</llo_original>
